<compile_context>
chip_gen: v5e
topology: v5e:2x2
jax: 0.10.0
libtpu: 0.0.40
codegen_flags: <defaults>
</compile_context>

<pallas_src>
import jax
import jax.numpy as jnp
import numpy as np
from jax.experimental import pallas as pl
from jax.experimental.pallas import tpu as pltpu


# --------------------------- Fused decoder kernel ----------------------------
def _make_decoder_kernel(T, B, E, H, V, num_layers):
    """Builds the fused kernel: gather + concat + stacked LSTM + projection."""

    def kernel(cap_ref, feat_ref, embed_ref, *refs):
        # refs = per-layer (w_ih_t, w_hh_t, b) * num_layers,
        #        lin_w_t, lin_b, out, x_sc, gx_sc, hlast_sc
        layer_refs = refs[: 3 * num_layers]
        lin_w_ref = refs[3 * num_layers]
        lin_b_ref = refs[3 * num_layers + 1]
        out_ref = refs[3 * num_layers + 2]
        x_sc, gx_sc, hlast_sc = refs[3 * num_layers + 3:]

        # ---- Build the LSTM input sequence in VMEM (row t*B + b <-> (t, b)) -
        x_sc[pl.ds(0, B), :] = feat_ref[...]            # t = 0: encoder features
        for t in range(T):                              # t = 1..T: embeddings
            for b in range(B):
                idx = cap_ref[t, b]                     # SMEM scalar read
                x_sc[pl.ds((t + 1) * B + b, 1), :] = embed_ref[pl.ds(idx, 1), :]

        # ---- Hoisted layer-0 input projection: one batched, lane-dense matmul
        gx_sc[...] = jnp.dot(x_sc[...], layer_refs[0][...],
                             preferred_element_type=jnp.float32)

        # ---- Serial recurrence, fully unrolled (T+1 steps) -------------------
        def lstm_cell(gates, c_prev):
            # PyTorch gate order: i, f, g, o.  (Slicing 32-lane pieces of the
            # (B, 4H) vreg is cheap at H=32; pad H to 128-multiples at scale.)
            i = jax.nn.sigmoid(gates[:, 0 * H:1 * H])
            f = jax.nn.sigmoid(gates[:, 1 * H:2 * H])
            g = jnp.tanh(gates[:, 2 * H:3 * H])
            o = jax.nn.sigmoid(gates[:, 3 * H:4 * H])
            c_new = f * c_prev + i * g
            h_new = o * jnp.tanh(c_new)
            return h_new, c_new

        h = [jnp.zeros((B, H), jnp.float32) for _ in range(num_layers)]
        c = [jnp.zeros((B, H), jnp.float32) for _ in range(num_layers)]

        for t in range(T + 1):
            row = t * B
            # Layer 0: input projection already in gx_sc.
            gates0 = (gx_sc[pl.ds(row, B), :]
                      + jnp.dot(h[0], layer_refs[1][...],
                                preferred_element_type=jnp.float32)
                      + layer_refs[2][...])
            h[0], c[0] = lstm_cell(gates0, c[0])
            # Upper layers consume the freshly computed h of the layer below.
            for l in range(1, num_layers):
                w_ih = layer_refs[3 * l]
                w_hh = layer_refs[3 * l + 1]
                bias = layer_refs[3 * l + 2]
                gates = (jnp.dot(h[l - 1], w_ih[...],
                                 preferred_element_type=jnp.float32)
                         + jnp.dot(h[l], w_hh[...],
                                   preferred_element_type=jnp.float32)
                         + bias[...])
                h[l], c[l] = lstm_cell(gates, c[l])
            hlast_sc[pl.ds(row, B), :] = h[num_layers - 1]

        # ---- Vocab projection: single matmul + one lane-dense writeback -----
        out_ref[...] = (jnp.dot(hlast_sc[...], lin_w_ref[...],
                                preferred_element_type=jnp.float32)
                        + lin_b_ref[...])

    return kernel


# ------------------------------ Decoder forward -------------------------------
@jax.jit
def decoder_forward(params, features, caption):
    T, B = caption.shape
    E = features.shape[1]
    num_layers = len(params["lstm"])
    H = params["lstm"][0]["w_hh_t"].shape[0]
    V = params["lin_w_t"].shape[1]
    TB = (T + 1) * B

    layer_args = []
    in_specs = [
        pl.BlockSpec((B, E), lambda i, cap: (0, 0)),   # features
        pl.BlockSpec((V, E), lambda i, cap: (0, 0)),   # embedding table (VMEM)
    ]
    for layer in params["lstm"]:
        w_ih_t, w_hh_t, b = layer["w_ih_t"], layer["w_hh_t"], layer["b"]
        layer_args += [w_ih_t, w_hh_t, b]
        in_specs += [
            pl.BlockSpec(w_ih_t.shape, lambda i, cap: (0, 0)),
            pl.BlockSpec(w_hh_t.shape, lambda i, cap: (0, 0)),
            pl.BlockSpec(b.shape, lambda i, cap: (0, 0)),
        ]
    in_specs += [
        pl.BlockSpec((H, V), lambda i, cap: (0, 0)),   # linear weight (H, V)
        pl.BlockSpec((1, V), lambda i, cap: (0, 0)),   # linear bias
    ]

    kernel = _make_decoder_kernel(T, B, E, H, V, num_layers)
    out = pl.pallas_call(
        kernel,
        out_shape=jax.ShapeDtypeStruct((TB, V), jnp.float32),
        grid_spec=pltpu.PrefetchScalarGridSpec(
            num_scalar_prefetch=1,           # caption -> SMEM
            grid=(1,),                       # single fused invocation
            in_specs=in_specs,
            out_specs=pl.BlockSpec((TB, V), lambda i, cap: (0, 0)),
            scratch_shapes=[
                pltpu.VMEM((TB, E), jnp.float32),       # x: [features; emb]
                pltpu.VMEM((TB, 4 * H), jnp.float32),   # hoisted gates_x
                pltpu.VMEM((TB, H), jnp.float32),       # last-layer h per step
            ],
        ),
        compiler_params=pltpu.CompilerParams(
            dimension_semantics=("arbitrary",),
        ),
    )(caption, features, params["embed"], *layer_args,
      params["lin_w_t"], params["lin_b"])
    return out.reshape(T + 1, B, V)


# --------------------------- Parameter construction ---------------------------
def init_params(key, embed_size, hidden_size, vocab_size, num_layers):
    keys = jax.random.split(key, 3 + 4 * num_layers)
    k_iter = iter(keys)
    scale = 0.1
    params = {
        "embed": scale * jax.random.normal(
            next(k_iter), (vocab_size, embed_size), jnp.float32),
        "lstm": [],
        # nn.Linear(hidden, vocab): weight (V, H); stored pre-transposed (H, V)
        "lin_w_t": scale * jax.random.normal(
            next(k_iter), (hidden_size, vocab_size), jnp.float32),
        "lin_b": scale * jax.random.normal(
            next(k_iter), (1, vocab_size), jnp.float32),
    }
    for layer in range(num_layers):
        in_size = embed_size if layer == 0 else hidden_size
        # PyTorch stores w_ih: (4H, in), w_hh: (4H, H); pre-transpose here.
        w_ih = scale * jax.random.normal(
            next(k_iter), (4 * hidden_size, in_size), jnp.float32)
        w_hh = scale * jax.random.normal(
            next(k_iter), (4 * hidden_size, hidden_size), jnp.float32)
        b_ih = scale * jax.random.normal(
            next(k_iter), (4 * hidden_size,), jnp.float32)
        b_hh = scale * jax.random.normal(
            next(k_iter), (4 * hidden_size,), jnp.float32)
        params["lstm"].append({
            "w_ih_t": w_ih.T,
            "w_hh_t": w_hh.T,
            "b": (b_ih + b_hh)[None, :],
        })
    return params


# ------------------------------ Pure-JAX reference ----------------------------
def decoder_forward_ref(params, features, caption):
    emb = jnp.take(params["embed"], caption, axis=0)
    x = jnp.concatenate([features[None, :, :], emb], axis=0)
    for layer in params["lstm"]:
        H = layer["w_hh_t"].shape[0]
        B = x.shape[1]

        def step(carry, xt, layer=layer, H=H):
            h, c = carry
            gates = xt @ layer["w_ih_t"] + h @ layer["w_hh_t"] + layer["b"]
            i = jax.nn.sigmoid(gates[:, 0 * H:1 * H])
            f = jax.nn.sigmoid(gates[:, 1 * H:2 * H])
            g = jnp.tanh(gates[:, 2 * H:3 * H])
            o = jax.nn.sigmoid(gates[:, 3 * H:4 * H])
            c = f * c + i * g
            h = o * jnp.tanh(c)
            return (h, c), h

        init = (jnp.zeros((B, H), jnp.float32), jnp.zeros((B, H), jnp.float32))
        _, x = jax.lax.scan(step, init, x)
    return x @ params["lin_w_t"] + params["lin_b"]


# ------------------------------------ main ------------------------------------
if __name__ == "__main__":
    embed_size, hidden_size, vocab_size, num_layers = 32, 32, 128, 2
    B, T = 8, 7  # batch, caption length (total sequence length = T + 1)

    key = jax.random.PRNGKey(0)
    k_param, k_feat, k_cap = jax.random.split(key, 3)

    params = init_params(k_param, embed_size, hidden_size, vocab_size, num_layers)
    features = jax.random.normal(k_feat, (B, embed_size), jnp.float32)
    caption = jax.random.randint(k_cap, (T, B), 0, vocab_size, jnp.int32)

    out = decoder_forward(params, features, caption)
    out = jax.block_until_ready(out)
    assert out.shape == (T + 1, B, vocab_size), out.shape

    ref = decoder_forward_ref(params, features, caption)
    np.testing.assert_allclose(np.asarray(out), np.asarray(ref),
                               rtol=1e-4, atol=1e-4)
    print("KERNEL_OK")
</pallas_src>

<mosaic_0001>
module attributes {stable_mosaic.version = 11 : i64} {
  func.func @kernel(%arg0: i32, %arg1: memref<7x8xi32, #tpu.memory_space<smem>>, %arg2: memref<8x32xf32, #tpu.memory_space<vmem>>, %arg3: memref<128x32xf32, #tpu.memory_space<vmem>>, %arg4: memref<32x128xf32, #tpu.memory_space<vmem>>, %arg5: memref<32x128xf32, #tpu.memory_space<vmem>>, %arg6: memref<1x128xf32, #tpu.memory_space<vmem>>, %arg7: memref<32x128xf32, #tpu.memory_space<vmem>>, %arg8: memref<32x128xf32, #tpu.memory_space<vmem>>, %arg9: memref<1x128xf32, #tpu.memory_space<vmem>>, %arg10: memref<32x128xf32, #tpu.memory_space<vmem>>, %arg11: memref<1x128xf32, #tpu.memory_space<vmem>>, %arg12: memref<64x128xf32, #tpu.memory_space<vmem>>, %arg13: memref<64x32xf32, #tpu.memory_space<vmem>>, %arg14: memref<64x128xf32, #tpu.memory_space<vmem>>, %arg15: memref<64x32xf32, #tpu.memory_space<vmem>>) attributes {dimension_semantics = [#tpu.dimension_semantics<arbitrary>], iteration_bounds = array<i64: 1>, scalar_prefetch = 1 : i64, scratch_operands = 3 : i64, tpu.core_type = #tpu.core_type<tc>, window_params = [{pipeline_mode = #tpu.pipeline_mode<synchronous>, transform_indices = @transform_0, window_bounds = array<i64: 8, 32>}, {pipeline_mode = #tpu.pipeline_mode<synchronous>, transform_indices = @transform_1, window_bounds = array<i64: 128, 32>}, {pipeline_mode = #tpu.pipeline_mode<synchronous>, transform_indices = @transform_2, window_bounds = array<i64: 32, 128>}, {pipeline_mode = #tpu.pipeline_mode<synchronous>, transform_indices = @transform_3, window_bounds = array<i64: 32, 128>}, {pipeline_mode = #tpu.pipeline_mode<synchronous>, transform_indices = @transform_4, window_bounds = array<i64: 1, 128>}, {pipeline_mode = #tpu.pipeline_mode<synchronous>, transform_indices = @transform_5, window_bounds = array<i64: 32, 128>}, {pipeline_mode = #tpu.pipeline_mode<synchronous>, transform_indices = @transform_6, window_bounds = array<i64: 32, 128>}, {pipeline_mode = #tpu.pipeline_mode<synchronous>, transform_indices = @transform_7, window_bounds = array<i64: 1, 128>}, {pipeline_mode = #tpu.pipeline_mode<synchronous>, transform_indices = @transform_8, window_bounds = array<i64: 32, 128>}, {pipeline_mode = #tpu.pipeline_mode<synchronous>, transform_indices = @transform_9, window_bounds = array<i64: 1, 128>}, {pipeline_mode = #tpu.pipeline_mode<synchronous>, transform_indices = @transform_10, window_bounds = array<i64: 64, 128>}]} {
    %c0 = arith.constant 0 : index
    %c0_0 = arith.constant 0 : index
    %0 = vector.load %arg2[%c0, %c0_0] : memref<8x32xf32, #tpu.memory_space<vmem>>, vector<8x32xf32>
    %c0_1 = arith.constant 0 : index
    %c0_2 = arith.constant 0 : index
    %1 = vector.load %arg13[%c0_1, %c0_2] : memref<64x32xf32, #tpu.memory_space<vmem>>, vector<8x32xf32>
    tpu.vector_store %arg13[%c0_1, %c0_2], %0 {strides = array<i32>} : memref<64x32xf32, #tpu.memory_space<vmem>>, vector<8x32xf32>,
    %c0_3 = arith.constant 0 : index
    %c0_4 = arith.constant 0 : index
    %2 = memref.load %arg1[%c0_3, %c0_4] : memref<7x8xi32, #tpu.memory_space<smem>>
    %3 = arith.index_cast %2 : i32 to index
    %c0_5 = arith.constant 0 : index
    %4 = vector.load %arg3[%3, %c0_5] : memref<128x32xf32, #tpu.memory_space<vmem>>, vector<1x32xf32>
    %c8 = arith.constant 8 : index
    %c0_6 = arith.constant 0 : index
    %5 = vector.load %arg13[%c8, %c0_6] : memref<64x32xf32, #tpu.memory_space<vmem>>, vector<1x32xf32>
    tpu.vector_store %arg13[%c8, %c0_6], %4 {strides = array<i32>} : memref<64x32xf32, #tpu.memory_space<vmem>>, vector<1x32xf32>,
    %c0_7 = arith.constant 0 : index
    %c1 = arith.constant 1 : index
    %6 = memref.load %arg1[%c0_7, %c1] : memref<7x8xi32, #tpu.memory_space<smem>>
    %7 = arith.index_cast %6 : i32 to index
    %c0_8 = arith.constant 0 : index
    %8 = vector.load %arg3[%7, %c0_8] : memref<128x32xf32, #tpu.memory_space<vmem>>, vector<1x32xf32>
    %c9 = arith.constant 9 : index
    %c0_9 = arith.constant 0 : index
    %9 = vector.load %arg13[%c9, %c0_9] : memref<64x32xf32, #tpu.memory_space<vmem>>, vector<1x32xf32>
    tpu.vector_store %arg13[%c9, %c0_9], %8 {strides = array<i32>} : memref<64x32xf32, #tpu.memory_space<vmem>>, vector<1x32xf32>,
    %c0_10 = arith.constant 0 : index
    %c2 = arith.constant 2 : index
    %10 = memref.load %arg1[%c0_10, %c2] : memref<7x8xi32, #tpu.memory_space<smem>>
    %11 = arith.index_cast %10 : i32 to index
    %c0_11 = arith.constant 0 : index
    %12 = vector.load %arg3[%11, %c0_11] : memref<128x32xf32, #tpu.memory_space<vmem>>, vector<1x32xf32>
    %c10 = arith.constant 10 : index
    %c0_12 = arith.constant 0 : index
    %13 = vector.load %arg13[%c10, %c0_12] : memref<64x32xf32, #tpu.memory_space<vmem>>, vector<1x32xf32>
    tpu.vector_store %arg13[%c10, %c0_12], %12 {strides = array<i32>} : memref<64x32xf32, #tpu.memory_space<vmem>>, vector<1x32xf32>,
    %c0_13 = arith.constant 0 : index
    %c3 = arith.constant 3 : index
    %14 = memref.load %arg1[%c0_13, %c3] : memref<7x8xi32, #tpu.memory_space<smem>>
    %15 = arith.index_cast %14 : i32 to index
    %c0_14 = arith.constant 0 : index
    %16 = vector.load %arg3[%15, %c0_14] : memref<128x32xf32, #tpu.memory_space<vmem>>, vector<1x32xf32>
    %c11 = arith.constant 11 : index
    %c0_15 = arith.constant 0 : index
    %17 = vector.load %arg13[%c11, %c0_15] : memref<64x32xf32, #tpu.memory_space<vmem>>, vector<1x32xf32>
    tpu.vector_store %arg13[%c11, %c0_15], %16 {strides = array<i32>} : memref<64x32xf32, #tpu.memory_space<vmem>>, vector<1x32xf32>,
    %c0_16 = arith.constant 0 : index
    %c4 = arith.constant 4 : index
    %18 = memref.load %arg1[%c0_16, %c4] : memref<7x8xi32, #tpu.memory_space<smem>>
    %19 = arith.index_cast %18 : i32 to index
    %c0_17 = arith.constant 0 : index
    %20 = vector.load %arg3[%19, %c0_17] : memref<128x32xf32, #tpu.memory_space<vmem>>, vector<1x32xf32>
    %c12 = arith.constant 12 : index
    %c0_18 = arith.constant 0 : index
    %21 = vector.load %arg13[%c12, %c0_18] : memref<64x32xf32, #tpu.memory_space<vmem>>, vector<1x32xf32>
    tpu.vector_store %arg13[%c12, %c0_18], %20 {strides = array<i32>} : memref<64x32xf32, #tpu.memory_space<vmem>>, vector<1x32xf32>,
    %c0_19 = arith.constant 0 : index
    %c5 = arith.constant 5 : index
    %22 = memref.load %arg1[%c0_19, %c5] : memref<7x8xi32, #tpu.memory_space<smem>>
    %23 = arith.index_cast %22 : i32 to index
    %c0_20 = arith.constant 0 : index
    %24 = vector.load %arg3[%23, %c0_20] : memref<128x32xf32, #tpu.memory_space<vmem>>, vector<1x32xf32>
    %c13 = arith.constant 13 : index
    %c0_21 = arith.constant 0 : index
    %25 = vector.load %arg13[%c13, %c0_21] : memref<64x32xf32, #tpu.memory_space<vmem>>, vector<1x32xf32>
    tpu.vector_store %arg13[%c13, %c0_21], %24 {strides = array<i32>} : memref<64x32xf32, #tpu.memory_space<vmem>>, vector<1x32xf32>,
    %c0_22 = arith.constant 0 : index
    %c6 = arith.constant 6 : index
    %26 = memref.load %arg1[%c0_22, %c6] : memref<7x8xi32, #tpu.memory_space<smem>>
    %27 = arith.index_cast %26 : i32 to index
    %c0_23 = arith.constant 0 : index
    %28 = vector.load %arg3[%27, %c0_23] : memref<128x32xf32, #tpu.memory_space<vmem>>, vector<1x32xf32>
    %c14 = arith.constant 14 : index
    %c0_24 = arith.constant 0 : index
    %29 = vector.load %arg13[%c14, %c0_24] : memref<64x32xf32, #tpu.memory_space<vmem>>, vector<1x32xf32>
    tpu.vector_store %arg13[%c14, %c0_24], %28 {strides = array<i32>} : memref<64x32xf32, #tpu.memory_space<vmem>>, vector<1x32xf32>,
    %c0_25 = arith.constant 0 : index
    %c7 = arith.constant 7 : index
    %30 = memref.load %arg1[%c0_25, %c7] : memref<7x8xi32, #tpu.memory_space<smem>>
    %31 = arith.index_cast %30 : i32 to index
    %c0_26 = arith.constant 0 : index
    %32 = vector.load %arg3[%31, %c0_26] : memref<128x32xf32, #tpu.memory_space<vmem>>, vector<1x32xf32>
    %c15 = arith.constant 15 : index
    %c0_27 = arith.constant 0 : index
    %33 = vector.load %arg13[%c15, %c0_27] : memref<64x32xf32, #tpu.memory_space<vmem>>, vector<1x32xf32>
    tpu.vector_store %arg13[%c15, %c0_27], %32 {strides = array<i32>} : memref<64x32xf32, #tpu.memory_space<vmem>>, vector<1x32xf32>,
    %c1_28 = arith.constant 1 : index
    %c0_29 = arith.constant 0 : index
    %34 = memref.load %arg1[%c1_28, %c0_29] : memref<7x8xi32, #tpu.memory_space<smem>>
    %35 = arith.index_cast %34 : i32 to index
    %c0_30 = arith.constant 0 : index
    %36 = vector.load %arg3[%35, %c0_30] : memref<128x32xf32, #tpu.memory_space<vmem>>, vector<1x32xf32>
    %c16 = arith.constant 16 : index
    %c0_31 = arith.constant 0 : index
    %37 = vector.load %arg13[%c16, %c0_31] : memref<64x32xf32, #tpu.memory_space<vmem>>, vector<1x32xf32>
    tpu.vector_store %arg13[%c16, %c0_31], %36 {strides = array<i32>} : memref<64x32xf32, #tpu.memory_space<vmem>>, vector<1x32xf32>,
    %c1_32 = arith.constant 1 : index
    %c1_33 = arith.constant 1 : index
    %38 = memref.load %arg1[%c1_32, %c1_33] : memref<7x8xi32, #tpu.memory_space<smem>>
    %39 = arith.index_cast %38 : i32 to index
    %c0_34 = arith.constant 0 : index
    %40 = vector.load %arg3[%39, %c0_34] : memref<128x32xf32, #tpu.memory_space<vmem>>, vector<1x32xf32>
    %c17 = arith.constant 17 : index
    %c0_35 = arith.constant 0 : index
    %41 = vector.load %arg13[%c17, %c0_35] : memref<64x32xf32, #tpu.memory_space<vmem>>, vector<1x32xf32>
    tpu.vector_store %arg13[%c17, %c0_35], %40 {strides = array<i32>} : memref<64x32xf32, #tpu.memory_space<vmem>>, vector<1x32xf32>,
    %c1_36 = arith.constant 1 : index
    %c2_37 = arith.constant 2 : index
    %42 = memref.load %arg1[%c1_36, %c2_37] : memref<7x8xi32, #tpu.memory_space<smem>>
    %43 = arith.index_cast %42 : i32 to index
    %c0_38 = arith.constant 0 : index
    %44 = vector.load %arg3[%43, %c0_38] : memref<128x32xf32, #tpu.memory_space<vmem>>, vector<1x32xf32>
    %c18 = arith.constant 18 : index
    %c0_39 = arith.constant 0 : index
    %45 = vector.load %arg13[%c18, %c0_39] : memref<64x32xf32, #tpu.memory_space<vmem>>, vector<1x32xf32>
    tpu.vector_store %arg13[%c18, %c0_39], %44 {strides = array<i32>} : memref<64x32xf32, #tpu.memory_space<vmem>>, vector<1x32xf32>,
    %c1_40 = arith.constant 1 : index
    %c3_41 = arith.constant 3 : index
    %46 = memref.load %arg1[%c1_40, %c3_41] : memref<7x8xi32, #tpu.memory_space<smem>>
    %47 = arith.index_cast %46 : i32 to index
    %c0_42 = arith.constant 0 : index
    %48 = vector.load %arg3[%47, %c0_42] : memref<128x32xf32, #tpu.memory_space<vmem>>, vector<1x32xf32>
    %c19 = arith.constant 19 : index
    %c0_43 = arith.constant 0 : index
    %49 = vector.load %arg13[%c19, %c0_43] : memref<64x32xf32, #tpu.memory_space<vmem>>, vector<1x32xf32>
    tpu.vector_store %arg13[%c19, %c0_43], %48 {strides = array<i32>} : memref<64x32xf32, #tpu.memory_space<vmem>>, vector<1x32xf32>,
    %c1_44 = arith.constant 1 : index
    %c4_45 = arith.constant 4 : index
    %50 = memref.load %arg1[%c1_44, %c4_45] : memref<7x8xi32, #tpu.memory_space<smem>>
    %51 = arith.index_cast %50 : i32 to index
    %c0_46 = arith.constant 0 : index
    %52 = vector.load %arg3[%51, %c0_46] : memref<128x32xf32, #tpu.memory_space<vmem>>, vector<1x32xf32>
    %c20 = arith.constant 20 : index
    %c0_47 = arith.constant 0 : index
    %53 = vector.load %arg13[%c20, %c0_47] : memref<64x32xf32, #tpu.memory_space<vmem>>, vector<1x32xf32>
    tpu.vector_store %arg13[%c20, %c0_47], %52 {strides = array<i32>} : memref<64x32xf32, #tpu.memory_space<vmem>>, vector<1x32xf32>,
    %c1_48 = arith.constant 1 : index
    %c5_49 = arith.constant 5 : index
    %54 = memref.load %arg1[%c1_48, %c5_49] : memref<7x8xi32, #tpu.memory_space<smem>>
    %55 = arith.index_cast %54 : i32 to index
    %c0_50 = arith.constant 0 : index
    %56 = vector.load %arg3[%55, %c0_50] : memref<128x32xf32, #tpu.memory_space<vmem>>, vector<1x32xf32>
    %c21 = arith.constant 21 : index
    %c0_51 = arith.constant 0 : index
    %57 = vector.load %arg13[%c21, %c0_51] : memref<64x32xf32, #tpu.memory_space<vmem>>, vector<1x32xf32>
    tpu.vector_store %arg13[%c21, %c0_51], %56 {strides = array<i32>} : memref<64x32xf32, #tpu.memory_space<vmem>>, vector<1x32xf32>,
    %c1_52 = arith.constant 1 : index
    %c6_53 = arith.constant 6 : index
    %58 = memref.load %arg1[%c1_52, %c6_53] : memref<7x8xi32, #tpu.memory_space<smem>>
    %59 = arith.index_cast %58 : i32 to index
    %c0_54 = arith.constant 0 : index
    %60 = vector.load %arg3[%59, %c0_54] : memref<128x32xf32, #tpu.memory_space<vmem>>, vector<1x32xf32>
    %c22 = arith.constant 22 : index
    %c0_55 = arith.constant 0 : index
    %61 = vector.load %arg13[%c22, %c0_55] : memref<64x32xf32, #tpu.memory_space<vmem>>, vector<1x32xf32>
    tpu.vector_store %arg13[%c22, %c0_55], %60 {strides = array<i32>} : memref<64x32xf32, #tpu.memory_space<vmem>>, vector<1x32xf32>,
    %c1_56 = arith.constant 1 : index
    %c7_57 = arith.constant 7 : index
    %62 = memref.load %arg1[%c1_56, %c7_57] : memref<7x8xi32, #tpu.memory_space<smem>>
    %63 = arith.index_cast %62 : i32 to index
    %c0_58 = arith.constant 0 : index
    %64 = vector.load %arg3[%63, %c0_58] : memref<128x32xf32, #tpu.memory_space<vmem>>, vector<1x32xf32>
    %c23 = arith.constant 23 : index
    %c0_59 = arith.constant 0 : index
    %65 = vector.load %arg13[%c23, %c0_59] : memref<64x32xf32, #tpu.memory_space<vmem>>, vector<1x32xf32>
    tpu.vector_store %arg13[%c23, %c0_59], %64 {strides = array<i32>} : memref<64x32xf32, #tpu.memory_space<vmem>>, vector<1x32xf32>,
    %c2_60 = arith.constant 2 : index
    %c0_61 = arith.constant 0 : index
    %66 = memref.load %arg1[%c2_60, %c0_61] : memref<7x8xi32, #tpu.memory_space<smem>>
    %67 = arith.index_cast %66 : i32 to index
    %c0_62 = arith.constant 0 : index
    %68 = vector.load %arg3[%67, %c0_62] : memref<128x32xf32, #tpu.memory_space<vmem>>, vector<1x32xf32>
    %c24 = arith.constant 24 : index
    %c0_63 = arith.constant 0 : index
    %69 = vector.load %arg13[%c24, %c0_63] : memref<64x32xf32, #tpu.memory_space<vmem>>, vector<1x32xf32>
    tpu.vector_store %arg13[%c24, %c0_63], %68 {strides = array<i32>} : memref<64x32xf32, #tpu.memory_space<vmem>>, vector<1x32xf32>,
    %c2_64 = arith.constant 2 : index
    %c1_65 = arith.constant 1 : index
    %70 = memref.load %arg1[%c2_64, %c1_65] : memref<7x8xi32, #tpu.memory_space<smem>>
    %71 = arith.index_cast %70 : i32 to index
    %c0_66 = arith.constant 0 : index
    %72 = vector.load %arg3[%71, %c0_66] : memref<128x32xf32, #tpu.memory_space<vmem>>, vector<1x32xf32>
    %c25 = arith.constant 25 : index
    %c0_67 = arith.constant 0 : index
    %73 = vector.load %arg13[%c25, %c0_67] : memref<64x32xf32, #tpu.memory_space<vmem>>, vector<1x32xf32>
    tpu.vector_store %arg13[%c25, %c0_67], %72 {strides = array<i32>} : memref<64x32xf32, #tpu.memory_space<vmem>>, vector<1x32xf32>,
    %c2_68 = arith.constant 2 : index
    %c2_69 = arith.constant 2 : index
    %74 = memref.load %arg1[%c2_68, %c2_69] : memref<7x8xi32, #tpu.memory_space<smem>>
    %75 = arith.index_cast %74 : i32 to index
    %c0_70 = arith.constant 0 : index
    %76 = vector.load %arg3[%75, %c0_70] : memref<128x32xf32, #tpu.memory_space<vmem>>, vector<1x32xf32>
    %c26 = arith.constant 26 : index
    %c0_71 = arith.constant 0 : index
    %77 = vector.load %arg13[%c26, %c0_71] : memref<64x32xf32, #tpu.memory_space<vmem>>, vector<1x32xf32>
    tpu.vector_store %arg13[%c26, %c0_71], %76 {strides = array<i32>} : memref<64x32xf32, #tpu.memory_space<vmem>>, vector<1x32xf32>,
    %c2_72 = arith.constant 2 : index
    %c3_73 = arith.constant 3 : index
    %78 = memref.load %arg1[%c2_72, %c3_73] : memref<7x8xi32, #tpu.memory_space<smem>>
    %79 = arith.index_cast %78 : i32 to index
    %c0_74 = arith.constant 0 : index
    %80 = vector.load %arg3[%79, %c0_74] : memref<128x32xf32, #tpu.memory_space<vmem>>, vector<1x32xf32>
    %c27 = arith.constant 27 : index
    %c0_75 = arith.constant 0 : index
    %81 = vector.load %arg13[%c27, %c0_75] : memref<64x32xf32, #tpu.memory_space<vmem>>, vector<1x32xf32>
    tpu.vector_store %arg13[%c27, %c0_75], %80 {strides = array<i32>} : memref<64x32xf32, #tpu.memory_space<vmem>>, vector<1x32xf32>,
    %c2_76 = arith.constant 2 : index
    %c4_77 = arith.constant 4 : index
    %82 = memref.load %arg1[%c2_76, %c4_77] : memref<7x8xi32, #tpu.memory_space<smem>>
    %83 = arith.index_cast %82 : i32 to index
    %c0_78 = arith.constant 0 : index
    %84 = vector.load %arg3[%83, %c0_78] : memref<128x32xf32, #tpu.memory_space<vmem>>, vector<1x32xf32>
    %c28 = arith.constant 28 : index
    %c0_79 = arith.constant 0 : index
    %85 = vector.load %arg13[%c28, %c0_79] : memref<64x32xf32, #tpu.memory_space<vmem>>, vector<1x32xf32>
    tpu.vector_store %arg13[%c28, %c0_79], %84 {strides = array<i32>} : memref<64x32xf32, #tpu.memory_space<vmem>>, vector<1x32xf32>,
    %c2_80 = arith.constant 2 : index
    %c5_81 = arith.constant 5 : index
    %86 = memref.load %arg1[%c2_80, %c5_81] : memref<7x8xi32, #tpu.memory_space<smem>>
    %87 = arith.index_cast %86 : i32 to index
    %c0_82 = arith.constant 0 : index
    %88 = vector.load %arg3[%87, %c0_82] : memref<128x32xf32, #tpu.memory_space<vmem>>, vector<1x32xf32>
    %c29 = arith.constant 29 : index
    %c0_83 = arith.constant 0 : index
    %89 = vector.load %arg13[%c29, %c0_83] : memref<64x32xf32, #tpu.memory_space<vmem>>, vector<1x32xf32>
    tpu.vector_store %arg13[%c29, %c0_83], %88 {strides = array<i32>} : memref<64x32xf32, #tpu.memory_space<vmem>>, vector<1x32xf32>,
    %c2_84 = arith.constant 2 : index
    %c6_85 = arith.constant 6 : index
    %90 = memref.load %arg1[%c2_84, %c6_85] : memref<7x8xi32, #tpu.memory_space<smem>>
    %91 = arith.index_cast %90 : i32 to index
    %c0_86 = arith.constant 0 : index
    %92 = vector.load %arg3[%91, %c0_86] : memref<128x32xf32, #tpu.memory_space<vmem>>, vector<1x32xf32>
    %c30 = arith.constant 30 : index
    %c0_87 = arith.constant 0 : index
    %93 = vector.load %arg13[%c30, %c0_87] : memref<64x32xf32, #tpu.memory_space<vmem>>, vector<1x32xf32>
    tpu.vector_store %arg13[%c30, %c0_87], %92 {strides = array<i32>} : memref<64x32xf32, #tpu.memory_space<vmem>>, vector<1x32xf32>,
    %c2_88 = arith.constant 2 : index
    %c7_89 = arith.constant 7 : index
    %94 = memref.load %arg1[%c2_88, %c7_89] : memref<7x8xi32, #tpu.memory_space<smem>>
    %95 = arith.index_cast %94 : i32 to index
    %c0_90 = arith.constant 0 : index
    %96 = vector.load %arg3[%95, %c0_90] : memref<128x32xf32, #tpu.memory_space<vmem>>, vector<1x32xf32>
    %c31 = arith.constant 31 : index
    %c0_91 = arith.constant 0 : index
    %97 = vector.load %arg13[%c31, %c0_91] : memref<64x32xf32, #tpu.memory_space<vmem>>, vector<1x32xf32>
    tpu.vector_store %arg13[%c31, %c0_91], %96 {strides = array<i32>} : memref<64x32xf32, #tpu.memory_space<vmem>>, vector<1x32xf32>,
    %c3_92 = arith.constant 3 : index
    %c0_93 = arith.constant 0 : index
    %98 = memref.load %arg1[%c3_92, %c0_93] : memref<7x8xi32, #tpu.memory_space<smem>>
    %99 = arith.index_cast %98 : i32 to index
    %c0_94 = arith.constant 0 : index
    %100 = vector.load %arg3[%99, %c0_94] : memref<128x32xf32, #tpu.memory_space<vmem>>, vector<1x32xf32>
    %c32 = arith.constant 32 : index
    %c0_95 = arith.constant 0 : index
    %101 = vector.load %arg13[%c32, %c0_95] : memref<64x32xf32, #tpu.memory_space<vmem>>, vector<1x32xf32>
    tpu.vector_store %arg13[%c32, %c0_95], %100 {strides = array<i32>} : memref<64x32xf32, #tpu.memory_space<vmem>>, vector<1x32xf32>,
    %c3_96 = arith.constant 3 : index
    %c1_97 = arith.constant 1 : index
    %102 = memref.load %arg1[%c3_96, %c1_97] : memref<7x8xi32, #tpu.memory_space<smem>>
    %103 = arith.index_cast %102 : i32 to index
    %c0_98 = arith.constant 0 : index
    %104 = vector.load %arg3[%103, %c0_98] : memref<128x32xf32, #tpu.memory_space<vmem>>, vector<1x32xf32>
    %c33 = arith.constant 33 : index
    %c0_99 = arith.constant 0 : index
    %105 = vector.load %arg13[%c33, %c0_99] : memref<64x32xf32, #tpu.memory_space<vmem>>, vector<1x32xf32>
    tpu.vector_store %arg13[%c33, %c0_99], %104 {strides = array<i32>} : memref<64x32xf32, #tpu.memory_space<vmem>>, vector<1x32xf32>,
    %c3_100 = arith.constant 3 : index
    %c2_101 = arith.constant 2 : index
    %106 = memref.load %arg1[%c3_100, %c2_101] : memref<7x8xi32, #tpu.memory_space<smem>>
    %107 = arith.index_cast %106 : i32 to index
    %c0_102 = arith.constant 0 : index
    %108 = vector.load %arg3[%107, %c0_102] : memref<128x32xf32, #tpu.memory_space<vmem>>, vector<1x32xf32>
    %c34 = arith.constant 34 : index
    %c0_103 = arith.constant 0 : index
    %109 = vector.load %arg13[%c34, %c0_103] : memref<64x32xf32, #tpu.memory_space<vmem>>, vector<1x32xf32>
    tpu.vector_store %arg13[%c34, %c0_103], %108 {strides = array<i32>} : memref<64x32xf32, #tpu.memory_space<vmem>>, vector<1x32xf32>,
    %c3_104 = arith.constant 3 : index
    %c3_105 = arith.constant 3 : index
    %110 = memref.load %arg1[%c3_104, %c3_105] : memref<7x8xi32, #tpu.memory_space<smem>>
    %111 = arith.index_cast %110 : i32 to index
    %c0_106 = arith.constant 0 : index
    %112 = vector.load %arg3[%111, %c0_106] : memref<128x32xf32, #tpu.memory_space<vmem>>, vector<1x32xf32>
    %c35 = arith.constant 35 : index
    %c0_107 = arith.constant 0 : index
    %113 = vector.load %arg13[%c35, %c0_107] : memref<64x32xf32, #tpu.memory_space<vmem>>, vector<1x32xf32>
    tpu.vector_store %arg13[%c35, %c0_107], %112 {strides = array<i32>} : memref<64x32xf32, #tpu.memory_space<vmem>>, vector<1x32xf32>,
    %c3_108 = arith.constant 3 : index
    %c4_109 = arith.constant 4 : index
    %114 = memref.load %arg1[%c3_108, %c4_109] : memref<7x8xi32, #tpu.memory_space<smem>>
    %115 = arith.index_cast %114 : i32 to index
    %c0_110 = arith.constant 0 : index
    %116 = vector.load %arg3[%115, %c0_110] : memref<128x32xf32, #tpu.memory_space<vmem>>, vector<1x32xf32>
    %c36 = arith.constant 36 : index
    %c0_111 = arith.constant 0 : index
    %117 = vector.load %arg13[%c36, %c0_111] : memref<64x32xf32, #tpu.memory_space<vmem>>, vector<1x32xf32>
    tpu.vector_store %arg13[%c36, %c0_111], %116 {strides = array<i32>} : memref<64x32xf32, #tpu.memory_space<vmem>>, vector<1x32xf32>,
    %c3_112 = arith.constant 3 : index
    %c5_113 = arith.constant 5 : index
    %118 = memref.load %arg1[%c3_112, %c5_113] : memref<7x8xi32, #tpu.memory_space<smem>>
    %119 = arith.index_cast %118 : i32 to index
    %c0_114 = arith.constant 0 : index
    %120 = vector.load %arg3[%119, %c0_114] : memref<128x32xf32, #tpu.memory_space<vmem>>, vector<1x32xf32>
    %c37 = arith.constant 37 : index
    %c0_115 = arith.constant 0 : index
    %121 = vector.load %arg13[%c37, %c0_115] : memref<64x32xf32, #tpu.memory_space<vmem>>, vector<1x32xf32>
    tpu.vector_store %arg13[%c37, %c0_115], %120 {strides = array<i32>} : memref<64x32xf32, #tpu.memory_space<vmem>>, vector<1x32xf32>,
    %c3_116 = arith.constant 3 : index
    %c6_117 = arith.constant 6 : index
    %122 = memref.load %arg1[%c3_116, %c6_117] : memref<7x8xi32, #tpu.memory_space<smem>>
    %123 = arith.index_cast %122 : i32 to index
    %c0_118 = arith.constant 0 : index
    %124 = vector.load %arg3[%123, %c0_118] : memref<128x32xf32, #tpu.memory_space<vmem>>, vector<1x32xf32>
    %c38 = arith.constant 38 : index
    %c0_119 = arith.constant 0 : index
    %125 = vector.load %arg13[%c38, %c0_119] : memref<64x32xf32, #tpu.memory_space<vmem>>, vector<1x32xf32>
    tpu.vector_store %arg13[%c38, %c0_119], %124 {strides = array<i32>} : memref<64x32xf32, #tpu.memory_space<vmem>>, vector<1x32xf32>,
    %c3_120 = arith.constant 3 : index
    %c7_121 = arith.constant 7 : index
    %126 = memref.load %arg1[%c3_120, %c7_121] : memref<7x8xi32, #tpu.memory_space<smem>>
    %127 = arith.index_cast %126 : i32 to index
    %c0_122 = arith.constant 0 : index
    %128 = vector.load %arg3[%127, %c0_122] : memref<128x32xf32, #tpu.memory_space<vmem>>, vector<1x32xf32>
    %c39 = arith.constant 39 : index
    %c0_123 = arith.constant 0 : index
    %129 = vector.load %arg13[%c39, %c0_123] : memref<64x32xf32, #tpu.memory_space<vmem>>, vector<1x32xf32>
    tpu.vector_store %arg13[%c39, %c0_123], %128 {strides = array<i32>} : memref<64x32xf32, #tpu.memory_space<vmem>>, vector<1x32xf32>,
    %c4_124 = arith.constant 4 : index
    %c0_125 = arith.constant 0 : index
    %130 = memref.load %arg1[%c4_124, %c0_125] : memref<7x8xi32, #tpu.memory_space<smem>>
    %131 = arith.index_cast %130 : i32 to index
    %c0_126 = arith.constant 0 : index
    %132 = vector.load %arg3[%131, %c0_126] : memref<128x32xf32, #tpu.memory_space<vmem>>, vector<1x32xf32>
    %c40 = arith.constant 40 : index
    %c0_127 = arith.constant 0 : index
    %133 = vector.load %arg13[%c40, %c0_127] : memref<64x32xf32, #tpu.memory_space<vmem>>, vector<1x32xf32>
    tpu.vector_store %arg13[%c40, %c0_127], %132 {strides = array<i32>} : memref<64x32xf32, #tpu.memory_space<vmem>>, vector<1x32xf32>,
    %c4_128 = arith.constant 4 : index
    %c1_129 = arith.constant 1 : index
    %134 = memref.load %arg1[%c4_128, %c1_129] : memref<7x8xi32, #tpu.memory_space<smem>>
    %135 = arith.index_cast %134 : i32 to index
    %c0_130 = arith.constant 0 : index
    %136 = vector.load %arg3[%135, %c0_130] : memref<128x32xf32, #tpu.memory_space<vmem>>, vector<1x32xf32>
    %c41 = arith.constant 41 : index
    %c0_131 = arith.constant 0 : index
    %137 = vector.load %arg13[%c41, %c0_131] : memref<64x32xf32, #tpu.memory_space<vmem>>, vector<1x32xf32>
    tpu.vector_store %arg13[%c41, %c0_131], %136 {strides = array<i32>} : memref<64x32xf32, #tpu.memory_space<vmem>>, vector<1x32xf32>,
    %c4_132 = arith.constant 4 : index
    %c2_133 = arith.constant 2 : index
    %138 = memref.load %arg1[%c4_132, %c2_133] : memref<7x8xi32, #tpu.memory_space<smem>>
    %139 = arith.index_cast %138 : i32 to index
    %c0_134 = arith.constant 0 : index
    %140 = vector.load %arg3[%139, %c0_134] : memref<128x32xf32, #tpu.memory_space<vmem>>, vector<1x32xf32>
    %c42 = arith.constant 42 : index
    %c0_135 = arith.constant 0 : index
    %141 = vector.load %arg13[%c42, %c0_135] : memref<64x32xf32, #tpu.memory_space<vmem>>, vector<1x32xf32>
    tpu.vector_store %arg13[%c42, %c0_135], %140 {strides = array<i32>} : memref<64x32xf32, #tpu.memory_space<vmem>>, vector<1x32xf32>,
    %c4_136 = arith.constant 4 : index
    %c3_137 = arith.constant 3 : index
    %142 = memref.load %arg1[%c4_136, %c3_137] : memref<7x8xi32, #tpu.memory_space<smem>>
    %143 = arith.index_cast %142 : i32 to index
    %c0_138 = arith.constant 0 : index
    %144 = vector.load %arg3[%143, %c0_138] : memref<128x32xf32, #tpu.memory_space<vmem>>, vector<1x32xf32>
    %c43 = arith.constant 43 : index
    %c0_139 = arith.constant 0 : index
    %145 = vector.load %arg13[%c43, %c0_139] : memref<64x32xf32, #tpu.memory_space<vmem>>, vector<1x32xf32>
    tpu.vector_store %arg13[%c43, %c0_139], %144 {strides = array<i32>} : memref<64x32xf32, #tpu.memory_space<vmem>>, vector<1x32xf32>,
    %c4_140 = arith.constant 4 : index
    %c4_141 = arith.constant 4 : index
    %146 = memref.load %arg1[%c4_140, %c4_141] : memref<7x8xi32, #tpu.memory_space<smem>>
    %147 = arith.index_cast %146 : i32 to index
    %c0_142 = arith.constant 0 : index
    %148 = vector.load %arg3[%147, %c0_142] : memref<128x32xf32, #tpu.memory_space<vmem>>, vector<1x32xf32>
    %c44 = arith.constant 44 : index
    %c0_143 = arith.constant 0 : index
    %149 = vector.load %arg13[%c44, %c0_143] : memref<64x32xf32, #tpu.memory_space<vmem>>, vector<1x32xf32>
    tpu.vector_store %arg13[%c44, %c0_143], %148 {strides = array<i32>} : memref<64x32xf32, #tpu.memory_space<vmem>>, vector<1x32xf32>,
    %c4_144 = arith.constant 4 : index
    %c5_145 = arith.constant 5 : index
    %150 = memref.load %arg1[%c4_144, %c5_145] : memref<7x8xi32, #tpu.memory_space<smem>>
    %151 = arith.index_cast %150 : i32 to index
    %c0_146 = arith.constant 0 : index
    %152 = vector.load %arg3[%151, %c0_146] : memref<128x32xf32, #tpu.memory_space<vmem>>, vector<1x32xf32>
    %c45 = arith.constant 45 : index
    %c0_147 = arith.constant 0 : index
    %153 = vector.load %arg13[%c45, %c0_147] : memref<64x32xf32, #tpu.memory_space<vmem>>, vector<1x32xf32>
    tpu.vector_store %arg13[%c45, %c0_147], %152 {strides = array<i32>} : memref<64x32xf32, #tpu.memory_space<vmem>>, vector<1x32xf32>,
    %c4_148 = arith.constant 4 : index
    %c6_149 = arith.constant 6 : index
    %154 = memref.load %arg1[%c4_148, %c6_149] : memref<7x8xi32, #tpu.memory_space<smem>>
    %155 = arith.index_cast %154 : i32 to index
    %c0_150 = arith.constant 0 : index
    %156 = vector.load %arg3[%155, %c0_150] : memref<128x32xf32, #tpu.memory_space<vmem>>, vector<1x32xf32>
    %c46 = arith.constant 46 : index
    %c0_151 = arith.constant 0 : index
    %157 = vector.load %arg13[%c46, %c0_151] : memref<64x32xf32, #tpu.memory_space<vmem>>, vector<1x32xf32>
    tpu.vector_store %arg13[%c46, %c0_151], %156 {strides = array<i32>} : memref<64x32xf32, #tpu.memory_space<vmem>>, vector<1x32xf32>,
    %c4_152 = arith.constant 4 : index
    %c7_153 = arith.constant 7 : index
    %158 = memref.load %arg1[%c4_152, %c7_153] : memref<7x8xi32, #tpu.memory_space<smem>>
    %159 = arith.index_cast %158 : i32 to index
    %c0_154 = arith.constant 0 : index
    %160 = vector.load %arg3[%159, %c0_154] : memref<128x32xf32, #tpu.memory_space<vmem>>, vector<1x32xf32>
    %c47 = arith.constant 47 : index
    %c0_155 = arith.constant 0 : index
    %161 = vector.load %arg13[%c47, %c0_155] : memref<64x32xf32, #tpu.memory_space<vmem>>, vector<1x32xf32>
    tpu.vector_store %arg13[%c47, %c0_155], %160 {strides = array<i32>} : memref<64x32xf32, #tpu.memory_space<vmem>>, vector<1x32xf32>,
    %c5_156 = arith.constant 5 : index
    %c0_157 = arith.constant 0 : index
    %162 = memref.load %arg1[%c5_156, %c0_157] : memref<7x8xi32, #tpu.memory_space<smem>>
    %163 = arith.index_cast %162 : i32 to index
    %c0_158 = arith.constant 0 : index
    %164 = vector.load %arg3[%163, %c0_158] : memref<128x32xf32, #tpu.memory_space<vmem>>, vector<1x32xf32>
    %c48 = arith.constant 48 : index
    %c0_159 = arith.constant 0 : index
    %165 = vector.load %arg13[%c48, %c0_159] : memref<64x32xf32, #tpu.memory_space<vmem>>, vector<1x32xf32>
    tpu.vector_store %arg13[%c48, %c0_159], %164 {strides = array<i32>} : memref<64x32xf32, #tpu.memory_space<vmem>>, vector<1x32xf32>,
    %c5_160 = arith.constant 5 : index
    %c1_161 = arith.constant 1 : index
    %166 = memref.load %arg1[%c5_160, %c1_161] : memref<7x8xi32, #tpu.memory_space<smem>>
    %167 = arith.index_cast %166 : i32 to index
    %c0_162 = arith.constant 0 : index
    %168 = vector.load %arg3[%167, %c0_162] : memref<128x32xf32, #tpu.memory_space<vmem>>, vector<1x32xf32>
    %c49 = arith.constant 49 : index
    %c0_163 = arith.constant 0 : index
    %169 = vector.load %arg13[%c49, %c0_163] : memref<64x32xf32, #tpu.memory_space<vmem>>, vector<1x32xf32>
    tpu.vector_store %arg13[%c49, %c0_163], %168 {strides = array<i32>} : memref<64x32xf32, #tpu.memory_space<vmem>>, vector<1x32xf32>,
    %c5_164 = arith.constant 5 : index
    %c2_165 = arith.constant 2 : index
    %170 = memref.load %arg1[%c5_164, %c2_165] : memref<7x8xi32, #tpu.memory_space<smem>>
    %171 = arith.index_cast %170 : i32 to index
    %c0_166 = arith.constant 0 : index
    %172 = vector.load %arg3[%171, %c0_166] : memref<128x32xf32, #tpu.memory_space<vmem>>, vector<1x32xf32>
    %c50 = arith.constant 50 : index
    %c0_167 = arith.constant 0 : index
    %173 = vector.load %arg13[%c50, %c0_167] : memref<64x32xf32, #tpu.memory_space<vmem>>, vector<1x32xf32>
    tpu.vector_store %arg13[%c50, %c0_167], %172 {strides = array<i32>} : memref<64x32xf32, #tpu.memory_space<vmem>>, vector<1x32xf32>,
    %c5_168 = arith.constant 5 : index
    %c3_169 = arith.constant 3 : index
    %174 = memref.load %arg1[%c5_168, %c3_169] : memref<7x8xi32, #tpu.memory_space<smem>>
    %175 = arith.index_cast %174 : i32 to index
    %c0_170 = arith.constant 0 : index
    %176 = vector.load %arg3[%175, %c0_170] : memref<128x32xf32, #tpu.memory_space<vmem>>, vector<1x32xf32>
    %c51 = arith.constant 51 : index
    %c0_171 = arith.constant 0 : index
    %177 = vector.load %arg13[%c51, %c0_171] : memref<64x32xf32, #tpu.memory_space<vmem>>, vector<1x32xf32>
    tpu.vector_store %arg13[%c51, %c0_171], %176 {strides = array<i32>} : memref<64x32xf32, #tpu.memory_space<vmem>>, vector<1x32xf32>,
    %c5_172 = arith.constant 5 : index
    %c4_173 = arith.constant 4 : index
    %178 = memref.load %arg1[%c5_172, %c4_173] : memref<7x8xi32, #tpu.memory_space<smem>>
    %179 = arith.index_cast %178 : i32 to index
    %c0_174 = arith.constant 0 : index
    %180 = vector.load %arg3[%179, %c0_174] : memref<128x32xf32, #tpu.memory_space<vmem>>, vector<1x32xf32>
    %c52 = arith.constant 52 : index
    %c0_175 = arith.constant 0 : index
    %181 = vector.load %arg13[%c52, %c0_175] : memref<64x32xf32, #tpu.memory_space<vmem>>, vector<1x32xf32>
    tpu.vector_store %arg13[%c52, %c0_175], %180 {strides = array<i32>} : memref<64x32xf32, #tpu.memory_space<vmem>>, vector<1x32xf32>,
    %c5_176 = arith.constant 5 : index
    %c5_177 = arith.constant 5 : index
    %182 = memref.load %arg1[%c5_176, %c5_177] : memref<7x8xi32, #tpu.memory_space<smem>>
    %183 = arith.index_cast %182 : i32 to index
    %c0_178 = arith.constant 0 : index
    %184 = vector.load %arg3[%183, %c0_178] : memref<128x32xf32, #tpu.memory_space<vmem>>, vector<1x32xf32>
    %c53 = arith.constant 53 : index
    %c0_179 = arith.constant 0 : index
    %185 = vector.load %arg13[%c53, %c0_179] : memref<64x32xf32, #tpu.memory_space<vmem>>, vector<1x32xf32>
    tpu.vector_store %arg13[%c53, %c0_179], %184 {strides = array<i32>} : memref<64x32xf32, #tpu.memory_space<vmem>>, vector<1x32xf32>,
    %c5_180 = arith.constant 5 : index
    %c6_181 = arith.constant 6 : index
    %186 = memref.load %arg1[%c5_180, %c6_181] : memref<7x8xi32, #tpu.memory_space<smem>>
    %187 = arith.index_cast %186 : i32 to index
    %c0_182 = arith.constant 0 : index
    %188 = vector.load %arg3[%187, %c0_182] : memref<128x32xf32, #tpu.memory_space<vmem>>, vector<1x32xf32>
    %c54 = arith.constant 54 : index
    %c0_183 = arith.constant 0 : index
    %189 = vector.load %arg13[%c54, %c0_183] : memref<64x32xf32, #tpu.memory_space<vmem>>, vector<1x32xf32>
    tpu.vector_store %arg13[%c54, %c0_183], %188 {strides = array<i32>} : memref<64x32xf32, #tpu.memory_space<vmem>>, vector<1x32xf32>,
    %c5_184 = arith.constant 5 : index
    %c7_185 = arith.constant 7 : index
    %190 = memref.load %arg1[%c5_184, %c7_185] : memref<7x8xi32, #tpu.memory_space<smem>>
    %191 = arith.index_cast %190 : i32 to index
    %c0_186 = arith.constant 0 : index
    %192 = vector.load %arg3[%191, %c0_186] : memref<128x32xf32, #tpu.memory_space<vmem>>, vector<1x32xf32>
    %c55 = arith.constant 55 : index
    %c0_187 = arith.constant 0 : index
    %193 = vector.load %arg13[%c55, %c0_187] : memref<64x32xf32, #tpu.memory_space<vmem>>, vector<1x32xf32>
    tpu.vector_store %arg13[%c55, %c0_187], %192 {strides = array<i32>} : memref<64x32xf32, #tpu.memory_space<vmem>>, vector<1x32xf32>,
    %c6_188 = arith.constant 6 : index
    %c0_189 = arith.constant 0 : index
    %194 = memref.load %arg1[%c6_188, %c0_189] : memref<7x8xi32, #tpu.memory_space<smem>>
    %195 = arith.index_cast %194 : i32 to index
    %c0_190 = arith.constant 0 : index
    %196 = vector.load %arg3[%195, %c0_190] : memref<128x32xf32, #tpu.memory_space<vmem>>, vector<1x32xf32>
    %c56 = arith.constant 56 : index
    %c0_191 = arith.constant 0 : index
    %197 = vector.load %arg13[%c56, %c0_191] : memref<64x32xf32, #tpu.memory_space<vmem>>, vector<1x32xf32>
    tpu.vector_store %arg13[%c56, %c0_191], %196 {strides = array<i32>} : memref<64x32xf32, #tpu.memory_space<vmem>>, vector<1x32xf32>,
    %c6_192 = arith.constant 6 : index
    %c1_193 = arith.constant 1 : index
    %198 = memref.load %arg1[%c6_192, %c1_193] : memref<7x8xi32, #tpu.memory_space<smem>>
    %199 = arith.index_cast %198 : i32 to index
    %c0_194 = arith.constant 0 : index
    %200 = vector.load %arg3[%199, %c0_194] : memref<128x32xf32, #tpu.memory_space<vmem>>, vector<1x32xf32>
    %c57 = arith.constant 57 : index
    %c0_195 = arith.constant 0 : index
    %201 = vector.load %arg13[%c57, %c0_195] : memref<64x32xf32, #tpu.memory_space<vmem>>, vector<1x32xf32>
    tpu.vector_store %arg13[%c57, %c0_195], %200 {strides = array<i32>} : memref<64x32xf32, #tpu.memory_space<vmem>>, vector<1x32xf32>,
    %c6_196 = arith.constant 6 : index
    %c2_197 = arith.constant 2 : index
    %202 = memref.load %arg1[%c6_196, %c2_197] : memref<7x8xi32, #tpu.memory_space<smem>>
    %203 = arith.index_cast %202 : i32 to index
    %c0_198 = arith.constant 0 : index
    %204 = vector.load %arg3[%203, %c0_198] : memref<128x32xf32, #tpu.memory_space<vmem>>, vector<1x32xf32>
    %c58 = arith.constant 58 : index
    %c0_199 = arith.constant 0 : index
    %205 = vector.load %arg13[%c58, %c0_199] : memref<64x32xf32, #tpu.memory_space<vmem>>, vector<1x32xf32>
    tpu.vector_store %arg13[%c58, %c0_199], %204 {strides = array<i32>} : memref<64x32xf32, #tpu.memory_space<vmem>>, vector<1x32xf32>,
    %c6_200 = arith.constant 6 : index
    %c3_201 = arith.constant 3 : index
    %206 = memref.load %arg1[%c6_200, %c3_201] : memref<7x8xi32, #tpu.memory_space<smem>>
    %207 = arith.index_cast %206 : i32 to index
    %c0_202 = arith.constant 0 : index
    %208 = vector.load %arg3[%207, %c0_202] : memref<128x32xf32, #tpu.memory_space<vmem>>, vector<1x32xf32>
    %c59 = arith.constant 59 : index
    %c0_203 = arith.constant 0 : index
    %209 = vector.load %arg13[%c59, %c0_203] : memref<64x32xf32, #tpu.memory_space<vmem>>, vector<1x32xf32>
    tpu.vector_store %arg13[%c59, %c0_203], %208 {strides = array<i32>} : memref<64x32xf32, #tpu.memory_space<vmem>>, vector<1x32xf32>,
    %c6_204 = arith.constant 6 : index
    %c4_205 = arith.constant 4 : index
    %210 = memref.load %arg1[%c6_204, %c4_205] : memref<7x8xi32, #tpu.memory_space<smem>>
    %211 = arith.index_cast %210 : i32 to index
    %c0_206 = arith.constant 0 : index
    %212 = vector.load %arg3[%211, %c0_206] : memref<128x32xf32, #tpu.memory_space<vmem>>, vector<1x32xf32>
    %c60 = arith.constant 60 : index
    %c0_207 = arith.constant 0 : index
    %213 = vector.load %arg13[%c60, %c0_207] : memref<64x32xf32, #tpu.memory_space<vmem>>, vector<1x32xf32>
    tpu.vector_store %arg13[%c60, %c0_207], %212 {strides = array<i32>} : memref<64x32xf32, #tpu.memory_space<vmem>>, vector<1x32xf32>,
    %c6_208 = arith.constant 6 : index
    %c5_209 = arith.constant 5 : index
    %214 = memref.load %arg1[%c6_208, %c5_209] : memref<7x8xi32, #tpu.memory_space<smem>>
    %215 = arith.index_cast %214 : i32 to index
    %c0_210 = arith.constant 0 : index
    %216 = vector.load %arg3[%215, %c0_210] : memref<128x32xf32, #tpu.memory_space<vmem>>, vector<1x32xf32>
    %c61 = arith.constant 61 : index
    %c0_211 = arith.constant 0 : index
    %217 = vector.load %arg13[%c61, %c0_211] : memref<64x32xf32, #tpu.memory_space<vmem>>, vector<1x32xf32>
    tpu.vector_store %arg13[%c61, %c0_211], %216 {strides = array<i32>} : memref<64x32xf32, #tpu.memory_space<vmem>>, vector<1x32xf32>,
    %c6_212 = arith.constant 6 : index
    %c6_213 = arith.constant 6 : index
    %218 = memref.load %arg1[%c6_212, %c6_213] : memref<7x8xi32, #tpu.memory_space<smem>>
    %219 = arith.index_cast %218 : i32 to index
    %c0_214 = arith.constant 0 : index
    %220 = vector.load %arg3[%219, %c0_214] : memref<128x32xf32, #tpu.memory_space<vmem>>, vector<1x32xf32>
    %c62 = arith.constant 62 : index
    %c0_215 = arith.constant 0 : index
    %221 = vector.load %arg13[%c62, %c0_215] : memref<64x32xf32, #tpu.memory_space<vmem>>, vector<1x32xf32>
    tpu.vector_store %arg13[%c62, %c0_215], %220 {strides = array<i32>} : memref<64x32xf32, #tpu.memory_space<vmem>>, vector<1x32xf32>,
    %c6_216 = arith.constant 6 : index
    %c7_217 = arith.constant 7 : index
    %222 = memref.load %arg1[%c6_216, %c7_217] : memref<7x8xi32, #tpu.memory_space<smem>>
    %223 = arith.index_cast %222 : i32 to index
    %c0_218 = arith.constant 0 : index
    %224 = vector.load %arg3[%223, %c0_218] : memref<128x32xf32, #tpu.memory_space<vmem>>, vector<1x32xf32>
    %c63 = arith.constant 63 : index
    %c0_219 = arith.constant 0 : index
    %225 = vector.load %arg13[%c63, %c0_219] : memref<64x32xf32, #tpu.memory_space<vmem>>, vector<1x32xf32>
    tpu.vector_store %arg13[%c63, %c0_219], %224 {strides = array<i32>} : memref<64x32xf32, #tpu.memory_space<vmem>>, vector<1x32xf32>,
    %c0_220 = arith.constant 0 : index
    %c0_221 = arith.constant 0 : index
    %226 = vector.load %arg13[%c0_220, %c0_221] : memref<64x32xf32, #tpu.memory_space<vmem>>, vector<64x32xf32>
    %c0_222 = arith.constant 0 : index
    %c0_223 = arith.constant 0 : index
    %227 = vector.load %arg4[%c0_222, %c0_223] : memref<32x128xf32, #tpu.memory_space<vmem>>, vector<32x128xf32>
    %cst = arith.constant dense<0.000000e+00> : vector<64x128xf32>
    %228 = tpu.matmul %226, %227, %cst {dimension_numbers = #tpu.dot_dimension_numbers<[1], [0], [0], [1], [0, 0, 1, 1], [], []>} : vector<64x32xf32>, vector<32x128xf32>, vector<64x128xf32> -> vector<64x128xf32>
    %c0_224 = arith.constant 0 : index
    %c0_225 = arith.constant 0 : index
    %229 = vector.load %arg14[%c0_224, %c0_225] : memref<64x128xf32, #tpu.memory_space<vmem>>, vector<64x128xf32>
    tpu.vector_store %arg14[%c0_224, %c0_225], %228 {strides = array<i32>} : memref<64x128xf32, #tpu.memory_space<vmem>>, vector<64x128xf32>,
    %cst_226 = arith.constant 0.000000e+00 : f32
    %230 = vector.broadcast %cst_226 : f32 to vector<8x32xf32>
    %cst_227 = arith.constant 0.000000e+00 : f32
    %231 = vector.broadcast %cst_227 : f32 to vector<8x32xf32>
    %cst_228 = arith.constant 0.000000e+00 : f32
    %232 = vector.broadcast %cst_228 : f32 to vector<8x32xf32>
    %cst_229 = arith.constant 0.000000e+00 : f32
    %233 = vector.broadcast %cst_229 : f32 to vector<8x32xf32>
    %c0_230 = arith.constant 0 : index
    %c0_231 = arith.constant 0 : index
    %234 = vector.load %arg14[%c0_230, %c0_231] : memref<64x128xf32, #tpu.memory_space<vmem>>, vector<8x128xf32>
    %c0_232 = arith.constant 0 : index
    %c0_233 = arith.constant 0 : index
    %235 = vector.load %arg5[%c0_232, %c0_233] : memref<32x128xf32, #tpu.memory_space<vmem>>, vector<32x128xf32>
    %cst_234 = arith.constant dense<0.000000e+00> : vector<8x128xf32>
    %236 = tpu.matmul %230, %235, %cst_234 {dimension_numbers = #tpu.dot_dimension_numbers<[1], [0], [0], [1], [0, 0, 1, 1], [], []>} : vector<8x32xf32>, vector<32x128xf32>, vector<8x128xf32> -> vector<8x128xf32>
    %237 = arith.addf %234, %236 : vector<8x128xf32>
    %c0_235 = arith.constant 0 : index
    %c0_236 = arith.constant 0 : index
    %238 = vector.load %arg6[%c0_235, %c0_236] : memref<1x128xf32, #tpu.memory_space<vmem>>, vector<1x128xf32>
    %239 = vector.broadcast %238 : vector<1x128xf32> to vector<8x128xf32>
    %240 = arith.addf %237, %239 : vector<8x128xf32>
    %241 = vector.extract_strided_slice %240 {offsets = [0, 0], sizes = [8, 32], strides = [1, 1]} : vector<8x128xf32> to vector<8x32xf32>
    %242 = arith.negf %241 : vector<8x32xf32>
    %243 = math.exp %242 : vector<8x32xf32>
    %cst_237 = arith.constant 1.000000e+00 : f32
    %244 = vector.broadcast %cst_237 : f32 to vector<8x32xf32>
    %245 = arith.addf %244, %243 : vector<8x32xf32>
    %246 = arith.divf %244, %245 : vector<8x32xf32>
    %247 = vector.extract_strided_slice %240 {offsets = [0, 32], sizes = [8, 32], strides = [1, 1]} : vector<8x128xf32> to vector<8x32xf32>
    %248 = arith.negf %247 : vector<8x32xf32>
    %249 = math.exp %248 : vector<8x32xf32>
    %cst_238 = arith.constant 1.000000e+00 : f32
    %250 = vector.broadcast %cst_238 : f32 to vector<8x32xf32>
    %251 = arith.addf %250, %249 : vector<8x32xf32>
    %252 = arith.divf %250, %251 : vector<8x32xf32>
    %253 = vector.extract_strided_slice %240 {offsets = [0, 64], sizes = [8, 32], strides = [1, 1]} : vector<8x128xf32> to vector<8x32xf32>
    %254 = math.tanh %253 : vector<8x32xf32>
    %255 = vector.extract_strided_slice %240 {offsets = [0, 96], sizes = [8, 32], strides = [1, 1]} : vector<8x128xf32> to vector<8x32xf32>
    %256 = arith.negf %255 : vector<8x32xf32>
    %257 = math.exp %256 : vector<8x32xf32>
    %cst_239 = arith.constant 1.000000e+00 : f32
    %258 = vector.broadcast %cst_239 : f32 to vector<8x32xf32>
    %259 = arith.addf %258, %257 : vector<8x32xf32>
    %260 = arith.divf %258, %259 : vector<8x32xf32>
    %261 = arith.mulf %252, %232 : vector<8x32xf32>
    %262 = arith.mulf %246, %254 : vector<8x32xf32>
    %263 = arith.addf %261, %262 : vector<8x32xf32>
    %264 = math.tanh %263 : vector<8x32xf32>
    %265 = arith.mulf %260, %264 : vector<8x32xf32>
    %c0_240 = arith.constant 0 : index
    %c0_241 = arith.constant 0 : index
    %266 = vector.load %arg7[%c0_240, %c0_241] : memref<32x128xf32, #tpu.memory_space<vmem>>, vector<32x128xf32>
    %cst_242 = arith.constant dense<0.000000e+00> : vector<8x128xf32>
    %267 = tpu.matmul %265, %266, %cst_242 {dimension_numbers = #tpu.dot_dimension_numbers<[1], [0], [0], [1], [0, 0, 1, 1], [], []>} : vector<8x32xf32>, vector<32x128xf32>, vector<8x128xf32> -> vector<8x128xf32>
    %c0_243 = arith.constant 0 : index
    %c0_244 = arith.constant 0 : index
    %268 = vector.load %arg8[%c0_243, %c0_244] : memref<32x128xf32, #tpu.memory_space<vmem>>, vector<32x128xf32>
    %cst_245 = arith.constant dense<0.000000e+00> : vector<8x128xf32>
    %269 = tpu.matmul %231, %268, %cst_245 {dimension_numbers = #tpu.dot_dimension_numbers<[1], [0], [0], [1], [0, 0, 1, 1], [], []>} : vector<8x32xf32>, vector<32x128xf32>, vector<8x128xf32> -> vector<8x128xf32>
    %270 = arith.addf %267, %269 : vector<8x128xf32>
    %c0_246 = arith.constant 0 : index
    %c0_247 = arith.constant 0 : index
    %271 = vector.load %arg9[%c0_246, %c0_247] : memref<1x128xf32, #tpu.memory_space<vmem>>, vector<1x128xf32>
    %272 = vector.broadcast %271 : vector<1x128xf32> to vector<8x128xf32>
    %273 = arith.addf %270, %272 : vector<8x128xf32>
    %274 = vector.extract_strided_slice %273 {offsets = [0, 0], sizes = [8, 32], strides = [1, 1]} : vector<8x128xf32> to vector<8x32xf32>
    %275 = arith.negf %274 : vector<8x32xf32>
    %276 = math.exp %275 : vector<8x32xf32>
    %cst_248 = arith.constant 1.000000e+00 : f32
    %277 = vector.broadcast %cst_248 : f32 to vector<8x32xf32>
    %278 = arith.addf %277, %276 : vector<8x32xf32>
    %279 = arith.divf %277, %278 : vector<8x32xf32>
    %280 = vector.extract_strided_slice %273 {offsets = [0, 32], sizes = [8, 32], strides = [1, 1]} : vector<8x128xf32> to vector<8x32xf32>
    %281 = arith.negf %280 : vector<8x32xf32>
    %282 = math.exp %281 : vector<8x32xf32>
    %cst_249 = arith.constant 1.000000e+00 : f32
    %283 = vector.broadcast %cst_249 : f32 to vector<8x32xf32>
    %284 = arith.addf %283, %282 : vector<8x32xf32>
    %285 = arith.divf %283, %284 : vector<8x32xf32>
    %286 = vector.extract_strided_slice %273 {offsets = [0, 64], sizes = [8, 32], strides = [1, 1]} : vector<8x128xf32> to vector<8x32xf32>
    %287 = math.tanh %286 : vector<8x32xf32>
    %288 = vector.extract_strided_slice %273 {offsets = [0, 96], sizes = [8, 32], strides = [1, 1]} : vector<8x128xf32> to vector<8x32xf32>
    %289 = arith.negf %288 : vector<8x32xf32>
    %290 = math.exp %289 : vector<8x32xf32>
    %cst_250 = arith.constant 1.000000e+00 : f32
    %291 = vector.broadcast %cst_250 : f32 to vector<8x32xf32>
    %292 = arith.addf %291, %290 : vector<8x32xf32>
    %293 = arith.divf %291, %292 : vector<8x32xf32>
    %294 = arith.mulf %285, %233 : vector<8x32xf32>
    %295 = arith.mulf %279, %287 : vector<8x32xf32>
    %296 = arith.addf %294, %295 : vector<8x32xf32>
    %297 = math.tanh %296 : vector<8x32xf32>
    %298 = arith.mulf %293, %297 : vector<8x32xf32>
    %c0_251 = arith.constant 0 : index
    %c0_252 = arith.constant 0 : index
    %299 = vector.load %arg15[%c0_251, %c0_252] : memref<64x32xf32, #tpu.memory_space<vmem>>, vector<8x32xf32>
    tpu.vector_store %arg15[%c0_251, %c0_252], %298 {strides = array<i32>} : memref<64x32xf32, #tpu.memory_space<vmem>>, vector<8x32xf32>,
    %c8_253 = arith.constant 8 : index
    %c0_254 = arith.constant 0 : index
    %300 = vector.load %arg14[%c8_253, %c0_254] : memref<64x128xf32, #tpu.memory_space<vmem>>, vector<8x128xf32>
    %c0_255 = arith.constant 0 : index
    %c0_256 = arith.constant 0 : index
    %301 = vector.load %arg5[%c0_255, %c0_256] : memref<32x128xf32, #tpu.memory_space<vmem>>, vector<32x128xf32>
    %cst_257 = arith.constant dense<0.000000e+00> : vector<8x128xf32>
    %302 = tpu.matmul %265, %301, %cst_257 {dimension_numbers = #tpu.dot_dimension_numbers<[1], [0], [0], [1], [0, 0, 1, 1], [], []>} : vector<8x32xf32>, vector<32x128xf32>, vector<8x128xf32> -> vector<8x128xf32>
    %303 = arith.addf %300, %302 : vector<8x128xf32>
    %c0_258 = arith.constant 0 : index
    %c0_259 = arith.constant 0 : index
    %304 = vector.load %arg6[%c0_258, %c0_259] : memref<1x128xf32, #tpu.memory_space<vmem>>, vector<1x128xf32>
    %305 = vector.broadcast %304 : vector<1x128xf32> to vector<8x128xf32>
    %306 = arith.addf %303, %305 : vector<8x128xf32>
    %307 = vector.extract_strided_slice %306 {offsets = [0, 0], sizes = [8, 32], strides = [1, 1]} : vector<8x128xf32> to vector<8x32xf32>
    %308 = arith.negf %307 : vector<8x32xf32>
    %309 = math.exp %308 : vector<8x32xf32>
    %cst_260 = arith.constant 1.000000e+00 : f32
    %310 = vector.broadcast %cst_260 : f32 to vector<8x32xf32>
    %311 = arith.addf %310, %309 : vector<8x32xf32>
    %312 = arith.divf %310, %311 : vector<8x32xf32>
    %313 = vector.extract_strided_slice %306 {offsets = [0, 32], sizes = [8, 32], strides = [1, 1]} : vector<8x128xf32> to vector<8x32xf32>
    %314 = arith.negf %313 : vector<8x32xf32>
    %315 = math.exp %314 : vector<8x32xf32>
    %cst_261 = arith.constant 1.000000e+00 : f32
    %316 = vector.broadcast %cst_261 : f32 to vector<8x32xf32>
    %317 = arith.addf %316, %315 : vector<8x32xf32>
    %318 = arith.divf %316, %317 : vector<8x32xf32>
    %319 = vector.extract_strided_slice %306 {offsets = [0, 64], sizes = [8, 32], strides = [1, 1]} : vector<8x128xf32> to vector<8x32xf32>
    %320 = math.tanh %319 : vector<8x32xf32>
    %321 = vector.extract_strided_slice %306 {offsets = [0, 96], sizes = [8, 32], strides = [1, 1]} : vector<8x128xf32> to vector<8x32xf32>
    %322 = arith.negf %321 : vector<8x32xf32>
    %323 = math.exp %322 : vector<8x32xf32>
    %cst_262 = arith.constant 1.000000e+00 : f32
    %324 = vector.broadcast %cst_262 : f32 to vector<8x32xf32>
    %325 = arith.addf %324, %323 : vector<8x32xf32>
    %326 = arith.divf %324, %325 : vector<8x32xf32>
    %327 = arith.mulf %318, %263 : vector<8x32xf32>
    %328 = arith.mulf %312, %320 : vector<8x32xf32>
    %329 = arith.addf %327, %328 : vector<8x32xf32>
    %330 = math.tanh %329 : vector<8x32xf32>
    %331 = arith.mulf %326, %330 : vector<8x32xf32>
    %c0_263 = arith.constant 0 : index
    %c0_264 = arith.constant 0 : index
    %332 = vector.load %arg7[%c0_263, %c0_264] : memref<32x128xf32, #tpu.memory_space<vmem>>, vector<32x128xf32>
    %cst_265 = arith.constant dense<0.000000e+00> : vector<8x128xf32>
    %333 = tpu.matmul %331, %332, %cst_265 {dimension_numbers = #tpu.dot_dimension_numbers<[1], [0], [0], [1], [0, 0, 1, 1], [], []>} : vector<8x32xf32>, vector<32x128xf32>, vector<8x128xf32> -> vector<8x128xf32>
    %c0_266 = arith.constant 0 : index
    %c0_267 = arith.constant 0 : index
    %334 = vector.load %arg8[%c0_266, %c0_267] : memref<32x128xf32, #tpu.memory_space<vmem>>, vector<32x128xf32>
    %cst_268 = arith.constant dense<0.000000e+00> : vector<8x128xf32>
    %335 = tpu.matmul %298, %334, %cst_268 {dimension_numbers = #tpu.dot_dimension_numbers<[1], [0], [0], [1], [0, 0, 1, 1], [], []>} : vector<8x32xf32>, vector<32x128xf32>, vector<8x128xf32> -> vector<8x128xf32>
    %336 = arith.addf %333, %335 : vector<8x128xf32>
    %c0_269 = arith.constant 0 : index
    %c0_270 = arith.constant 0 : index
    %337 = vector.load %arg9[%c0_269, %c0_270] : memref<1x128xf32, #tpu.memory_space<vmem>>, vector<1x128xf32>
    %338 = vector.broadcast %337 : vector<1x128xf32> to vector<8x128xf32>
    %339 = arith.addf %336, %338 : vector<8x128xf32>
    %340 = vector.extract_strided_slice %339 {offsets = [0, 0], sizes = [8, 32], strides = [1, 1]} : vector<8x128xf32> to vector<8x32xf32>
    %341 = arith.negf %340 : vector<8x32xf32>
    %342 = math.exp %341 : vector<8x32xf32>
    %cst_271 = arith.constant 1.000000e+00 : f32
    %343 = vector.broadcast %cst_271 : f32 to vector<8x32xf32>
    %344 = arith.addf %343, %342 : vector<8x32xf32>
    %345 = arith.divf %343, %344 : vector<8x32xf32>
    %346 = vector.extract_strided_slice %339 {offsets = [0, 32], sizes = [8, 32], strides = [1, 1]} : vector<8x128xf32> to vector<8x32xf32>
    %347 = arith.negf %346 : vector<8x32xf32>
    %348 = math.exp %347 : vector<8x32xf32>
    %cst_272 = arith.constant 1.000000e+00 : f32
    %349 = vector.broadcast %cst_272 : f32 to vector<8x32xf32>
    %350 = arith.addf %349, %348 : vector<8x32xf32>
    %351 = arith.divf %349, %350 : vector<8x32xf32>
    %352 = vector.extract_strided_slice %339 {offsets = [0, 64], sizes = [8, 32], strides = [1, 1]} : vector<8x128xf32> to vector<8x32xf32>
    %353 = math.tanh %352 : vector<8x32xf32>
    %354 = vector.extract_strided_slice %339 {offsets = [0, 96], sizes = [8, 32], strides = [1, 1]} : vector<8x128xf32> to vector<8x32xf32>
    %355 = arith.negf %354 : vector<8x32xf32>
    %356 = math.exp %355 : vector<8x32xf32>
    %cst_273 = arith.constant 1.000000e+00 : f32
    %357 = vector.broadcast %cst_273 : f32 to vector<8x32xf32>
    %358 = arith.addf %357, %356 : vector<8x32xf32>
    %359 = arith.divf %357, %358 : vector<8x32xf32>
    %360 = arith.mulf %351, %296 : vector<8x32xf32>
    %361 = arith.mulf %345, %353 : vector<8x32xf32>
    %362 = arith.addf %360, %361 : vector<8x32xf32>
    %363 = math.tanh %362 : vector<8x32xf32>
    %364 = arith.mulf %359, %363 : vector<8x32xf32>
    %c8_274 = arith.constant 8 : index
    %c0_275 = arith.constant 0 : index
    %365 = vector.load %arg15[%c8_274, %c0_275] : memref<64x32xf32, #tpu.memory_space<vmem>>, vector<8x32xf32>
    tpu.vector_store %arg15[%c8_274, %c0_275], %364 {strides = array<i32>} : memref<64x32xf32, #tpu.memory_space<vmem>>, vector<8x32xf32>,
    %c16_276 = arith.constant 16 : index
    %c0_277 = arith.constant 0 : index
    %366 = vector.load %arg14[%c16_276, %c0_277] : memref<64x128xf32, #tpu.memory_space<vmem>>, vector<8x128xf32>
    %c0_278 = arith.constant 0 : index
    %c0_279 = arith.constant 0 : index
    %367 = vector.load %arg5[%c0_278, %c0_279] : memref<32x128xf32, #tpu.memory_space<vmem>>, vector<32x128xf32>
    %cst_280 = arith.constant dense<0.000000e+00> : vector<8x128xf32>
    %368 = tpu.matmul %331, %367, %cst_280 {dimension_numbers = #tpu.dot_dimension_numbers<[1], [0], [0], [1], [0, 0, 1, 1], [], []>} : vector<8x32xf32>, vector<32x128xf32>, vector<8x128xf32> -> vector<8x128xf32>
    %369 = arith.addf %366, %368 : vector<8x128xf32>
    %c0_281 = arith.constant 0 : index
    %c0_282 = arith.constant 0 : index
    %370 = vector.load %arg6[%c0_281, %c0_282] : memref<1x128xf32, #tpu.memory_space<vmem>>, vector<1x128xf32>
    %371 = vector.broadcast %370 : vector<1x128xf32> to vector<8x128xf32>
    %372 = arith.addf %369, %371 : vector<8x128xf32>
    %373 = vector.extract_strided_slice %372 {offsets = [0, 0], sizes = [8, 32], strides = [1, 1]} : vector<8x128xf32> to vector<8x32xf32>
    %374 = arith.negf %373 : vector<8x32xf32>
    %375 = math.exp %374 : vector<8x32xf32>
    %cst_283 = arith.constant 1.000000e+00 : f32
    %376 = vector.broadcast %cst_283 : f32 to vector<8x32xf32>
    %377 = arith.addf %376, %375 : vector<8x32xf32>
    %378 = arith.divf %376, %377 : vector<8x32xf32>
    %379 = vector.extract_strided_slice %372 {offsets = [0, 32], sizes = [8, 32], strides = [1, 1]} : vector<8x128xf32> to vector<8x32xf32>
    %380 = arith.negf %379 : vector<8x32xf32>
    %381 = math.exp %380 : vector<8x32xf32>
    %cst_284 = arith.constant 1.000000e+00 : f32
    %382 = vector.broadcast %cst_284 : f32 to vector<8x32xf32>
    %383 = arith.addf %382, %381 : vector<8x32xf32>
    %384 = arith.divf %382, %383 : vector<8x32xf32>
    %385 = vector.extract_strided_slice %372 {offsets = [0, 64], sizes = [8, 32], strides = [1, 1]} : vector<8x128xf32> to vector<8x32xf32>
    %386 = math.tanh %385 : vector<8x32xf32>
    %387 = vector.extract_strided_slice %372 {offsets = [0, 96], sizes = [8, 32], strides = [1, 1]} : vector<8x128xf32> to vector<8x32xf32>
    %388 = arith.negf %387 : vector<8x32xf32>
    %389 = math.exp %388 : vector<8x32xf32>
    %cst_285 = arith.constant 1.000000e+00 : f32
    %390 = vector.broadcast %cst_285 : f32 to vector<8x32xf32>
    %391 = arith.addf %390, %389 : vector<8x32xf32>
    %392 = arith.divf %390, %391 : vector<8x32xf32>
    %393 = arith.mulf %384, %329 : vector<8x32xf32>
    %394 = arith.mulf %378, %386 : vector<8x32xf32>
    %395 = arith.addf %393, %394 : vector<8x32xf32>
    %396 = math.tanh %395 : vector<8x32xf32>
    %397 = arith.mulf %392, %396 : vector<8x32xf32>
    %c0_286 = arith.constant 0 : index
    %c0_287 = arith.constant 0 : index
    %398 = vector.load %arg7[%c0_286, %c0_287] : memref<32x128xf32, #tpu.memory_space<vmem>>, vector<32x128xf32>
    %cst_288 = arith.constant dense<0.000000e+00> : vector<8x128xf32>
    %399 = tpu.matmul %397, %398, %cst_288 {dimension_numbers = #tpu.dot_dimension_numbers<[1], [0], [0], [1], [0, 0, 1, 1], [], []>} : vector<8x32xf32>, vector<32x128xf32>, vector<8x128xf32> -> vector<8x128xf32>
    %c0_289 = arith.constant 0 : index
    %c0_290 = arith.constant 0 : index
    %400 = vector.load %arg8[%c0_289, %c0_290] : memref<32x128xf32, #tpu.memory_space<vmem>>, vector<32x128xf32>
    %cst_291 = arith.constant dense<0.000000e+00> : vector<8x128xf32>
    %401 = tpu.matmul %364, %400, %cst_291 {dimension_numbers = #tpu.dot_dimension_numbers<[1], [0], [0], [1], [0, 0, 1, 1], [], []>} : vector<8x32xf32>, vector<32x128xf32>, vector<8x128xf32> -> vector<8x128xf32>
    %402 = arith.addf %399, %401 : vector<8x128xf32>
    %c0_292 = arith.constant 0 : index
    %c0_293 = arith.constant 0 : index
    %403 = vector.load %arg9[%c0_292, %c0_293] : memref<1x128xf32, #tpu.memory_space<vmem>>, vector<1x128xf32>
    %404 = vector.broadcast %403 : vector<1x128xf32> to vector<8x128xf32>
    %405 = arith.addf %402, %404 : vector<8x128xf32>
    %406 = vector.extract_strided_slice %405 {offsets = [0, 0], sizes = [8, 32], strides = [1, 1]} : vector<8x128xf32> to vector<8x32xf32>
    %407 = arith.negf %406 : vector<8x32xf32>
    %408 = math.exp %407 : vector<8x32xf32>
    %cst_294 = arith.constant 1.000000e+00 : f32
    %409 = vector.broadcast %cst_294 : f32 to vector<8x32xf32>
    %410 = arith.addf %409, %408 : vector<8x32xf32>
    %411 = arith.divf %409, %410 : vector<8x32xf32>
    %412 = vector.extract_strided_slice %405 {offsets = [0, 32], sizes = [8, 32], strides = [1, 1]} : vector<8x128xf32> to vector<8x32xf32>
    %413 = arith.negf %412 : vector<8x32xf32>
    %414 = math.exp %413 : vector<8x32xf32>
    %cst_295 = arith.constant 1.000000e+00 : f32
    %415 = vector.broadcast %cst_295 : f32 to vector<8x32xf32>
    %416 = arith.addf %415, %414 : vector<8x32xf32>
    %417 = arith.divf %415, %416 : vector<8x32xf32>
    %418 = vector.extract_strided_slice %405 {offsets = [0, 64], sizes = [8, 32], strides = [1, 1]} : vector<8x128xf32> to vector<8x32xf32>
    %419 = math.tanh %418 : vector<8x32xf32>
    %420 = vector.extract_strided_slice %405 {offsets = [0, 96], sizes = [8, 32], strides = [1, 1]} : vector<8x128xf32> to vector<8x32xf32>
    %421 = arith.negf %420 : vector<8x32xf32>
    %422 = math.exp %421 : vector<8x32xf32>
    %cst_296 = arith.constant 1.000000e+00 : f32
    %423 = vector.broadcast %cst_296 : f32 to vector<8x32xf32>
    %424 = arith.addf %423, %422 : vector<8x32xf32>
    %425 = arith.divf %423, %424 : vector<8x32xf32>
    %426 = arith.mulf %417, %362 : vector<8x32xf32>
    %427 = arith.mulf %411, %419 : vector<8x32xf32>
    %428 = arith.addf %426, %427 : vector<8x32xf32>
    %429 = math.tanh %428 : vector<8x32xf32>
    %430 = arith.mulf %425, %429 : vector<8x32xf32>
    %c16_297 = arith.constant 16 : index
    %c0_298 = arith.constant 0 : index
    %431 = vector.load %arg15[%c16_297, %c0_298] : memref<64x32xf32, #tpu.memory_space<vmem>>, vector<8x32xf32>
    tpu.vector_store %arg15[%c16_297, %c0_298], %430 {strides = array<i32>} : memref<64x32xf32, #tpu.memory_space<vmem>>, vector<8x32xf32>,
    %c24_299 = arith.constant 24 : index
    %c0_300 = arith.constant 0 : index
    %432 = vector.load %arg14[%c24_299, %c0_300] : memref<64x128xf32, #tpu.memory_space<vmem>>, vector<8x128xf32>
    %c0_301 = arith.constant 0 : index
    %c0_302 = arith.constant 0 : index
    %433 = vector.load %arg5[%c0_301, %c0_302] : memref<32x128xf32, #tpu.memory_space<vmem>>, vector<32x128xf32>
    %cst_303 = arith.constant dense<0.000000e+00> : vector<8x128xf32>
    %434 = tpu.matmul %397, %433, %cst_303 {dimension_numbers = #tpu.dot_dimension_numbers<[1], [0], [0], [1], [0, 0, 1, 1], [], []>} : vector<8x32xf32>, vector<32x128xf32>, vector<8x128xf32> -> vector<8x128xf32>
    %435 = arith.addf %432, %434 : vector<8x128xf32>
    %c0_304 = arith.constant 0 : index
    %c0_305 = arith.constant 0 : index
    %436 = vector.load %arg6[%c0_304, %c0_305] : memref<1x128xf32, #tpu.memory_space<vmem>>, vector<1x128xf32>
    %437 = vector.broadcast %436 : vector<1x128xf32> to vector<8x128xf32>
    %438 = arith.addf %435, %437 : vector<8x128xf32>
    %439 = vector.extract_strided_slice %438 {offsets = [0, 0], sizes = [8, 32], strides = [1, 1]} : vector<8x128xf32> to vector<8x32xf32>
    %440 = arith.negf %439 : vector<8x32xf32>
    %441 = math.exp %440 : vector<8x32xf32>
    %cst_306 = arith.constant 1.000000e+00 : f32
    %442 = vector.broadcast %cst_306 : f32 to vector<8x32xf32>
    %443 = arith.addf %442, %441 : vector<8x32xf32>
    %444 = arith.divf %442, %443 : vector<8x32xf32>
    %445 = vector.extract_strided_slice %438 {offsets = [0, 32], sizes = [8, 32], strides = [1, 1]} : vector<8x128xf32> to vector<8x32xf32>
    %446 = arith.negf %445 : vector<8x32xf32>
    %447 = math.exp %446 : vector<8x32xf32>
    %cst_307 = arith.constant 1.000000e+00 : f32
    %448 = vector.broadcast %cst_307 : f32 to vector<8x32xf32>
    %449 = arith.addf %448, %447 : vector<8x32xf32>
    %450 = arith.divf %448, %449 : vector<8x32xf32>
    %451 = vector.extract_strided_slice %438 {offsets = [0, 64], sizes = [8, 32], strides = [1, 1]} : vector<8x128xf32> to vector<8x32xf32>
    %452 = math.tanh %451 : vector<8x32xf32>
    %453 = vector.extract_strided_slice %438 {offsets = [0, 96], sizes = [8, 32], strides = [1, 1]} : vector<8x128xf32> to vector<8x32xf32>
    %454 = arith.negf %453 : vector<8x32xf32>
    %455 = math.exp %454 : vector<8x32xf32>
    %cst_308 = arith.constant 1.000000e+00 : f32
    %456 = vector.broadcast %cst_308 : f32 to vector<8x32xf32>
    %457 = arith.addf %456, %455 : vector<8x32xf32>
    %458 = arith.divf %456, %457 : vector<8x32xf32>
    %459 = arith.mulf %450, %395 : vector<8x32xf32>
    %460 = arith.mulf %444, %452 : vector<8x32xf32>
    %461 = arith.addf %459, %460 : vector<8x32xf32>
    %462 = math.tanh %461 : vector<8x32xf32>
    %463 = arith.mulf %458, %462 : vector<8x32xf32>
    %c0_309 = arith.constant 0 : index
    %c0_310 = arith.constant 0 : index
    %464 = vector.load %arg7[%c0_309, %c0_310] : memref<32x128xf32, #tpu.memory_space<vmem>>, vector<32x128xf32>
    %cst_311 = arith.constant dense<0.000000e+00> : vector<8x128xf32>
    %465 = tpu.matmul %463, %464, %cst_311 {dimension_numbers = #tpu.dot_dimension_numbers<[1], [0], [0], [1], [0, 0, 1, 1], [], []>} : vector<8x32xf32>, vector<32x128xf32>, vector<8x128xf32> -> vector<8x128xf32>
    %c0_312 = arith.constant 0 : index
    %c0_313 = arith.constant 0 : index
    %466 = vector.load %arg8[%c0_312, %c0_313] : memref<32x128xf32, #tpu.memory_space<vmem>>, vector<32x128xf32>
    %cst_314 = arith.constant dense<0.000000e+00> : vector<8x128xf32>
    %467 = tpu.matmul %430, %466, %cst_314 {dimension_numbers = #tpu.dot_dimension_numbers<[1], [0], [0], [1], [0, 0, 1, 1], [], []>} : vector<8x32xf32>, vector<32x128xf32>, vector<8x128xf32> -> vector<8x128xf32>
    %468 = arith.addf %465, %467 : vector<8x128xf32>
    %c0_315 = arith.constant 0 : index
    %c0_316 = arith.constant 0 : index
    %469 = vector.load %arg9[%c0_315, %c0_316] : memref<1x128xf32, #tpu.memory_space<vmem>>, vector<1x128xf32>
    %470 = vector.broadcast %469 : vector<1x128xf32> to vector<8x128xf32>
    %471 = arith.addf %468, %470 : vector<8x128xf32>
    %472 = vector.extract_strided_slice %471 {offsets = [0, 0], sizes = [8, 32], strides = [1, 1]} : vector<8x128xf32> to vector<8x32xf32>
    %473 = arith.negf %472 : vector<8x32xf32>
    %474 = math.exp %473 : vector<8x32xf32>
    %cst_317 = arith.constant 1.000000e+00 : f32
    %475 = vector.broadcast %cst_317 : f32 to vector<8x32xf32>
    %476 = arith.addf %475, %474 : vector<8x32xf32>
    %477 = arith.divf %475, %476 : vector<8x32xf32>
    %478 = vector.extract_strided_slice %471 {offsets = [0, 32], sizes = [8, 32], strides = [1, 1]} : vector<8x128xf32> to vector<8x32xf32>
    %479 = arith.negf %478 : vector<8x32xf32>
    %480 = math.exp %479 : vector<8x32xf32>
    %cst_318 = arith.constant 1.000000e+00 : f32
    %481 = vector.broadcast %cst_318 : f32 to vector<8x32xf32>
    %482 = arith.addf %481, %480 : vector<8x32xf32>
    %483 = arith.divf %481, %482 : vector<8x32xf32>
    %484 = vector.extract_strided_slice %471 {offsets = [0, 64], sizes = [8, 32], strides = [1, 1]} : vector<8x128xf32> to vector<8x32xf32>
    %485 = math.tanh %484 : vector<8x32xf32>
    %486 = vector.extract_strided_slice %471 {offsets = [0, 96], sizes = [8, 32], strides = [1, 1]} : vector<8x128xf32> to vector<8x32xf32>
    %487 = arith.negf %486 : vector<8x32xf32>
    %488 = math.exp %487 : vector<8x32xf32>
    %cst_319 = arith.constant 1.000000e+00 : f32
    %489 = vector.broadcast %cst_319 : f32 to vector<8x32xf32>
    %490 = arith.addf %489, %488 : vector<8x32xf32>
    %491 = arith.divf %489, %490 : vector<8x32xf32>
    %492 = arith.mulf %483, %428 : vector<8x32xf32>
    %493 = arith.mulf %477, %485 : vector<8x32xf32>
    %494 = arith.addf %492, %493 : vector<8x32xf32>
    %495 = math.tanh %494 : vector<8x32xf32>
    %496 = arith.mulf %491, %495 : vector<8x32xf32>
    %c24_320 = arith.constant 24 : index
    %c0_321 = arith.constant 0 : index
    %497 = vector.load %arg15[%c24_320, %c0_321] : memref<64x32xf32, #tpu.memory_space<vmem>>, vector<8x32xf32>
    tpu.vector_store %arg15[%c24_320, %c0_321], %496 {strides = array<i32>} : memref<64x32xf32, #tpu.memory_space<vmem>>, vector<8x32xf32>,
    %c32_322 = arith.constant 32 : index
    %c0_323 = arith.constant 0 : index
    %498 = vector.load %arg14[%c32_322, %c0_323] : memref<64x128xf32, #tpu.memory_space<vmem>>, vector<8x128xf32>
    %c0_324 = arith.constant 0 : index
    %c0_325 = arith.constant 0 : index
    %499 = vector.load %arg5[%c0_324, %c0_325] : memref<32x128xf32, #tpu.memory_space<vmem>>, vector<32x128xf32>
    %cst_326 = arith.constant dense<0.000000e+00> : vector<8x128xf32>
    %500 = tpu.matmul %463, %499, %cst_326 {dimension_numbers = #tpu.dot_dimension_numbers<[1], [0], [0], [1], [0, 0, 1, 1], [], []>} : vector<8x32xf32>, vector<32x128xf32>, vector<8x128xf32> -> vector<8x128xf32>
    %501 = arith.addf %498, %500 : vector<8x128xf32>
    %c0_327 = arith.constant 0 : index
    %c0_328 = arith.constant 0 : index
    %502 = vector.load %arg6[%c0_327, %c0_328] : memref<1x128xf32, #tpu.memory_space<vmem>>, vector<1x128xf32>
    %503 = vector.broadcast %502 : vector<1x128xf32> to vector<8x128xf32>
    %504 = arith.addf %501, %503 : vector<8x128xf32>
    %505 = vector.extract_strided_slice %504 {offsets = [0, 0], sizes = [8, 32], strides = [1, 1]} : vector<8x128xf32> to vector<8x32xf32>
    %506 = arith.negf %505 : vector<8x32xf32>
    %507 = math.exp %506 : vector<8x32xf32>
    %cst_329 = arith.constant 1.000000e+00 : f32
    %508 = vector.broadcast %cst_329 : f32 to vector<8x32xf32>
    %509 = arith.addf %508, %507 : vector<8x32xf32>
    %510 = arith.divf %508, %509 : vector<8x32xf32>
    %511 = vector.extract_strided_slice %504 {offsets = [0, 32], sizes = [8, 32], strides = [1, 1]} : vector<8x128xf32> to vector<8x32xf32>
    %512 = arith.negf %511 : vector<8x32xf32>
    %513 = math.exp %512 : vector<8x32xf32>
    %cst_330 = arith.constant 1.000000e+00 : f32
    %514 = vector.broadcast %cst_330 : f32 to vector<8x32xf32>
    %515 = arith.addf %514, %513 : vector<8x32xf32>
    %516 = arith.divf %514, %515 : vector<8x32xf32>
    %517 = vector.extract_strided_slice %504 {offsets = [0, 64], sizes = [8, 32], strides = [1, 1]} : vector<8x128xf32> to vector<8x32xf32>
    %518 = math.tanh %517 : vector<8x32xf32>
    %519 = vector.extract_strided_slice %504 {offsets = [0, 96], sizes = [8, 32], strides = [1, 1]} : vector<8x128xf32> to vector<8x32xf32>
    %520 = arith.negf %519 : vector<8x32xf32>
    %521 = math.exp %520 : vector<8x32xf32>
    %cst_331 = arith.constant 1.000000e+00 : f32
    %522 = vector.broadcast %cst_331 : f32 to vector<8x32xf32>
    %523 = arith.addf %522, %521 : vector<8x32xf32>
    %524 = arith.divf %522, %523 : vector<8x32xf32>
    %525 = arith.mulf %516, %461 : vector<8x32xf32>
    %526 = arith.mulf %510, %518 : vector<8x32xf32>
    %527 = arith.addf %525, %526 : vector<8x32xf32>
    %528 = math.tanh %527 : vector<8x32xf32>
    %529 = arith.mulf %524, %528 : vector<8x32xf32>
    %c0_332 = arith.constant 0 : index
    %c0_333 = arith.constant 0 : index
    %530 = vector.load %arg7[%c0_332, %c0_333] : memref<32x128xf32, #tpu.memory_space<vmem>>, vector<32x128xf32>
    %cst_334 = arith.constant dense<0.000000e+00> : vector<8x128xf32>
    %531 = tpu.matmul %529, %530, %cst_334 {dimension_numbers = #tpu.dot_dimension_numbers<[1], [0], [0], [1], [0, 0, 1, 1], [], []>} : vector<8x32xf32>, vector<32x128xf32>, vector<8x128xf32> -> vector<8x128xf32>
    %c0_335 = arith.constant 0 : index
    %c0_336 = arith.constant 0 : index
    %532 = vector.load %arg8[%c0_335, %c0_336] : memref<32x128xf32, #tpu.memory_space<vmem>>, vector<32x128xf32>
    %cst_337 = arith.constant dense<0.000000e+00> : vector<8x128xf32>
    %533 = tpu.matmul %496, %532, %cst_337 {dimension_numbers = #tpu.dot_dimension_numbers<[1], [0], [0], [1], [0, 0, 1, 1], [], []>} : vector<8x32xf32>, vector<32x128xf32>, vector<8x128xf32> -> vector<8x128xf32>
    %534 = arith.addf %531, %533 : vector<8x128xf32>
    %c0_338 = arith.constant 0 : index
    %c0_339 = arith.constant 0 : index
    %535 = vector.load %arg9[%c0_338, %c0_339] : memref<1x128xf32, #tpu.memory_space<vmem>>, vector<1x128xf32>
    %536 = vector.broadcast %535 : vector<1x128xf32> to vector<8x128xf32>
    %537 = arith.addf %534, %536 : vector<8x128xf32>
    %538 = vector.extract_strided_slice %537 {offsets = [0, 0], sizes = [8, 32], strides = [1, 1]} : vector<8x128xf32> to vector<8x32xf32>
    %539 = arith.negf %538 : vector<8x32xf32>
    %540 = math.exp %539 : vector<8x32xf32>
    %cst_340 = arith.constant 1.000000e+00 : f32
    %541 = vector.broadcast %cst_340 : f32 to vector<8x32xf32>
    %542 = arith.addf %541, %540 : vector<8x32xf32>
    %543 = arith.divf %541, %542 : vector<8x32xf32>
    %544 = vector.extract_strided_slice %537 {offsets = [0, 32], sizes = [8, 32], strides = [1, 1]} : vector<8x128xf32> to vector<8x32xf32>
    %545 = arith.negf %544 : vector<8x32xf32>
    %546 = math.exp %545 : vector<8x32xf32>
    %cst_341 = arith.constant 1.000000e+00 : f32
    %547 = vector.broadcast %cst_341 : f32 to vector<8x32xf32>
    %548 = arith.addf %547, %546 : vector<8x32xf32>
    %549 = arith.divf %547, %548 : vector<8x32xf32>
    %550 = vector.extract_strided_slice %537 {offsets = [0, 64], sizes = [8, 32], strides = [1, 1]} : vector<8x128xf32> to vector<8x32xf32>
    %551 = math.tanh %550 : vector<8x32xf32>
    %552 = vector.extract_strided_slice %537 {offsets = [0, 96], sizes = [8, 32], strides = [1, 1]} : vector<8x128xf32> to vector<8x32xf32>
    %553 = arith.negf %552 : vector<8x32xf32>
    %554 = math.exp %553 : vector<8x32xf32>
    %cst_342 = arith.constant 1.000000e+00 : f32
    %555 = vector.broadcast %cst_342 : f32 to vector<8x32xf32>
    %556 = arith.addf %555, %554 : vector<8x32xf32>
    %557 = arith.divf %555, %556 : vector<8x32xf32>
    %558 = arith.mulf %549, %494 : vector<8x32xf32>
    %559 = arith.mulf %543, %551 : vector<8x32xf32>
    %560 = arith.addf %558, %559 : vector<8x32xf32>
    %561 = math.tanh %560 : vector<8x32xf32>
    %562 = arith.mulf %557, %561 : vector<8x32xf32>
    %c32_343 = arith.constant 32 : index
    %c0_344 = arith.constant 0 : index
    %563 = vector.load %arg15[%c32_343, %c0_344] : memref<64x32xf32, #tpu.memory_space<vmem>>, vector<8x32xf32>
    tpu.vector_store %arg15[%c32_343, %c0_344], %562 {strides = array<i32>} : memref<64x32xf32, #tpu.memory_space<vmem>>, vector<8x32xf32>,
    %c40_345 = arith.constant 40 : index
    %c0_346 = arith.constant 0 : index
    %564 = vector.load %arg14[%c40_345, %c0_346] : memref<64x128xf32, #tpu.memory_space<vmem>>, vector<8x128xf32>
    %c0_347 = arith.constant 0 : index
    %c0_348 = arith.constant 0 : index
    %565 = vector.load %arg5[%c0_347, %c0_348] : memref<32x128xf32, #tpu.memory_space<vmem>>, vector<32x128xf32>
    %cst_349 = arith.constant dense<0.000000e+00> : vector<8x128xf32>
    %566 = tpu.matmul %529, %565, %cst_349 {dimension_numbers = #tpu.dot_dimension_numbers<[1], [0], [0], [1], [0, 0, 1, 1], [], []>} : vector<8x32xf32>, vector<32x128xf32>, vector<8x128xf32> -> vector<8x128xf32>
    %567 = arith.addf %564, %566 : vector<8x128xf32>
    %c0_350 = arith.constant 0 : index
    %c0_351 = arith.constant 0 : index
    %568 = vector.load %arg6[%c0_350, %c0_351] : memref<1x128xf32, #tpu.memory_space<vmem>>, vector<1x128xf32>
    %569 = vector.broadcast %568 : vector<1x128xf32> to vector<8x128xf32>
    %570 = arith.addf %567, %569 : vector<8x128xf32>
    %571 = vector.extract_strided_slice %570 {offsets = [0, 0], sizes = [8, 32], strides = [1, 1]} : vector<8x128xf32> to vector<8x32xf32>
    %572 = arith.negf %571 : vector<8x32xf32>
    %573 = math.exp %572 : vector<8x32xf32>
    %cst_352 = arith.constant 1.000000e+00 : f32
    %574 = vector.broadcast %cst_352 : f32 to vector<8x32xf32>
    %575 = arith.addf %574, %573 : vector<8x32xf32>
    %576 = arith.divf %574, %575 : vector<8x32xf32>
    %577 = vector.extract_strided_slice %570 {offsets = [0, 32], sizes = [8, 32], strides = [1, 1]} : vector<8x128xf32> to vector<8x32xf32>
    %578 = arith.negf %577 : vector<8x32xf32>
    %579 = math.exp %578 : vector<8x32xf32>
    %cst_353 = arith.constant 1.000000e+00 : f32
    %580 = vector.broadcast %cst_353 : f32 to vector<8x32xf32>
    %581 = arith.addf %580, %579 : vector<8x32xf32>
    %582 = arith.divf %580, %581 : vector<8x32xf32>
    %583 = vector.extract_strided_slice %570 {offsets = [0, 64], sizes = [8, 32], strides = [1, 1]} : vector<8x128xf32> to vector<8x32xf32>
    %584 = math.tanh %583 : vector<8x32xf32>
    %585 = vector.extract_strided_slice %570 {offsets = [0, 96], sizes = [8, 32], strides = [1, 1]} : vector<8x128xf32> to vector<8x32xf32>
    %586 = arith.negf %585 : vector<8x32xf32>
    %587 = math.exp %586 : vector<8x32xf32>
    %cst_354 = arith.constant 1.000000e+00 : f32
    %588 = vector.broadcast %cst_354 : f32 to vector<8x32xf32>
    %589 = arith.addf %588, %587 : vector<8x32xf32>
    %590 = arith.divf %588, %589 : vector<8x32xf32>
    %591 = arith.mulf %582, %527 : vector<8x32xf32>
    %592 = arith.mulf %576, %584 : vector<8x32xf32>
    %593 = arith.addf %591, %592 : vector<8x32xf32>
    %594 = math.tanh %593 : vector<8x32xf32>
    %595 = arith.mulf %590, %594 : vector<8x32xf32>
    %c0_355 = arith.constant 0 : index
    %c0_356 = arith.constant 0 : index
    %596 = vector.load %arg7[%c0_355, %c0_356] : memref<32x128xf32, #tpu.memory_space<vmem>>, vector<32x128xf32>
    %cst_357 = arith.constant dense<0.000000e+00> : vector<8x128xf32>
    %597 = tpu.matmul %595, %596, %cst_357 {dimension_numbers = #tpu.dot_dimension_numbers<[1], [0], [0], [1], [0, 0, 1, 1], [], []>} : vector<8x32xf32>, vector<32x128xf32>, vector<8x128xf32> -> vector<8x128xf32>
    %c0_358 = arith.constant 0 : index
    %c0_359 = arith.constant 0 : index
    %598 = vector.load %arg8[%c0_358, %c0_359] : memref<32x128xf32, #tpu.memory_space<vmem>>, vector<32x128xf32>
    %cst_360 = arith.constant dense<0.000000e+00> : vector<8x128xf32>
    %599 = tpu.matmul %562, %598, %cst_360 {dimension_numbers = #tpu.dot_dimension_numbers<[1], [0], [0], [1], [0, 0, 1, 1], [], []>} : vector<8x32xf32>, vector<32x128xf32>, vector<8x128xf32> -> vector<8x128xf32>
    %600 = arith.addf %597, %599 : vector<8x128xf32>
    %c0_361 = arith.constant 0 : index
    %c0_362 = arith.constant 0 : index
    %601 = vector.load %arg9[%c0_361, %c0_362] : memref<1x128xf32, #tpu.memory_space<vmem>>, vector<1x128xf32>
    %602 = vector.broadcast %601 : vector<1x128xf32> to vector<8x128xf32>
    %603 = arith.addf %600, %602 : vector<8x128xf32>
    %604 = vector.extract_strided_slice %603 {offsets = [0, 0], sizes = [8, 32], strides = [1, 1]} : vector<8x128xf32> to vector<8x32xf32>
    %605 = arith.negf %604 : vector<8x32xf32>
    %606 = math.exp %605 : vector<8x32xf32>
    %cst_363 = arith.constant 1.000000e+00 : f32
    %607 = vector.broadcast %cst_363 : f32 to vector<8x32xf32>
    %608 = arith.addf %607, %606 : vector<8x32xf32>
    %609 = arith.divf %607, %608 : vector<8x32xf32>
    %610 = vector.extract_strided_slice %603 {offsets = [0, 32], sizes = [8, 32], strides = [1, 1]} : vector<8x128xf32> to vector<8x32xf32>
    %611 = arith.negf %610 : vector<8x32xf32>
    %612 = math.exp %611 : vector<8x32xf32>
    %cst_364 = arith.constant 1.000000e+00 : f32
    %613 = vector.broadcast %cst_364 : f32 to vector<8x32xf32>
    %614 = arith.addf %613, %612 : vector<8x32xf32>
    %615 = arith.divf %613, %614 : vector<8x32xf32>
    %616 = vector.extract_strided_slice %603 {offsets = [0, 64], sizes = [8, 32], strides = [1, 1]} : vector<8x128xf32> to vector<8x32xf32>
    %617 = math.tanh %616 : vector<8x32xf32>
    %618 = vector.extract_strided_slice %603 {offsets = [0, 96], sizes = [8, 32], strides = [1, 1]} : vector<8x128xf32> to vector<8x32xf32>
    %619 = arith.negf %618 : vector<8x32xf32>
    %620 = math.exp %619 : vector<8x32xf32>
    %cst_365 = arith.constant 1.000000e+00 : f32
    %621 = vector.broadcast %cst_365 : f32 to vector<8x32xf32>
    %622 = arith.addf %621, %620 : vector<8x32xf32>
    %623 = arith.divf %621, %622 : vector<8x32xf32>
    %624 = arith.mulf %615, %560 : vector<8x32xf32>
    %625 = arith.mulf %609, %617 : vector<8x32xf32>
    %626 = arith.addf %624, %625 : vector<8x32xf32>
    %627 = math.tanh %626 : vector<8x32xf32>
    %628 = arith.mulf %623, %627 : vector<8x32xf32>
    %c40_366 = arith.constant 40 : index
    %c0_367 = arith.constant 0 : index
    %629 = vector.load %arg15[%c40_366, %c0_367] : memref<64x32xf32, #tpu.memory_space<vmem>>, vector<8x32xf32>
    tpu.vector_store %arg15[%c40_366, %c0_367], %628 {strides = array<i32>} : memref<64x32xf32, #tpu.memory_space<vmem>>, vector<8x32xf32>,
    %c48_368 = arith.constant 48 : index
    %c0_369 = arith.constant 0 : index
    %630 = vector.load %arg14[%c48_368, %c0_369] : memref<64x128xf32, #tpu.memory_space<vmem>>, vector<8x128xf32>
    %c0_370 = arith.constant 0 : index
    %c0_371 = arith.constant 0 : index
    %631 = vector.load %arg5[%c0_370, %c0_371] : memref<32x128xf32, #tpu.memory_space<vmem>>, vector<32x128xf32>
    %cst_372 = arith.constant dense<0.000000e+00> : vector<8x128xf32>
    %632 = tpu.matmul %595, %631, %cst_372 {dimension_numbers = #tpu.dot_dimension_numbers<[1], [0], [0], [1], [0, 0, 1, 1], [], []>} : vector<8x32xf32>, vector<32x128xf32>, vector<8x128xf32> -> vector<8x128xf32>
    %633 = arith.addf %630, %632 : vector<8x128xf32>
    %c0_373 = arith.constant 0 : index
    %c0_374 = arith.constant 0 : index
    %634 = vector.load %arg6[%c0_373, %c0_374] : memref<1x128xf32, #tpu.memory_space<vmem>>, vector<1x128xf32>
    %635 = vector.broadcast %634 : vector<1x128xf32> to vector<8x128xf32>
    %636 = arith.addf %633, %635 : vector<8x128xf32>
    %637 = vector.extract_strided_slice %636 {offsets = [0, 0], sizes = [8, 32], strides = [1, 1]} : vector<8x128xf32> to vector<8x32xf32>
    %638 = arith.negf %637 : vector<8x32xf32>
    %639 = math.exp %638 : vector<8x32xf32>
    %cst_375 = arith.constant 1.000000e+00 : f32
    %640 = vector.broadcast %cst_375 : f32 to vector<8x32xf32>
    %641 = arith.addf %640, %639 : vector<8x32xf32>
    %642 = arith.divf %640, %641 : vector<8x32xf32>
    %643 = vector.extract_strided_slice %636 {offsets = [0, 32], sizes = [8, 32], strides = [1, 1]} : vector<8x128xf32> to vector<8x32xf32>
    %644 = arith.negf %643 : vector<8x32xf32>
    %645 = math.exp %644 : vector<8x32xf32>
    %cst_376 = arith.constant 1.000000e+00 : f32
    %646 = vector.broadcast %cst_376 : f32 to vector<8x32xf32>
    %647 = arith.addf %646, %645 : vector<8x32xf32>
    %648 = arith.divf %646, %647 : vector<8x32xf32>
    %649 = vector.extract_strided_slice %636 {offsets = [0, 64], sizes = [8, 32], strides = [1, 1]} : vector<8x128xf32> to vector<8x32xf32>
    %650 = math.tanh %649 : vector<8x32xf32>
    %651 = vector.extract_strided_slice %636 {offsets = [0, 96], sizes = [8, 32], strides = [1, 1]} : vector<8x128xf32> to vector<8x32xf32>
    %652 = arith.negf %651 : vector<8x32xf32>
    %653 = math.exp %652 : vector<8x32xf32>
    %cst_377 = arith.constant 1.000000e+00 : f32
    %654 = vector.broadcast %cst_377 : f32 to vector<8x32xf32>
    %655 = arith.addf %654, %653 : vector<8x32xf32>
    %656 = arith.divf %654, %655 : vector<8x32xf32>
    %657 = arith.mulf %648, %593 : vector<8x32xf32>
    %658 = arith.mulf %642, %650 : vector<8x32xf32>
    %659 = arith.addf %657, %658 : vector<8x32xf32>
    %660 = math.tanh %659 : vector<8x32xf32>
    %661 = arith.mulf %656, %660 : vector<8x32xf32>
    %c0_378 = arith.constant 0 : index
    %c0_379 = arith.constant 0 : index
    %662 = vector.load %arg7[%c0_378, %c0_379] : memref<32x128xf32, #tpu.memory_space<vmem>>, vector<32x128xf32>
    %cst_380 = arith.constant dense<0.000000e+00> : vector<8x128xf32>
    %663 = tpu.matmul %661, %662, %cst_380 {dimension_numbers = #tpu.dot_dimension_numbers<[1], [0], [0], [1], [0, 0, 1, 1], [], []>} : vector<8x32xf32>, vector<32x128xf32>, vector<8x128xf32> -> vector<8x128xf32>
    %c0_381 = arith.constant 0 : index
    %c0_382 = arith.constant 0 : index
    %664 = vector.load %arg8[%c0_381, %c0_382] : memref<32x128xf32, #tpu.memory_space<vmem>>, vector<32x128xf32>
    %cst_383 = arith.constant dense<0.000000e+00> : vector<8x128xf32>
    %665 = tpu.matmul %628, %664, %cst_383 {dimension_numbers = #tpu.dot_dimension_numbers<[1], [0], [0], [1], [0, 0, 1, 1], [], []>} : vector<8x32xf32>, vector<32x128xf32>, vector<8x128xf32> -> vector<8x128xf32>
    %666 = arith.addf %663, %665 : vector<8x128xf32>
    %c0_384 = arith.constant 0 : index
    %c0_385 = arith.constant 0 : index
    %667 = vector.load %arg9[%c0_384, %c0_385] : memref<1x128xf32, #tpu.memory_space<vmem>>, vector<1x128xf32>
    %668 = vector.broadcast %667 : vector<1x128xf32> to vector<8x128xf32>
    %669 = arith.addf %666, %668 : vector<8x128xf32>
    %670 = vector.extract_strided_slice %669 {offsets = [0, 0], sizes = [8, 32], strides = [1, 1]} : vector<8x128xf32> to vector<8x32xf32>
    %671 = arith.negf %670 : vector<8x32xf32>
    %672 = math.exp %671 : vector<8x32xf32>
    %cst_386 = arith.constant 1.000000e+00 : f32
    %673 = vector.broadcast %cst_386 : f32 to vector<8x32xf32>
    %674 = arith.addf %673, %672 : vector<8x32xf32>
    %675 = arith.divf %673, %674 : vector<8x32xf32>
    %676 = vector.extract_strided_slice %669 {offsets = [0, 32], sizes = [8, 32], strides = [1, 1]} : vector<8x128xf32> to vector<8x32xf32>
    %677 = arith.negf %676 : vector<8x32xf32>
    %678 = math.exp %677 : vector<8x32xf32>
    %cst_387 = arith.constant 1.000000e+00 : f32
    %679 = vector.broadcast %cst_387 : f32 to vector<8x32xf32>
    %680 = arith.addf %679, %678 : vector<8x32xf32>
    %681 = arith.divf %679, %680 : vector<8x32xf32>
    %682 = vector.extract_strided_slice %669 {offsets = [0, 64], sizes = [8, 32], strides = [1, 1]} : vector<8x128xf32> to vector<8x32xf32>
    %683 = math.tanh %682 : vector<8x32xf32>
    %684 = vector.extract_strided_slice %669 {offsets = [0, 96], sizes = [8, 32], strides = [1, 1]} : vector<8x128xf32> to vector<8x32xf32>
    %685 = arith.negf %684 : vector<8x32xf32>
    %686 = math.exp %685 : vector<8x32xf32>
    %cst_388 = arith.constant 1.000000e+00 : f32
    %687 = vector.broadcast %cst_388 : f32 to vector<8x32xf32>
    %688 = arith.addf %687, %686 : vector<8x32xf32>
    %689 = arith.divf %687, %688 : vector<8x32xf32>
    %690 = arith.mulf %681, %626 : vector<8x32xf32>
    %691 = arith.mulf %675, %683 : vector<8x32xf32>
    %692 = arith.addf %690, %691 : vector<8x32xf32>
    %693 = math.tanh %692 : vector<8x32xf32>
    %694 = arith.mulf %689, %693 : vector<8x32xf32>
    %c48_389 = arith.constant 48 : index
    %c0_390 = arith.constant 0 : index
    %695 = vector.load %arg15[%c48_389, %c0_390] : memref<64x32xf32, #tpu.memory_space<vmem>>, vector<8x32xf32>
    tpu.vector_store %arg15[%c48_389, %c0_390], %694 {strides = array<i32>} : memref<64x32xf32, #tpu.memory_space<vmem>>, vector<8x32xf32>,
    %c56_391 = arith.constant 56 : index
    %c0_392 = arith.constant 0 : index
    %696 = vector.load %arg14[%c56_391, %c0_392] : memref<64x128xf32, #tpu.memory_space<vmem>>, vector<8x128xf32>
    %c0_393 = arith.constant 0 : index
    %c0_394 = arith.constant 0 : index
    %697 = vector.load %arg5[%c0_393, %c0_394] : memref<32x128xf32, #tpu.memory_space<vmem>>, vector<32x128xf32>
    %cst_395 = arith.constant dense<0.000000e+00> : vector<8x128xf32>
    %698 = tpu.matmul %661, %697, %cst_395 {dimension_numbers = #tpu.dot_dimension_numbers<[1], [0], [0], [1], [0, 0, 1, 1], [], []>} : vector<8x32xf32>, vector<32x128xf32>, vector<8x128xf32> -> vector<8x128xf32>
    %699 = arith.addf %696, %698 : vector<8x128xf32>
    %c0_396 = arith.constant 0 : index
    %c0_397 = arith.constant 0 : index
    %700 = vector.load %arg6[%c0_396, %c0_397] : memref<1x128xf32, #tpu.memory_space<vmem>>, vector<1x128xf32>
    %701 = vector.broadcast %700 : vector<1x128xf32> to vector<8x128xf32>
    %702 = arith.addf %699, %701 : vector<8x128xf32>
    %703 = vector.extract_strided_slice %702 {offsets = [0, 0], sizes = [8, 32], strides = [1, 1]} : vector<8x128xf32> to vector<8x32xf32>
    %704 = arith.negf %703 : vector<8x32xf32>
    %705 = math.exp %704 : vector<8x32xf32>
    %cst_398 = arith.constant 1.000000e+00 : f32
    %706 = vector.broadcast %cst_398 : f32 to vector<8x32xf32>
    %707 = arith.addf %706, %705 : vector<8x32xf32>
    %708 = arith.divf %706, %707 : vector<8x32xf32>
    %709 = vector.extract_strided_slice %702 {offsets = [0, 32], sizes = [8, 32], strides = [1, 1]} : vector<8x128xf32> to vector<8x32xf32>
    %710 = arith.negf %709 : vector<8x32xf32>
    %711 = math.exp %710 : vector<8x32xf32>
    %cst_399 = arith.constant 1.000000e+00 : f32
    %712 = vector.broadcast %cst_399 : f32 to vector<8x32xf32>
    %713 = arith.addf %712, %711 : vector<8x32xf32>
    %714 = arith.divf %712, %713 : vector<8x32xf32>
    %715 = vector.extract_strided_slice %702 {offsets = [0, 64], sizes = [8, 32], strides = [1, 1]} : vector<8x128xf32> to vector<8x32xf32>
    %716 = math.tanh %715 : vector<8x32xf32>
    %717 = vector.extract_strided_slice %702 {offsets = [0, 96], sizes = [8, 32], strides = [1, 1]} : vector<8x128xf32> to vector<8x32xf32>
    %718 = arith.negf %717 : vector<8x32xf32>
    %719 = math.exp %718 : vector<8x32xf32>
    %cst_400 = arith.constant 1.000000e+00 : f32
    %720 = vector.broadcast %cst_400 : f32 to vector<8x32xf32>
    %721 = arith.addf %720, %719 : vector<8x32xf32>
    %722 = arith.divf %720, %721 : vector<8x32xf32>
    %723 = arith.mulf %714, %659 : vector<8x32xf32>
    %724 = arith.mulf %708, %716 : vector<8x32xf32>
    %725 = arith.addf %723, %724 : vector<8x32xf32>
    %726 = math.tanh %725 : vector<8x32xf32>
    %727 = arith.mulf %722, %726 : vector<8x32xf32>
    %c0_401 = arith.constant 0 : index
    %c0_402 = arith.constant 0 : index
    %728 = vector.load %arg7[%c0_401, %c0_402] : memref<32x128xf32, #tpu.memory_space<vmem>>, vector<32x128xf32>
    %cst_403 = arith.constant dense<0.000000e+00> : vector<8x128xf32>
    %729 = tpu.matmul %727, %728, %cst_403 {dimension_numbers = #tpu.dot_dimension_numbers<[1], [0], [0], [1], [0, 0, 1, 1], [], []>} : vector<8x32xf32>, vector<32x128xf32>, vector<8x128xf32> -> vector<8x128xf32>
    %c0_404 = arith.constant 0 : index
    %c0_405 = arith.constant 0 : index
    %730 = vector.load %arg8[%c0_404, %c0_405] : memref<32x128xf32, #tpu.memory_space<vmem>>, vector<32x128xf32>
    %cst_406 = arith.constant dense<0.000000e+00> : vector<8x128xf32>
    %731 = tpu.matmul %694, %730, %cst_406 {dimension_numbers = #tpu.dot_dimension_numbers<[1], [0], [0], [1], [0, 0, 1, 1], [], []>} : vector<8x32xf32>, vector<32x128xf32>, vector<8x128xf32> -> vector<8x128xf32>
    %732 = arith.addf %729, %731 : vector<8x128xf32>
    %c0_407 = arith.constant 0 : index
    %c0_408 = arith.constant 0 : index
    %733 = vector.load %arg9[%c0_407, %c0_408] : memref<1x128xf32, #tpu.memory_space<vmem>>, vector<1x128xf32>
    %734 = vector.broadcast %733 : vector<1x128xf32> to vector<8x128xf32>
    %735 = arith.addf %732, %734 : vector<8x128xf32>
    %736 = vector.extract_strided_slice %735 {offsets = [0, 0], sizes = [8, 32], strides = [1, 1]} : vector<8x128xf32> to vector<8x32xf32>
    %737 = arith.negf %736 : vector<8x32xf32>
    %738 = math.exp %737 : vector<8x32xf32>
    %cst_409 = arith.constant 1.000000e+00 : f32
    %739 = vector.broadcast %cst_409 : f32 to vector<8x32xf32>
    %740 = arith.addf %739, %738 : vector<8x32xf32>
    %741 = arith.divf %739, %740 : vector<8x32xf32>
    %742 = vector.extract_strided_slice %735 {offsets = [0, 32], sizes = [8, 32], strides = [1, 1]} : vector<8x128xf32> to vector<8x32xf32>
    %743 = arith.negf %742 : vector<8x32xf32>
    %744 = math.exp %743 : vector<8x32xf32>
    %cst_410 = arith.constant 1.000000e+00 : f32
    %745 = vector.broadcast %cst_410 : f32 to vector<8x32xf32>
    %746 = arith.addf %745, %744 : vector<8x32xf32>
    %747 = arith.divf %745, %746 : vector<8x32xf32>
    %748 = vector.extract_strided_slice %735 {offsets = [0, 64], sizes = [8, 32], strides = [1, 1]} : vector<8x128xf32> to vector<8x32xf32>
    %749 = math.tanh %748 : vector<8x32xf32>
    %750 = vector.extract_strided_slice %735 {offsets = [0, 96], sizes = [8, 32], strides = [1, 1]} : vector<8x128xf32> to vector<8x32xf32>
    %751 = arith.negf %750 : vector<8x32xf32>
    %752 = math.exp %751 : vector<8x32xf32>
    %cst_411 = arith.constant 1.000000e+00 : f32
    %753 = vector.broadcast %cst_411 : f32 to vector<8x32xf32>
    %754 = arith.addf %753, %752 : vector<8x32xf32>
    %755 = arith.divf %753, %754 : vector<8x32xf32>
    %756 = arith.mulf %747, %692 : vector<8x32xf32>
    %757 = arith.mulf %741, %749 : vector<8x32xf32>
    %758 = arith.addf %756, %757 : vector<8x32xf32>
    %759 = math.tanh %758 : vector<8x32xf32>
    %760 = arith.mulf %755, %759 : vector<8x32xf32>
    %c56_412 = arith.constant 56 : index
    %c0_413 = arith.constant 0 : index
    %761 = vector.load %arg15[%c56_412, %c0_413] : memref<64x32xf32, #tpu.memory_space<vmem>>, vector<8x32xf32>
    tpu.vector_store %arg15[%c56_412, %c0_413], %760 {strides = array<i32>} : memref<64x32xf32, #tpu.memory_space<vmem>>, vector<8x32xf32>,
    %c0_414 = arith.constant 0 : index
    %c0_415 = arith.constant 0 : index
    %762 = vector.load %arg15[%c0_414, %c0_415] : memref<64x32xf32, #tpu.memory_space<vmem>>, vector<64x32xf32>
    %c0_416 = arith.constant 0 : index
    %c0_417 = arith.constant 0 : index
    %763 = vector.load %arg10[%c0_416, %c0_417] : memref<32x128xf32, #tpu.memory_space<vmem>>, vector<32x128xf32>
    %cst_418 = arith.constant dense<0.000000e+00> : vector<64x128xf32>
    %764 = tpu.matmul %762, %763, %cst_418 {dimension_numbers = #tpu.dot_dimension_numbers<[1], [0], [0], [1], [0, 0, 1, 1], [], []>} : vector<64x32xf32>, vector<32x128xf32>, vector<64x128xf32> -> vector<64x128xf32>
    %c0_419 = arith.constant 0 : index
    %c0_420 = arith.constant 0 : index
    %765 = vector.load %arg11[%c0_419, %c0_420] : memref<1x128xf32, #tpu.memory_space<vmem>>, vector<1x128xf32>
    %766 = vector.broadcast %765 : vector<1x128xf32> to vector<64x128xf32>
    %767 = arith.addf %764, %766 : vector<64x128xf32>
    %c0_421 = arith.constant 0 : index
    %c0_422 = arith.constant 0 : index
    %768 = vector.load %arg12[%c0_421, %c0_422] : memref<64x128xf32, #tpu.memory_space<vmem>>, vector<64x128xf32>
    tpu.vector_store %arg12[%c0_421, %c0_422], %767 {strides = array<i32>} : memref<64x128xf32, #tpu.memory_space<vmem>>, vector<64x128xf32>,
    return
  }
  func.func @transform_0(%arg0: i32, %arg1: memref<7x8xi32, #tpu.memory_space<smem>>) -> (i32, i32) {
    %c0_i32 = arith.constant 0 : i32
    %c0_i32_0 = arith.constant 0 : i32
    %c0_i32_1 = arith.constant 0 : i32
    return %c0_i32, %c0_i32_0 : i32, i32
  }
  func.func @transform_1(%arg0: i32, %arg1: memref<7x8xi32, #tpu.memory_space<smem>>) -> (i32, i32) {
    %c0_i32 = arith.constant 0 : i32
    %c0_i32_0 = arith.constant 0 : i32
    %c0_i32_1 = arith.constant 0 : i32
    return %c0_i32, %c0_i32_0 : i32, i32
  }
  func.func @transform_2(%arg0: i32, %arg1: memref<7x8xi32, #tpu.memory_space<smem>>) -> (i32, i32) {
    %c0_i32 = arith.constant 0 : i32
    %c0_i32_0 = arith.constant 0 : i32
    %c0_i32_1 = arith.constant 0 : i32
    return %c0_i32, %c0_i32_0 : i32, i32
  }
  func.func @transform_3(%arg0: i32, %arg1: memref<7x8xi32, #tpu.memory_space<smem>>) -> (i32, i32) {
    %c0_i32 = arith.constant 0 : i32
    %c0_i32_0 = arith.constant 0 : i32
    %c0_i32_1 = arith.constant 0 : i32
    return %c0_i32, %c0_i32_0 : i32, i32
  }
  func.func @transform_4(%arg0: i32, %arg1: memref<7x8xi32, #tpu.memory_space<smem>>) -> (i32, i32) {
    %c0_i32 = arith.constant 0 : i32
    %c0_i32_0 = arith.constant 0 : i32
    %c0_i32_1 = arith.constant 0 : i32
    return %c0_i32, %c0_i32_0 : i32, i32
  }
  func.func @transform_5(%arg0: i32, %arg1: memref<7x8xi32, #tpu.memory_space<smem>>) -> (i32, i32) {
    %c0_i32 = arith.constant 0 : i32
    %c0_i32_0 = arith.constant 0 : i32
    %c0_i32_1 = arith.constant 0 : i32
    return %c0_i32, %c0_i32_0 : i32, i32
  }
  func.func @transform_6(%arg0: i32, %arg1: memref<7x8xi32, #tpu.memory_space<smem>>) -> (i32, i32) {
    %c0_i32 = arith.constant 0 : i32
    %c0_i32_0 = arith.constant 0 : i32
    %c0_i32_1 = arith.constant 0 : i32
    return %c0_i32, %c0_i32_0 : i32, i32
  }
  func.func @transform_7(%arg0: i32, %arg1: memref<7x8xi32, #tpu.memory_space<smem>>) -> (i32, i32) {
    %c0_i32 = arith.constant 0 : i32
    %c0_i32_0 = arith.constant 0 : i32
    %c0_i32_1 = arith.constant 0 : i32
    return %c0_i32, %c0_i32_0 : i32, i32
  }
  func.func @transform_8(%arg0: i32, %arg1: memref<7x8xi32, #tpu.memory_space<smem>>) -> (i32, i32) {
    %c0_i32 = arith.constant 0 : i32
    %c0_i32_0 = arith.constant 0 : i32
    %c0_i32_1 = arith.constant 0 : i32
    return %c0_i32, %c0_i32_0 : i32, i32
  }
  func.func @transform_9(%arg0: i32, %arg1: memref<7x8xi32, #tpu.memory_space<smem>>) -> (i32, i32) {
    %c0_i32 = arith.constant 0 : i32
    %c0_i32_0 = arith.constant 0 : i32
    %c0_i32_1 = arith.constant 0 : i32
    return %c0_i32, %c0_i32_0 : i32, i32
  }
  func.func @transform_10(%arg0: i32, %arg1: memref<7x8xi32, #tpu.memory_space<smem>>) -> (i32, i32) {
    %c0_i32 = arith.constant 0 : i32
    %c0_i32_0 = arith.constant 0 : i32
    %c0_i32_1 = arith.constant 0 : i32
    return %c0_i32, %c0_i32_0 : i32, i32
  }
}

</mosaic_0001>

<llo_original>
// kernel: decoder_forward.1
$region0: #{decoder_forward.1}
  #allocation0 [shape = 'u32[]', space=smem, size = 0x4, offset = 0x4, fixed_abs, tag = 'smem constant byte address 0x4 - core index']
  #allocation1 [shape = 'u32[72,128]{1,0:T(1,128)}', space=vmem, size = 0x9000, scoped, tag = 'internal scratch']
  #allocation2 [shape = 'f32[64,32]{1,0:T(8,128)}', space=vmem, size = 0x8000, scoped, tag = 'scratch operand']
  #allocation3 [shape = 'f32[64,128]{1,0:T(8,128)}', space=vmem, size = 0x8000, scoped, tag = 'scratch operand']
  #allocation4 [shape = 'f32[64,32]{1,0:T(8,128)}', space=vmem, size = 0x8000, scoped, tag = 'scratch operand']
  #allocation5 [shape = 's32[1]{0}', space=sflag, size = 0x4, scoped, tag = 'scoped memory for decoder_forward.1']
  #allocation6 [shape = 'u8[4096]{0}', space=smem, size = 0x1000, scoped, tag = 'prefetched SMEM operand 0']
  %s0 = inlined_call_operand.vmem [shape: s32[7,8], index: 0, kind: input, shape index: {}]
  %s1 = inlined_call_operand.hbm [shape: f32[8,32], index: 1, kind: input, shape index: {}]
  %s2 = inlined_call_operand.vmem [shape: f32[128,32], index: 2, kind: input, shape index: {}]
  %s3 = inlined_call_operand.vmem [shape: f32[32,128], index: 3, kind: input, shape index: {}]
  %s4 = inlined_call_operand.vmem [shape: f32[32,128], index: 4, kind: input, shape index: {}]
  %s5 = inlined_call_operand.vmem [shape: f32[1,128], index: 5, kind: input, shape index: {}]
  %s6 = inlined_call_operand.vmem [shape: f32[32,128], index: 6, kind: input, shape index: {}]
  %s7 = inlined_call_operand.vmem [shape: f32[32,128], index: 7, kind: input, shape index: {}]
  %s8 = inlined_call_operand.hbm [shape: f32[1,128], index: 8, kind: input, shape index: {}]
  %s9 = inlined_call_operand.vmem [shape: f32[32,128], index: 9, kind: input, shape index: {}]
  %s10 = inlined_call_operand.hbm [shape: f32[1,128], index: 10, kind: input, shape index: {}]
  %s11 = inlined_call_operand.hbm [shape: f32[64,128], index: 11, kind: output, shape index: {}]
  %s12 = sld [smem:[#allocation0]]
  $region62: #{decoder_forward.1} parent=0
    _
  %s14 = ssub.s32 1, %s12
  %s15 = scalar_select 0, %s14, %s12
  %s17 = sshll.u32 %s0, 4
  %s18 = int_to_ptr.vmem [resolvable:$true] %s17
  %20 = dma.vmem_to_smem %s18, 128, [#allocation6], [#allocation5]
  %22 = dma.done [#allocation5], 128
  %23 = sfence
  $region1: #{decoder_forward.1} parent=0
    #allocation7 [shape = 'u8[4096]{0}', space=vmem, size = 0x1000, scoped, tag = 'input window, operand 1, single buffered']
    #allocation8 [shape = 's32[1]{0}', space=sflag, size = 0x4, scoped, tag = 'scoped memory for decoder_forward.1']
    #allocation9 [shape = 's32[1]{0}', space=sflag, size = 0x4, scoped, tag = 'scoped memory for decoder_forward.1']
    #allocation10 [shape = 'u8[512]{0}', space=vmem, size = 0x400, scoped, tag = 'input window, operand 8, single buffered']
    #allocation11 [shape = 's32[1]{0}', space=sflag, size = 0x4, scoped, tag = 'scoped memory for decoder_forward.1']
    #allocation12 [shape = 'u8[512]{0}', space=vmem, size = 0x400, scoped, tag = 'input window, operand 10, single buffered']
    #allocation13 [shape = 'u8[32768]{0}', space=vmem, size = 0x8000, scoped, tag = 'output window, operand 0, single buffered']
    %24 = vsyncpa [#allocation8], 0
    %25 = vsyncpa [#allocation11], 0
    %26 = vsyncpa [#allocation9], 0
    // Predicated region
    $region2: #{decoder_forward.1} parent=1 // pred_check
      _
    $region3: #{decoder_forward.1} parent=1 // pred_check_branch
      %28 = sbr.rel (0) target = $region5
    $region4: #{decoder_forward.1} parent=1 // pred_region
      %30 = vsyncadd [#allocation8], 0
      %s32 = sshll.u32 %s1, 4
      %s33 = int_to_ptr.hbm [resolvable:$true] %s32
      %s34 = sshll.u32 [#allocation7], 4
      %s35 = int_to_ptr.vmem [resolvable:$true] %s34
      %37 = dma.hbm_to_vmem [thread:$0]  %s33, 128, %s35, [#allocation8]
    $region5: #{decoder_forward.1} parent=1 // pred_fallthru
      _
    // Predicated region
    $region6: #{decoder_forward.1} parent=1 // pred_check
      _
    $region7: #{decoder_forward.1} parent=1 // pred_check_branch
      %39 = sbr.rel (0) target = $region9
    $region8: #{decoder_forward.1} parent=1 // pred_region
      _
    $region9: #{decoder_forward.1} parent=1 // pred_fallthru
      _
    // Predicated region
    $region10: #{decoder_forward.1} parent=1 // pred_check
      _
    $region11: #{decoder_forward.1} parent=1 // pred_check_branch
      %41 = sbr.rel (0) target = $region13
    $region12: #{decoder_forward.1} parent=1 // pred_region
      _
    $region13: #{decoder_forward.1} parent=1 // pred_fallthru
      _
    // Predicated region
    $region14: #{decoder_forward.1} parent=1 // pred_check
      _
    $region15: #{decoder_forward.1} parent=1 // pred_check_branch
      %43 = sbr.rel (0) target = $region17
    $region16: #{decoder_forward.1} parent=1 // pred_region
      _
    $region17: #{decoder_forward.1} parent=1 // pred_fallthru
      _
    // Predicated region
    $region18: #{decoder_forward.1} parent=1 // pred_check
      _
    $region19: #{decoder_forward.1} parent=1 // pred_check_branch
      %45 = sbr.rel (0) target = $region21
    $region20: #{decoder_forward.1} parent=1 // pred_region
      _
    $region21: #{decoder_forward.1} parent=1 // pred_fallthru
      _
    // Predicated region
    $region22: #{decoder_forward.1} parent=1 // pred_check
      _
    $region23: #{decoder_forward.1} parent=1 // pred_check_branch
      %47 = sbr.rel (0) target = $region25
    $region24: #{decoder_forward.1} parent=1 // pred_region
      _
    $region25: #{decoder_forward.1} parent=1 // pred_fallthru
      _
    // Predicated region
    $region26: #{decoder_forward.1} parent=1 // pred_check
      _
    $region27: #{decoder_forward.1} parent=1 // pred_check_branch
      %49 = sbr.rel (0) target = $region29
    $region28: #{decoder_forward.1} parent=1 // pred_region
      _
    $region29: #{decoder_forward.1} parent=1 // pred_fallthru
      _
    // Predicated region
    $region30: #{decoder_forward.1} parent=1 // pred_check
      _
    $region31: #{decoder_forward.1} parent=1 // pred_check_branch
      %51 = sbr.rel (0) target = $region33
    $region32: #{decoder_forward.1} parent=1 // pred_region
      %53 = vsyncadd [#allocation11], 0
      %s55 = sshll.u32 %s8, 4
      %s56 = int_to_ptr.hbm [resolvable:$true] %s55
      %s57 = sshll.u32 [#allocation10], 4
      %s58 = int_to_ptr.vmem [resolvable:$true] %s57
      %60 = dma.hbm_to_vmem [thread:$0]  %s56, 16, %s58, [#allocation11]
    $region33: #{decoder_forward.1} parent=1 // pred_fallthru
      _
    // Predicated region
    $region34: #{decoder_forward.1} parent=1 // pred_check
      _
    $region35: #{decoder_forward.1} parent=1 // pred_check_branch
      %62 = sbr.rel (0) target = $region37
    $region36: #{decoder_forward.1} parent=1 // pred_region
      _
    $region37: #{decoder_forward.1} parent=1 // pred_fallthru
      _
    // Predicated region
    $region38: #{decoder_forward.1} parent=1 // pred_check
      _
    $region39: #{decoder_forward.1} parent=1 // pred_check_branch
      %64 = sbr.rel (0) target = $region41
    $region40: #{decoder_forward.1} parent=1 // pred_region
      %66 = vsyncadd [#allocation11], 0
      %s68 = sshll.u32 %s10, 4
      %s69 = int_to_ptr.hbm [resolvable:$true] %s68
      %s70 = sshll.u32 [#allocation12], 4
      %s71 = int_to_ptr.vmem [resolvable:$true] %s70
      %73 = dma.hbm_to_vmem [thread:$0]  %s69, 16, %s71, [#allocation11]
    $region41: #{decoder_forward.1} parent=1 // pred_fallthru
      _
    // Predicated region
    $region42: #{decoder_forward.1} parent=1 // pred_check
      _
    $region43: #{decoder_forward.1} parent=1 // pred_check_branch
      %75 = sbr.rel (0) target = $region45
    $region44: #{decoder_forward.1} parent=1 // pred_region
      %77 = dma.done [#allocation8], 128
    $region45: #{decoder_forward.1} parent=1 // pred_fallthru
      _
    // Predicated region
    $region46: #{decoder_forward.1} parent=1 // pred_check
      _
    $region47: #{decoder_forward.1} parent=1 // pred_check_branch
      %79 = sbr.rel (0) target = $region49
    $region48: #{decoder_forward.1} parent=1 // pred_region
      %81 = dma.done [#allocation11], 16
    $region49: #{decoder_forward.1} parent=1 // pred_fallthru
      _
    // Predicated region
    $region50: #{decoder_forward.1} parent=1 // pred_check
      _
    $region51: #{decoder_forward.1} parent=1 // pred_check_branch
      %83 = sbr.rel (0) target = $region53
    $region52: #{decoder_forward.1} parent=1 // pred_region
      %85 = dma.done [#allocation11], 16
    $region53: #{decoder_forward.1} parent=1 // pred_fallthru
      _
    %v86 = vld [vmem:[#allocation7] sm:$0xff]
    %vm87 = vcmask 261120
    %88 = vst.msk [vmem:[#allocation2] sm:$0xff] %vm87, %v86
    %s89 = sld [smem:[#allocation6]]
    %s90 = scalar_lea.vmem %s2, %s89
    %v91 = vld [vmem:[%s90] sm:$0x1]
    %vm92 = vcmask 253952
    %93 = vst.msk [vmem:[#allocation2 + $0x8] sm:$0x1] %vm92, %v91
    %s94 = sld [smem:[#allocation6 + $0x1]]
    %s95 = scalar_lea.vmem %s2, %s94
    %v96 = vld [vmem:[%s95] sm:$0x1]
    %97 = vst.msk [vmem:[#allocation2 + $0x9] sm:$0x1] %vm92, %v96
    %s98 = sld [smem:[#allocation6 + $0x2]]
    %s99 = scalar_lea.vmem %s2, %s98
    %v100 = vld [vmem:[%s99] sm:$0x1]
    %101 = vst.msk [vmem:[#allocation2 + $0xa] sm:$0x1] %vm92, %v100
    %s102 = sld [smem:[#allocation6 + $0x3]]
    %s103 = scalar_lea.vmem %s2, %s102
    %v104 = vld [vmem:[%s103] sm:$0x1]
    %105 = vst.msk [vmem:[#allocation2 + $0xb] sm:$0x1] %vm92, %v104
    %s106 = sld [smem:[#allocation6 + $0x4]]
    %s107 = scalar_lea.vmem %s2, %s106
    %v108 = vld [vmem:[%s107] sm:$0x1]
    %109 = vst.msk [vmem:[#allocation2 + $0xc] sm:$0x1] %vm92, %v108
    %s110 = sld [smem:[#allocation6 + $0x5]]
    %s111 = scalar_lea.vmem %s2, %s110
    %v112 = vld [vmem:[%s111] sm:$0x1]
    %113 = vst.msk [vmem:[#allocation2 + $0xd] sm:$0x1] %vm92, %v112
    %s114 = sld [smem:[#allocation6 + $0x6]]
    %s115 = scalar_lea.vmem %s2, %s114
    %v116 = vld [vmem:[%s115] sm:$0x1]
    %117 = vst.msk [vmem:[#allocation2 + $0xe] sm:$0x1] %vm92, %v116
    %s118 = sld [smem:[#allocation6 + $0x7]]
    %s119 = scalar_lea.vmem %s2, %s118
    %v120 = vld [vmem:[%s119] sm:$0x1]
    %121 = vst.msk [vmem:[#allocation2 + $0xf] sm:$0x1] %vm92, %v120
    %s122 = sld [smem:[#allocation6 + $0x80]]
    %s123 = scalar_lea.vmem %s2, %s122
    %v124 = vld [vmem:[%s123] sm:$0x1]
    %125 = vst.msk [vmem:[#allocation2 + $0x10] sm:$0x1] %vm92, %v124
    %s126 = sld [smem:[#allocation6 + $0x81]]
    %s127 = scalar_lea.vmem %s2, %s126
    %v128 = vld [vmem:[%s127] sm:$0x1]
    %129 = vst.msk [vmem:[#allocation2 + $0x11] sm:$0x1] %vm92, %v128
    %s130 = sld [smem:[#allocation6 + $0x82]]
    %s131 = scalar_lea.vmem %s2, %s130
    %v132 = vld [vmem:[%s131] sm:$0x1]
    %133 = vst.msk [vmem:[#allocation2 + $0x12] sm:$0x1] %vm92, %v132
    %s134 = sld [smem:[#allocation6 + $0x83]]
    %s135 = scalar_lea.vmem %s2, %s134
    %v136 = vld [vmem:[%s135] sm:$0x1]
    %137 = vst.msk [vmem:[#allocation2 + $0x13] sm:$0x1] %vm92, %v136
    %s138 = sld [smem:[#allocation6 + $0x84]]
    %s139 = scalar_lea.vmem %s2, %s138
    %v140 = vld [vmem:[%s139] sm:$0x1]
    %141 = vst.msk [vmem:[#allocation2 + $0x14] sm:$0x1] %vm92, %v140
    %s142 = sld [smem:[#allocation6 + $0x85]]
    %s143 = scalar_lea.vmem %s2, %s142
    %v144 = vld [vmem:[%s143] sm:$0x1]
    %145 = vst.msk [vmem:[#allocation2 + $0x15] sm:$0x1] %vm92, %v144
    %s146 = sld [smem:[#allocation6 + $0x86]]
    %s147 = scalar_lea.vmem %s2, %s146
    %v148 = vld [vmem:[%s147] sm:$0x1]
    %149 = vst.msk [vmem:[#allocation2 + $0x16] sm:$0x1] %vm92, %v148
    %s150 = sld [smem:[#allocation6 + $0x87]]
    %s151 = scalar_lea.vmem %s2, %s150
    %v152 = vld [vmem:[%s151] sm:$0x1]
    %153 = vst.msk [vmem:[#allocation2 + $0x17] sm:$0x1] %vm92, %v152
    %s154 = sld [smem:[#allocation6 + $0x100]]
    %s155 = scalar_lea.vmem %s2, %s154
    %v156 = vld [vmem:[%s155] sm:$0x1]
    %157 = vst.msk [vmem:[#allocation2 + $0x18] sm:$0x1] %vm92, %v156
    %s158 = sld [smem:[#allocation6 + $0x101]]
    %s159 = scalar_lea.vmem %s2, %s158
    %v160 = vld [vmem:[%s159] sm:$0x1]
    %161 = vst.msk [vmem:[#allocation2 + $0x19] sm:$0x1] %vm92, %v160
    %s162 = sld [smem:[#allocation6 + $0x102]]
    %s163 = scalar_lea.vmem %s2, %s162
    %v164 = vld [vmem:[%s163] sm:$0x1]
    %165 = vst.msk [vmem:[#allocation2 + $0x1a] sm:$0x1] %vm92, %v164
    %s166 = sld [smem:[#allocation6 + $0x103]]
    %s167 = scalar_lea.vmem %s2, %s166
    %v168 = vld [vmem:[%s167] sm:$0x1]
    %169 = vst.msk [vmem:[#allocation2 + $0x1b] sm:$0x1] %vm92, %v168
    %s170 = sld [smem:[#allocation6 + $0x104]]
    %s171 = scalar_lea.vmem %s2, %s170
    %v172 = vld [vmem:[%s171] sm:$0x1]
    %173 = vst.msk [vmem:[#allocation2 + $0x1c] sm:$0x1] %vm92, %v172
    %s174 = sld [smem:[#allocation6 + $0x105]]
    %s175 = scalar_lea.vmem %s2, %s174
    %v176 = vld [vmem:[%s175] sm:$0x1]
    %177 = vst.msk [vmem:[#allocation2 + $0x1d] sm:$0x1] %vm92, %v176
    %s178 = sld [smem:[#allocation6 + $0x106]]
    %s179 = scalar_lea.vmem %s2, %s178
    %v180 = vld [vmem:[%s179] sm:$0x1]
    %181 = vst.msk [vmem:[#allocation2 + $0x1e] sm:$0x1] %vm92, %v180
    %s182 = sld [smem:[#allocation6 + $0x107]]
    %s183 = scalar_lea.vmem %s2, %s182
    %v184 = vld [vmem:[%s183] sm:$0x1]
    %185 = vst.msk [vmem:[#allocation2 + $0x1f] sm:$0x1] %vm92, %v184
    %s186 = sld [smem:[#allocation6 + $0x180]]
    %s187 = scalar_lea.vmem %s2, %s186
    %v188 = vld [vmem:[%s187] sm:$0x1]
    %189 = vst.msk [vmem:[#allocation2 + $0x20] sm:$0x1] %vm92, %v188
    %s190 = sld [smem:[#allocation6 + $0x181]]
    %s191 = scalar_lea.vmem %s2, %s190
    %v192 = vld [vmem:[%s191] sm:$0x1]
    %193 = vst.msk [vmem:[#allocation2 + $0x21] sm:$0x1] %vm92, %v192
    %s194 = sld [smem:[#allocation6 + $0x182]]
    %s195 = scalar_lea.vmem %s2, %s194
    %v196 = vld [vmem:[%s195] sm:$0x1]
    %197 = vst.msk [vmem:[#allocation2 + $0x22] sm:$0x1] %vm92, %v196
    %s198 = sld [smem:[#allocation6 + $0x183]]
    %s199 = scalar_lea.vmem %s2, %s198
    %v200 = vld [vmem:[%s199] sm:$0x1]
    %201 = vst.msk [vmem:[#allocation2 + $0x23] sm:$0x1] %vm92, %v200
    %s202 = sld [smem:[#allocation6 + $0x184]]
    %s203 = scalar_lea.vmem %s2, %s202
    %v204 = vld [vmem:[%s203] sm:$0x1]
    %205 = vst.msk [vmem:[#allocation2 + $0x24] sm:$0x1] %vm92, %v204
    %s206 = sld [smem:[#allocation6 + $0x185]]
    %s207 = scalar_lea.vmem %s2, %s206
    %v208 = vld [vmem:[%s207] sm:$0x1]
    %209 = vst.msk [vmem:[#allocation2 + $0x25] sm:$0x1] %vm92, %v208
    %s210 = sld [smem:[#allocation6 + $0x186]]
    %s211 = scalar_lea.vmem %s2, %s210
    %v212 = vld [vmem:[%s211] sm:$0x1]
    %213 = vst.msk [vmem:[#allocation2 + $0x26] sm:$0x1] %vm92, %v212
    %s214 = sld [smem:[#allocation6 + $0x187]]
    %s215 = scalar_lea.vmem %s2, %s214
    %v216 = vld [vmem:[%s215] sm:$0x1]
    %217 = vst.msk [vmem:[#allocation2 + $0x27] sm:$0x1] %vm92, %v216
    %s218 = sld [smem:[#allocation6 + $0x200]]
    %s219 = scalar_lea.vmem %s2, %s218
    %v220 = vld [vmem:[%s219] sm:$0x1]
    %221 = vst.msk [vmem:[#allocation2 + $0x28] sm:$0x1] %vm92, %v220
    %s222 = sld [smem:[#allocation6 + $0x201]]
    %s223 = scalar_lea.vmem %s2, %s222
    %v224 = vld [vmem:[%s223] sm:$0x1]
    %225 = vst.msk [vmem:[#allocation2 + $0x29] sm:$0x1] %vm92, %v224
    %s226 = sld [smem:[#allocation6 + $0x202]]
    %s227 = scalar_lea.vmem %s2, %s226
    %v228 = vld [vmem:[%s227] sm:$0x1]
    %229 = vst.msk [vmem:[#allocation2 + $0x2a] sm:$0x1] %vm92, %v228
    %s230 = sld [smem:[#allocation6 + $0x203]]
    %s231 = scalar_lea.vmem %s2, %s230
    %v232 = vld [vmem:[%s231] sm:$0x1]
    %233 = vst.msk [vmem:[#allocation2 + $0x2b] sm:$0x1] %vm92, %v232
    %s234 = sld [smem:[#allocation6 + $0x204]]
    %s235 = scalar_lea.vmem %s2, %s234
    %v236 = vld [vmem:[%s235] sm:$0x1]
    %237 = vst.msk [vmem:[#allocation2 + $0x2c] sm:$0x1] %vm92, %v236
    %s238 = sld [smem:[#allocation6 + $0x205]]
    %s239 = scalar_lea.vmem %s2, %s238
    %v240 = vld [vmem:[%s239] sm:$0x1]
    %241 = vst.msk [vmem:[#allocation2 + $0x2d] sm:$0x1] %vm92, %v240
    %s242 = sld [smem:[#allocation6 + $0x206]]
    %s243 = scalar_lea.vmem %s2, %s242
    %v244 = vld [vmem:[%s243] sm:$0x1]
    %245 = vst.msk [vmem:[#allocation2 + $0x2e] sm:$0x1] %vm92, %v244
    %s246 = sld [smem:[#allocation6 + $0x207]]
    %s247 = scalar_lea.vmem %s2, %s246
    %v248 = vld [vmem:[%s247] sm:$0x1]
    %249 = vst.msk [vmem:[#allocation2 + $0x2f] sm:$0x1] %vm92, %v248
    %s250 = sld [smem:[#allocation6 + $0x280]]
    %s251 = scalar_lea.vmem %s2, %s250
    %v252 = vld [vmem:[%s251] sm:$0x1]
    %253 = vst.msk [vmem:[#allocation2 + $0x30] sm:$0x1] %vm92, %v252
    %s254 = sld [smem:[#allocation6 + $0x281]]
    %s255 = scalar_lea.vmem %s2, %s254
    %v256 = vld [vmem:[%s255] sm:$0x1]
    %257 = vst.msk [vmem:[#allocation2 + $0x31] sm:$0x1] %vm92, %v256
    %s258 = sld [smem:[#allocation6 + $0x282]]
    %s259 = scalar_lea.vmem %s2, %s258
    %v260 = vld [vmem:[%s259] sm:$0x1]
    %261 = vst.msk [vmem:[#allocation2 + $0x32] sm:$0x1] %vm92, %v260
    %s262 = sld [smem:[#allocation6 + $0x283]]
    %s263 = scalar_lea.vmem %s2, %s262
    %v264 = vld [vmem:[%s263] sm:$0x1]
    %265 = vst.msk [vmem:[#allocation2 + $0x33] sm:$0x1] %vm92, %v264
    %s266 = sld [smem:[#allocation6 + $0x284]]
    %s267 = scalar_lea.vmem %s2, %s266
    %v268 = vld [vmem:[%s267] sm:$0x1]
    %269 = vst.msk [vmem:[#allocation2 + $0x34] sm:$0x1] %vm92, %v268
    %s270 = sld [smem:[#allocation6 + $0x285]]
    %s271 = scalar_lea.vmem %s2, %s270
    %v272 = vld [vmem:[%s271] sm:$0x1]
    %273 = vst.msk [vmem:[#allocation2 + $0x35] sm:$0x1] %vm92, %v272
    %s274 = sld [smem:[#allocation6 + $0x286]]
    %s275 = scalar_lea.vmem %s2, %s274
    %v276 = vld [vmem:[%s275] sm:$0x1]
    %277 = vst.msk [vmem:[#allocation2 + $0x36] sm:$0x1] %vm92, %v276
    %s278 = sld [smem:[#allocation6 + $0x287]]
    %s279 = scalar_lea.vmem %s2, %s278
    %v280 = vld [vmem:[%s279] sm:$0x1]
    %281 = vst.msk [vmem:[#allocation2 + $0x37] sm:$0x1] %vm92, %v280
    %s282 = sld [smem:[#allocation6 + $0x300]]
    %s283 = scalar_lea.vmem %s2, %s282
    %v284 = vld [vmem:[%s283] sm:$0x1]
    %285 = vst.msk [vmem:[#allocation2 + $0x38] sm:$0x1] %vm92, %v284
    %s286 = sld [smem:[#allocation6 + $0x301]]
    %s287 = scalar_lea.vmem %s2, %s286
    %v288 = vld [vmem:[%s287] sm:$0x1]
    %289 = vst.msk [vmem:[#allocation2 + $0x39] sm:$0x1] %vm92, %v288
    %s290 = sld [smem:[#allocation6 + $0x302]]
    %s291 = scalar_lea.vmem %s2, %s290
    %v292 = vld [vmem:[%s291] sm:$0x1]
    %293 = vst.msk [vmem:[#allocation2 + $0x3a] sm:$0x1] %vm92, %v292
    %s294 = sld [smem:[#allocation6 + $0x303]]
    %s295 = scalar_lea.vmem %s2, %s294
    %v296 = vld [vmem:[%s295] sm:$0x1]
    %297 = vst.msk [vmem:[#allocation2 + $0x3b] sm:$0x1] %vm92, %v296
    %s298 = sld [smem:[#allocation6 + $0x304]]
    %s299 = scalar_lea.vmem %s2, %s298
    %v300 = vld [vmem:[%s299] sm:$0x1]
    %301 = vst.msk [vmem:[#allocation2 + $0x3c] sm:$0x1] %vm92, %v300
    %s302 = sld [smem:[#allocation6 + $0x305]]
    %s303 = scalar_lea.vmem %s2, %s302
    %v304 = vld [vmem:[%s303] sm:$0x1]
    %305 = vst.msk [vmem:[#allocation2 + $0x3d] sm:$0x1] %vm92, %v304
    %s306 = sld [smem:[#allocation6 + $0x306]]
    %s307 = scalar_lea.vmem %s2, %s306
    %v308 = vld [vmem:[%s307] sm:$0x1]
    %309 = vst.msk [vmem:[#allocation2 + $0x3e] sm:$0x1] %vm92, %v308
    %s310 = sld [smem:[#allocation6 + $0x307]]
    %s311 = scalar_lea.vmem %s2, %s310
    %v312 = vld [vmem:[%s311] sm:$0x1]
    %313 = vst.msk [vmem:[#allocation2 + $0x3f] sm:$0x1] %vm92, %v312
    %v314 = vld [vmem:[#allocation2] sm:$0xff]
    %v315 = vld [vmem:[#allocation2 + $0x8] sm:$0xff]
    %v316 = vld [vmem:[#allocation2 + $0x10] sm:$0xff]
    %v317 = vld [vmem:[#allocation2 + $0x18] sm:$0xff]
    %v318 = vld [vmem:[#allocation2 + $0x20] sm:$0xff]
    %v319 = vld [vmem:[#allocation2 + $0x28] sm:$0xff]
    %v320 = vld [vmem:[#allocation2 + $0x30] sm:$0xff]
    %v321 = vld [vmem:[#allocation2 + $0x38] sm:$0xff]
    %v322 = vld [vmem:[%s3] sm:$0xff]
    %v323 = vld [vmem:[%s3 + $0x8] sm:$0xff]
    %v324 = vld [vmem:[%s3 + $0x10] sm:$0xff]
    %v325 = vld [vmem:[%s3 + $0x18] sm:$0xff]
    %v327 = vsel %vm87, %v314, 0
    %v330 = vsel %vm87, %v315, 0
    %v333 = vsel %vm87, %v316, 0
    %v336 = vsel %vm87, %v317, 0
    %v339 = vsel %vm87, %v318, 0
    %v342 = vsel %vm87, %v319, 0
    %v345 = vsel %vm87, %v320, 0
    %v348 = vsel %vm87, %v321, 0
    %350 = vmatpush.msra.mxu0 0.0
    %351 = vmatpush.msra.mxu0 0.0
    %352 = vmatpush.msra.mxu0 0.0
    %353 = vmatpush.msra.mxu0 0.0
    %354 = vmatpush.msra.mxu0 0.0
    %355 = vmatpush.msra.mxu0 0.0
    %356 = vmatpush.msra.mxu0 0.0
    %357 = vmatpush.msra.mxu0 0.0
    %358 = vmatpush.msra.mxu0 0.0
    %359 = vmatpush.msra.mxu0 0.0
    %360 = vmatpush.msra.mxu0 0.0
    %361 = vmatpush.msra.mxu0 0.0
    %362 = vmatpush.msra.mxu0 %v325
    %363 = vmatpush.msra.mxu0 %v324
    %364 = vmatpush.msra.mxu0 %v323
    %365 = vmatpush.msra.mxu0 %v322
    %366 = vmatmul.f32.gmra.mxu0 %v327
    %v367 = vpop.f32.mrf.mxu0
    %v368 = vadd.f32 0.0, %v367
    %369 = vmatmul.f32.gmra.mxu0 %v330
    %v370 = vpop.f32.mrf.mxu0
    %v371 = vadd.f32 0.0, %v370
    %372 = vmatmul.f32.gmra.mxu0 %v333
    %v373 = vpop.f32.mrf.mxu0
    %v374 = vadd.f32 0.0, %v373
    %375 = vmatmul.f32.gmra.mxu0 %v336
    %v376 = vpop.f32.mrf.mxu0
    %v377 = vadd.f32 0.0, %v376
    %378 = vmatmul.f32.gmra.mxu0 %v339
    %v379 = vpop.f32.mrf.mxu0
    %v380 = vadd.f32 0.0, %v379
    %381 = vmatmul.f32.gmra.mxu0 %v342
    %v382 = vpop.f32.mrf.mxu0
    %v383 = vadd.f32 0.0, %v382
    %384 = vmatmul.f32.gmra.mxu0 %v345
    %v385 = vpop.f32.mrf.mxu0
    %v386 = vadd.f32 0.0, %v385
    %387 = vmatmul.f32.gmra.mxu0 %v348
    %v388 = vpop.f32.mrf.mxu0
    %v389 = vadd.f32 0.0, %v388
    %390 = vdwg.mxu0
    %391 = vst [vmem:[#allocation3] sm:$0xff] %v368
    %392 = vst [vmem:[#allocation3 + $0x8] sm:$0xff] %v371
    %393 = vst [vmem:[#allocation3 + $0x10] sm:$0xff] %v374
    %394 = vst [vmem:[#allocation3 + $0x18] sm:$0xff] %v377
    %395 = vst [vmem:[#allocation3 + $0x20] sm:$0xff] %v380
    %396 = vst [vmem:[#allocation3 + $0x28] sm:$0xff] %v383
    %397 = vst [vmem:[#allocation3 + $0x30] sm:$0xff] %v386
    %398 = vst [vmem:[#allocation3 + $0x38] sm:$0xff] %v389
    %v399 = vld [vmem:[#allocation3] sm:$0xff]
    %v400 = vld [vmem:[%s4] sm:$0xff]
    %v401 = vld [vmem:[%s4 + $0x8] sm:$0xff]
    %v402 = vld [vmem:[%s4 + $0x10] sm:$0xff]
    %v403 = vld [vmem:[%s4 + $0x18] sm:$0xff]
    %v405 = vsel %vm87, 0.0, 0
    %407 = vmatpush.msra.mxu0 0.0
    %408 = vmatpush.msra.mxu0 0.0
    %409 = vmatpush.msra.mxu0 0.0
    %410 = vmatpush.msra.mxu0 0.0
    %411 = vmatpush.msra.mxu0 0.0
    %412 = vmatpush.msra.mxu0 0.0
    %413 = vmatpush.msra.mxu0 0.0
    %414 = vmatpush.msra.mxu0 0.0
    %415 = vmatpush.msra.mxu0 0.0
    %416 = vmatpush.msra.mxu0 0.0
    %417 = vmatpush.msra.mxu0 0.0
    %418 = vmatpush.msra.mxu0 0.0
    %419 = vmatpush.msra.mxu0 %v403
    %420 = vmatpush.msra.mxu0 %v402
    %421 = vmatpush.msra.mxu0 %v401
    %422 = vmatpush.msra.mxu0 %v400
    %423 = vmatmul.f32.gmra.mxu0 %v405
    %v424 = vpop.f32.mrf.mxu0
    %v425 = vadd.f32 0.0, %v424
    %426 = vdwg.mxu0
    %v427 = vadd.f32 %v399, %v425
    %v428 = vld [vmem:[%s5] sm:$0x1]
    %v430 = vperm.slane %v428, 0
    %v432 = vadd.f32 %v427, %v430
    %v433 = vxor.u32 %v432, 2147483648
    %v434 = vmul.f32 %v433, 1.442695
    %v435 = vpow.pop %v434
    %v436 = vadd.f32 %v435, 1.0
    %v437 = vrcp.pop %v436
    %v438 = vmul.f32 %v436, %v437
    %v439 = vsub.f32 1.0, %v438
    %v440 = vmul.f32 %v437, %v439
    %v441 = vadd.f32 %v437, %v440
    %vm442 = vweird.f32 %v436
    %vm443 = vweird.f32 %v437
    %vm444 = vmor %vm442, %vm443
    %v445 = vsel %vm444, %v437, %v441
    %v446 = vand.u32 2147483647, %v436
    %vm447 = vcmp.eq.f32.partialorder %v446, 8.507059e+37
    %v448 = vand.u32 %v436, 2147483648
    %v449 = vor.u32 1.1754944e-38, %v448
    %v450 = vsel %vm447, %v449, %v445
    %v451 = vmul.f32 1.0, %v450
    %v452 = vtanh.pop %v432
    %v453 = vmul.f32 %v451, 0.0
    %455 = vrot.lane.b32.xlu0 %v452, 64
    %v456 = vpop.permute.xlu0 %455
    %v458 = vmul.f32 %v451, %v456
    %460 = vrot.lane.b32.xlu0 %v458, 32
    %v461 = vpop.permute.xlu0 %460
    %v463 = vadd.f32 %v453, %v461
    %v464 = vtanh.pop %v463
    %466 = vrot.lane.b32.xlu0 %v464, 64
    %v467 = vpop.permute.xlu0 %466
    %v469 = vmul.f32 %v451, %v467
    %v470 = vld [vmem:[%s6] sm:$0xff]
    %v471 = vld [vmem:[%s6 + $0x8] sm:$0xff]
    %v472 = vld [vmem:[%s6 + $0x10] sm:$0xff]
    %v473 = vld [vmem:[%s6 + $0x18] sm:$0xff]
    %v474 = vld [vmem:[%s7] sm:$0xff]
    %v475 = vld [vmem:[%s7 + $0x8] sm:$0xff]
    %v476 = vld [vmem:[%s7 + $0x10] sm:$0xff]
    %v477 = vld [vmem:[%s7 + $0x18] sm:$0xff]
    %478 = vmatpush.msra.mxu0 0.0
    %479 = vmatpush.msra.mxu0 0.0
    %480 = vmatpush.msra.mxu0 0.0
    %481 = vmatpush.msra.mxu0 0.0
    %482 = vmatpush.msra.mxu0 0.0
    %483 = vmatpush.msra.mxu0 0.0
    %484 = vmatpush.msra.mxu0 0.0
    %485 = vmatpush.msra.mxu0 0.0
    %486 = vmatpush.msra.mxu0 0.0
    %487 = vmatpush.msra.mxu0 0.0
    %488 = vmatpush.msra.mxu0 0.0
    %489 = vmatpush.msra.mxu0 0.0
    %490 = vmatpush.msra.mxu0 %v477
    %491 = vmatpush.msra.mxu0 %v476
    %492 = vmatpush.msra.mxu0 %v475
    %493 = vmatpush.msra.mxu0 %v474
    %494 = vmatmul.f32.gmra.mxu0 %v405
    %v495 = vpop.f32.mrf.mxu0
    %v496 = vadd.f32 0.0, %v495
    %497 = vdwg.mxu0
    %499 = vrot.lane.b32.xlu0 %v469, 32
    %v500 = vpop.permute.xlu0 %499
    %v501 = vsel %vm87, %v500, 0
    %503 = vmatpush.msra.mxu0 0.0
    %504 = vmatpush.msra.mxu0 0.0
    %505 = vmatpush.msra.mxu0 0.0
    %506 = vmatpush.msra.mxu0 0.0
    %507 = vmatpush.msra.mxu0 0.0
    %508 = vmatpush.msra.mxu0 0.0
    %509 = vmatpush.msra.mxu0 0.0
    %510 = vmatpush.msra.mxu0 0.0
    %511 = vmatpush.msra.mxu0 0.0
    %512 = vmatpush.msra.mxu0 0.0
    %513 = vmatpush.msra.mxu0 0.0
    %514 = vmatpush.msra.mxu0 0.0
    %515 = vmatpush.msra.mxu0 %v473
    %516 = vmatpush.msra.mxu0 %v472
    %517 = vmatpush.msra.mxu0 %v471
    %518 = vmatpush.msra.mxu0 %v470
    %519 = vmatmul.f32.gmra.mxu0 %v501
    %v520 = vpop.f32.mrf.mxu0
    %v521 = vadd.f32 %v496, %v520
    %522 = vdwg.mxu0
    %v523 = vld [vmem:[#allocation10] sm:$0x1]
    %v525 = vperm.slane %v523, 0
    %v527 = vadd.f32 %v521, %v525
    %v528 = vxor.u32 %v527, 2147483648
    %v529 = vmul.f32 %v528, 1.442695
    %v530 = vpow.pop %v529
    %v531 = vadd.f32 %v530, 1.0
    %v532 = vrcp.pop %v531
    %v533 = vmul.f32 %v531, %v532
    %v534 = vsub.f32 1.0, %v533
    %v535 = vmul.f32 %v532, %v534
    %v536 = vadd.f32 %v532, %v535
    %vm537 = vweird.f32 %v531
    %vm538 = vweird.f32 %v532
    %vm539 = vmor %vm537, %vm538
    %v540 = vsel %vm539, %v532, %v536
    %v541 = vand.u32 2147483647, %v531
    %vm542 = vcmp.eq.f32.partialorder %v541, 8.507059e+37
    %v543 = vand.u32 %v531, 2147483648
    %v544 = vor.u32 1.1754944e-38, %v543
    %v545 = vsel %vm542, %v544, %v540
    %v546 = vmul.f32 1.0, %v545
    %v547 = vtanh.pop %v527
    %v548 = vmul.f32 %v546, 0.0
    %550 = vrot.lane.b32.xlu0 %v547, 64
    %v551 = vpop.permute.xlu0 %550
    %v553 = vmul.f32 %v546, %v551
    %555 = vrot.lane.b32.xlu0 %v553, 32
    %v556 = vpop.permute.xlu0 %555
    %v558 = vadd.f32 %v548, %v556
    %v559 = vtanh.pop %v558
    %561 = vrot.lane.b32.xlu0 %v559, 64
    %v562 = vpop.permute.xlu0 %561
    %v564 = vmul.f32 %v546, %v562
    %566 = vrot.lane.b32.xlu0 %v564, 32
    %v567 = vpop.permute.xlu0 %566
    %569 = vst.msk [vmem:[#allocation4] sm:$0xff] %vm87, %v567
    %v570 = vld [vmem:[#allocation3 + $0x8] sm:$0xff]
    %v571 = vld [vmem:[%s4] sm:$0xff]
    %v572 = vld [vmem:[%s4 + $0x8] sm:$0xff]
    %v573 = vld [vmem:[%s4 + $0x10] sm:$0xff]
    %v574 = vld [vmem:[%s4 + $0x18] sm:$0xff]
    %575 = vmatpush.msra.mxu0 0.0
    %576 = vmatpush.msra.mxu0 0.0
    %577 = vmatpush.msra.mxu0 0.0
    %578 = vmatpush.msra.mxu0 0.0
    %579 = vmatpush.msra.mxu0 0.0
    %580 = vmatpush.msra.mxu0 0.0
    %581 = vmatpush.msra.mxu0 0.0
    %582 = vmatpush.msra.mxu0 0.0
    %583 = vmatpush.msra.mxu0 0.0
    %584 = vmatpush.msra.mxu0 0.0
    %585 = vmatpush.msra.mxu0 0.0
    %586 = vmatpush.msra.mxu0 0.0
    %587 = vmatpush.msra.mxu0 %v574
    %588 = vmatpush.msra.mxu0 %v573
    %589 = vmatpush.msra.mxu0 %v572
    %590 = vmatpush.msra.mxu0 %v571
    %591 = vmatmul.f32.gmra.mxu0 %v501
    %v592 = vpop.f32.mrf.mxu0
    %v593 = vadd.f32 0.0, %v592
    %594 = vdwg.mxu0
    %v595 = vadd.f32 %v570, %v593
    %v596 = vld [vmem:[%s5] sm:$0x1]
    %v598 = vperm.slane %v596, 0
    %v600 = vadd.f32 %v595, %v598
    %v601 = vxor.u32 %v600, 2147483648
    %v602 = vmul.f32 %v601, 1.442695
    %v603 = vpow.pop %v602
    %v604 = vadd.f32 %v603, 1.0
    %v605 = vrcp.pop %v604
    %v606 = vmul.f32 %v604, %v605
    %v607 = vsub.f32 1.0, %v606
    %v608 = vmul.f32 %v605, %v607
    %v609 = vadd.f32 %v605, %v608
    %vm610 = vweird.f32 %v604
    %vm611 = vweird.f32 %v605
    %vm612 = vmor %vm610, %vm611
    %v613 = vsel %vm612, %v605, %v609
    %v614 = vand.u32 2147483647, %v604
    %vm615 = vcmp.eq.f32.partialorder %v614, 8.507059e+37
    %v616 = vand.u32 %v604, 2147483648
    %v617 = vor.u32 1.1754944e-38, %v616
    %v618 = vsel %vm615, %v617, %v613
    %v619 = vmul.f32 1.0, %v618
    %v620 = vtanh.pop %v600
    %v621 = vmul.f32 %v619, %v463
    %623 = vrot.lane.b32.xlu0 %v620, 64
    %v624 = vpop.permute.xlu0 %623
    %v626 = vmul.f32 %v619, %v624
    %628 = vrot.lane.b32.xlu0 %v626, 32
    %v629 = vpop.permute.xlu0 %628
    %v631 = vadd.f32 %v621, %v629
    %v632 = vtanh.pop %v631
    %634 = vrot.lane.b32.xlu0 %v632, 64
    %v635 = vpop.permute.xlu0 %634
    %v637 = vmul.f32 %v619, %v635
    %v638 = vld [vmem:[%s6] sm:$0xff]
    %v639 = vld [vmem:[%s6 + $0x8] sm:$0xff]
    %v640 = vld [vmem:[%s6 + $0x10] sm:$0xff]
    %v641 = vld [vmem:[%s6 + $0x18] sm:$0xff]
    %v642 = vld [vmem:[%s7] sm:$0xff]
    %v643 = vld [vmem:[%s7 + $0x8] sm:$0xff]
    %v644 = vld [vmem:[%s7 + $0x10] sm:$0xff]
    %v645 = vld [vmem:[%s7 + $0x18] sm:$0xff]
    %v646 = vsel %vm87, %v567, 0
    %648 = vmatpush.msra.mxu0 0.0
    %649 = vmatpush.msra.mxu0 0.0
    %650 = vmatpush.msra.mxu0 0.0
    %651 = vmatpush.msra.mxu0 0.0
    %652 = vmatpush.msra.mxu0 0.0
    %653 = vmatpush.msra.mxu0 0.0
    %654 = vmatpush.msra.mxu0 0.0
    %655 = vmatpush.msra.mxu0 0.0
    %656 = vmatpush.msra.mxu0 0.0
    %657 = vmatpush.msra.mxu0 0.0
    %658 = vmatpush.msra.mxu0 0.0
    %659 = vmatpush.msra.mxu0 0.0
    %660 = vmatpush.msra.mxu0 %v645
    %661 = vmatpush.msra.mxu0 %v644
    %662 = vmatpush.msra.mxu0 %v643
    %663 = vmatpush.msra.mxu0 %v642
    %664 = vmatmul.f32.gmra.mxu0 %v646
    %v665 = vpop.f32.mrf.mxu0
    %v666 = vadd.f32 0.0, %v665
    %667 = vdwg.mxu0
    %669 = vrot.lane.b32.xlu0 %v637, 32
    %v670 = vpop.permute.xlu0 %669
    %v671 = vsel %vm87, %v670, 0
    %673 = vmatpush.msra.mxu0 0.0
    %674 = vmatpush.msra.mxu0 0.0
    %675 = vmatpush.msra.mxu0 0.0
    %676 = vmatpush.msra.mxu0 0.0
    %677 = vmatpush.msra.mxu0 0.0
    %678 = vmatpush.msra.mxu0 0.0
    %679 = vmatpush.msra.mxu0 0.0
    %680 = vmatpush.msra.mxu0 0.0
    %681 = vmatpush.msra.mxu0 0.0
    %682 = vmatpush.msra.mxu0 0.0
    %683 = vmatpush.msra.mxu0 0.0
    %684 = vmatpush.msra.mxu0 0.0
    %685 = vmatpush.msra.mxu0 %v641
    %686 = vmatpush.msra.mxu0 %v640
    %687 = vmatpush.msra.mxu0 %v639
    %688 = vmatpush.msra.mxu0 %v638
    %689 = vmatmul.f32.gmra.mxu0 %v671
    %v690 = vpop.f32.mrf.mxu0
    %v691 = vadd.f32 %v666, %v690
    %692 = vdwg.mxu0
    %v693 = vld [vmem:[#allocation10] sm:$0x1]
    %v695 = vperm.slane %v693, 0
    %v697 = vadd.f32 %v691, %v695
    %v698 = vxor.u32 %v697, 2147483648
    %v699 = vmul.f32 %v698, 1.442695
    %v700 = vpow.pop %v699
    %v701 = vadd.f32 %v700, 1.0
    %v702 = vrcp.pop %v701
    %v703 = vmul.f32 %v701, %v702
    %v704 = vsub.f32 1.0, %v703
    %v705 = vmul.f32 %v702, %v704
    %v706 = vadd.f32 %v702, %v705
    %vm707 = vweird.f32 %v701
    %vm708 = vweird.f32 %v702
    %vm709 = vmor %vm707, %vm708
    %v710 = vsel %vm709, %v702, %v706
    %v711 = vand.u32 2147483647, %v701
    %vm712 = vcmp.eq.f32.partialorder %v711, 8.507059e+37
    %v713 = vand.u32 %v701, 2147483648
    %v714 = vor.u32 1.1754944e-38, %v713
    %v715 = vsel %vm712, %v714, %v710
    %v716 = vmul.f32 1.0, %v715
    %v717 = vtanh.pop %v697
    %v718 = vmul.f32 %v716, %v558
    %720 = vrot.lane.b32.xlu0 %v717, 64
    %v721 = vpop.permute.xlu0 %720
    %v723 = vmul.f32 %v716, %v721
    %725 = vrot.lane.b32.xlu0 %v723, 32
    %v726 = vpop.permute.xlu0 %725
    %v728 = vadd.f32 %v718, %v726
    %v729 = vtanh.pop %v728
    %731 = vrot.lane.b32.xlu0 %v729, 64
    %v732 = vpop.permute.xlu0 %731
    %v734 = vmul.f32 %v716, %v732
    %736 = vrot.lane.b32.xlu0 %v734, 32
    %v737 = vpop.permute.xlu0 %736
    %739 = vst.msk [vmem:[#allocation4 + $0x8] sm:$0xff] %vm87, %v737
    %v740 = vld [vmem:[#allocation3 + $0x10] sm:$0xff]
    %v741 = vld [vmem:[%s4] sm:$0xff]
    %v742 = vld [vmem:[%s4 + $0x8] sm:$0xff]
    %v743 = vld [vmem:[%s4 + $0x10] sm:$0xff]
    %v744 = vld [vmem:[%s4 + $0x18] sm:$0xff]
    %745 = vmatpush.msra.mxu0 0.0
    %746 = vmatpush.msra.mxu0 0.0
    %747 = vmatpush.msra.mxu0 0.0
    %748 = vmatpush.msra.mxu0 0.0
    %749 = vmatpush.msra.mxu0 0.0
    %750 = vmatpush.msra.mxu0 0.0
    %751 = vmatpush.msra.mxu0 0.0
    %752 = vmatpush.msra.mxu0 0.0
    %753 = vmatpush.msra.mxu0 0.0
    %754 = vmatpush.msra.mxu0 0.0
    %755 = vmatpush.msra.mxu0 0.0
    %756 = vmatpush.msra.mxu0 0.0
    %757 = vmatpush.msra.mxu0 %v744
    %758 = vmatpush.msra.mxu0 %v743
    %759 = vmatpush.msra.mxu0 %v742
    %760 = vmatpush.msra.mxu0 %v741
    %761 = vmatmul.f32.gmra.mxu0 %v671
    %v762 = vpop.f32.mrf.mxu0
    %v763 = vadd.f32 0.0, %v762
    %764 = vdwg.mxu0
    %v765 = vadd.f32 %v740, %v763
    %v766 = vld [vmem:[%s5] sm:$0x1]
    %v768 = vperm.slane %v766, 0
    %v770 = vadd.f32 %v765, %v768
    %v771 = vxor.u32 %v770, 2147483648
    %v772 = vmul.f32 %v771, 1.442695
    %v773 = vpow.pop %v772
    %v774 = vadd.f32 %v773, 1.0
    %v775 = vrcp.pop %v774
    %v776 = vmul.f32 %v774, %v775
    %v777 = vsub.f32 1.0, %v776
    %v778 = vmul.f32 %v775, %v777
    %v779 = vadd.f32 %v775, %v778
    %vm780 = vweird.f32 %v774
    %vm781 = vweird.f32 %v775
    %vm782 = vmor %vm780, %vm781
    %v783 = vsel %vm782, %v775, %v779
    %v784 = vand.u32 2147483647, %v774
    %vm785 = vcmp.eq.f32.partialorder %v784, 8.507059e+37
    %v786 = vand.u32 %v774, 2147483648
    %v787 = vor.u32 1.1754944e-38, %v786
    %v788 = vsel %vm785, %v787, %v783
    %v789 = vmul.f32 1.0, %v788
    %v790 = vtanh.pop %v770
    %v791 = vmul.f32 %v789, %v631
    %793 = vrot.lane.b32.xlu0 %v790, 64
    %v794 = vpop.permute.xlu0 %793
    %v796 = vmul.f32 %v789, %v794
    %798 = vrot.lane.b32.xlu0 %v796, 32
    %v799 = vpop.permute.xlu0 %798
    %v801 = vadd.f32 %v791, %v799
    %v802 = vtanh.pop %v801
    %804 = vrot.lane.b32.xlu0 %v802, 64
    %v805 = vpop.permute.xlu0 %804
    %v807 = vmul.f32 %v789, %v805
    %v808 = vld [vmem:[%s6] sm:$0xff]
    %v809 = vld [vmem:[%s6 + $0x8] sm:$0xff]
    %v810 = vld [vmem:[%s6 + $0x10] sm:$0xff]
    %v811 = vld [vmem:[%s6 + $0x18] sm:$0xff]
    %v812 = vld [vmem:[%s7] sm:$0xff]
    %v813 = vld [vmem:[%s7 + $0x8] sm:$0xff]
    %v814 = vld [vmem:[%s7 + $0x10] sm:$0xff]
    %v815 = vld [vmem:[%s7 + $0x18] sm:$0xff]
    %v816 = vsel %vm87, %v737, 0
    %818 = vmatpush.msra.mxu0 0.0
    %819 = vmatpush.msra.mxu0 0.0
    %820 = vmatpush.msra.mxu0 0.0
    %821 = vmatpush.msra.mxu0 0.0
    %822 = vmatpush.msra.mxu0 0.0
    %823 = vmatpush.msra.mxu0 0.0
    %824 = vmatpush.msra.mxu0 0.0
    %825 = vmatpush.msra.mxu0 0.0
    %826 = vmatpush.msra.mxu0 0.0
    %827 = vmatpush.msra.mxu0 0.0
    %828 = vmatpush.msra.mxu0 0.0
    %829 = vmatpush.msra.mxu0 0.0
    %830 = vmatpush.msra.mxu0 %v815
    %831 = vmatpush.msra.mxu0 %v814
    %832 = vmatpush.msra.mxu0 %v813
    %833 = vmatpush.msra.mxu0 %v812
    %834 = vmatmul.f32.gmra.mxu0 %v816
    %v835 = vpop.f32.mrf.mxu0
    %v836 = vadd.f32 0.0, %v835
    %837 = vdwg.mxu0
    %839 = vrot.lane.b32.xlu0 %v807, 32
    %v840 = vpop.permute.xlu0 %839
    %v841 = vsel %vm87, %v840, 0
    %843 = vmatpush.msra.mxu0 0.0
    %844 = vmatpush.msra.mxu0 0.0
    %845 = vmatpush.msra.mxu0 0.0
    %846 = vmatpush.msra.mxu0 0.0
    %847 = vmatpush.msra.mxu0 0.0
    %848 = vmatpush.msra.mxu0 0.0
    %849 = vmatpush.msra.mxu0 0.0
    %850 = vmatpush.msra.mxu0 0.0
    %851 = vmatpush.msra.mxu0 0.0
    %852 = vmatpush.msra.mxu0 0.0
    %853 = vmatpush.msra.mxu0 0.0
    %854 = vmatpush.msra.mxu0 0.0
    %855 = vmatpush.msra.mxu0 %v811
    %856 = vmatpush.msra.mxu0 %v810
    %857 = vmatpush.msra.mxu0 %v809
    %858 = vmatpush.msra.mxu0 %v808
    %859 = vmatmul.f32.gmra.mxu0 %v841
    %v860 = vpop.f32.mrf.mxu0
    %v861 = vadd.f32 %v836, %v860
    %862 = vdwg.mxu0
    %v863 = vld [vmem:[#allocation10] sm:$0x1]
    %v865 = vperm.slane %v863, 0
    %v867 = vadd.f32 %v861, %v865
    %v868 = vxor.u32 %v867, 2147483648
    %v869 = vmul.f32 %v868, 1.442695
    %v870 = vpow.pop %v869
    %v871 = vadd.f32 %v870, 1.0
    %v872 = vrcp.pop %v871
    %v873 = vmul.f32 %v871, %v872
    %v874 = vsub.f32 1.0, %v873
    %v875 = vmul.f32 %v872, %v874
    %v876 = vadd.f32 %v872, %v875
    %vm877 = vweird.f32 %v871
    %vm878 = vweird.f32 %v872
    %vm879 = vmor %vm877, %vm878
    %v880 = vsel %vm879, %v872, %v876
    %v881 = vand.u32 2147483647, %v871
    %vm882 = vcmp.eq.f32.partialorder %v881, 8.507059e+37
    %v883 = vand.u32 %v871, 2147483648
    %v884 = vor.u32 1.1754944e-38, %v883
    %v885 = vsel %vm882, %v884, %v880
    %v886 = vmul.f32 1.0, %v885
    %v887 = vtanh.pop %v867
    %v888 = vmul.f32 %v886, %v728
    %890 = vrot.lane.b32.xlu0 %v887, 64
    %v891 = vpop.permute.xlu0 %890
    %v893 = vmul.f32 %v886, %v891
    %895 = vrot.lane.b32.xlu0 %v893, 32
    %v896 = vpop.permute.xlu0 %895
    %v898 = vadd.f32 %v888, %v896
    %v899 = vtanh.pop %v898
    %901 = vrot.lane.b32.xlu0 %v899, 64
    %v902 = vpop.permute.xlu0 %901
    %v904 = vmul.f32 %v886, %v902
    %906 = vrot.lane.b32.xlu0 %v904, 32
    %v907 = vpop.permute.xlu0 %906
    %909 = vst.msk [vmem:[#allocation4 + $0x10] sm:$0xff] %vm87, %v907
    %v910 = vld [vmem:[#allocation3 + $0x18] sm:$0xff]
    %v911 = vld [vmem:[%s4] sm:$0xff]
    %v912 = vld [vmem:[%s4 + $0x8] sm:$0xff]
    %v913 = vld [vmem:[%s4 + $0x10] sm:$0xff]
    %v914 = vld [vmem:[%s4 + $0x18] sm:$0xff]
    %915 = vmatpush.msra.mxu0 0.0
    %916 = vmatpush.msra.mxu0 0.0
    %917 = vmatpush.msra.mxu0 0.0
    %918 = vmatpush.msra.mxu0 0.0
    %919 = vmatpush.msra.mxu0 0.0
    %920 = vmatpush.msra.mxu0 0.0
    %921 = vmatpush.msra.mxu0 0.0
    %922 = vmatpush.msra.mxu0 0.0
    %923 = vmatpush.msra.mxu0 0.0
    %924 = vmatpush.msra.mxu0 0.0
    %925 = vmatpush.msra.mxu0 0.0
    %926 = vmatpush.msra.mxu0 0.0
    %927 = vmatpush.msra.mxu0 %v914
    %928 = vmatpush.msra.mxu0 %v913
    %929 = vmatpush.msra.mxu0 %v912
    %930 = vmatpush.msra.mxu0 %v911
    %931 = vmatmul.f32.gmra.mxu0 %v841
    %v932 = vpop.f32.mrf.mxu0
    %v933 = vadd.f32 0.0, %v932
    %934 = vdwg.mxu0
    %v935 = vadd.f32 %v910, %v933
    %v936 = vld [vmem:[%s5] sm:$0x1]
    %v938 = vperm.slane %v936, 0
    %v940 = vadd.f32 %v935, %v938
    %v941 = vxor.u32 %v940, 2147483648
    %v942 = vmul.f32 %v941, 1.442695
    %v943 = vpow.pop %v942
    %v944 = vadd.f32 %v943, 1.0
    %v945 = vrcp.pop %v944
    %v946 = vmul.f32 %v944, %v945
    %v947 = vsub.f32 1.0, %v946
    %v948 = vmul.f32 %v945, %v947
    %v949 = vadd.f32 %v945, %v948
    %vm950 = vweird.f32 %v944
    %vm951 = vweird.f32 %v945
    %vm952 = vmor %vm950, %vm951
    %v953 = vsel %vm952, %v945, %v949
    %v954 = vand.u32 2147483647, %v944
    %vm955 = vcmp.eq.f32.partialorder %v954, 8.507059e+37
    %v956 = vand.u32 %v944, 2147483648
    %v957 = vor.u32 1.1754944e-38, %v956
    %v958 = vsel %vm955, %v957, %v953
    %v959 = vmul.f32 1.0, %v958
    %v960 = vtanh.pop %v940
    %v961 = vmul.f32 %v959, %v801
    %963 = vrot.lane.b32.xlu0 %v960, 64
    %v964 = vpop.permute.xlu0 %963
    %v966 = vmul.f32 %v959, %v964
    %968 = vrot.lane.b32.xlu0 %v966, 32
    %v969 = vpop.permute.xlu0 %968
    %v971 = vadd.f32 %v961, %v969
    %v972 = vtanh.pop %v971
    %974 = vrot.lane.b32.xlu0 %v972, 64
    %v975 = vpop.permute.xlu0 %974
    %v977 = vmul.f32 %v959, %v975
    %v978 = vld [vmem:[%s6] sm:$0xff]
    %v979 = vld [vmem:[%s6 + $0x8] sm:$0xff]
    %v980 = vld [vmem:[%s6 + $0x10] sm:$0xff]
    %v981 = vld [vmem:[%s6 + $0x18] sm:$0xff]
    %v982 = vld [vmem:[%s7] sm:$0xff]
    %v983 = vld [vmem:[%s7 + $0x8] sm:$0xff]
    %v984 = vld [vmem:[%s7 + $0x10] sm:$0xff]
    %v985 = vld [vmem:[%s7 + $0x18] sm:$0xff]
    %v986 = vsel %vm87, %v907, 0
    %988 = vmatpush.msra.mxu0 0.0
    %989 = vmatpush.msra.mxu0 0.0
    %990 = vmatpush.msra.mxu0 0.0
    %991 = vmatpush.msra.mxu0 0.0
    %992 = vmatpush.msra.mxu0 0.0
    %993 = vmatpush.msra.mxu0 0.0
    %994 = vmatpush.msra.mxu0 0.0
    %995 = vmatpush.msra.mxu0 0.0
    %996 = vmatpush.msra.mxu0 0.0
    %997 = vmatpush.msra.mxu0 0.0
    %998 = vmatpush.msra.mxu0 0.0
    %999 = vmatpush.msra.mxu0 0.0
    %1000 = vmatpush.msra.mxu0 %v985
    %1001 = vmatpush.msra.mxu0 %v984
    %1002 = vmatpush.msra.mxu0 %v983
    %1003 = vmatpush.msra.mxu0 %v982
    %1004 = vmatmul.f32.gmra.mxu0 %v986
    %v1005 = vpop.f32.mrf.mxu0
    %v1006 = vadd.f32 0.0, %v1005
    %1007 = vdwg.mxu0
    %1009 = vrot.lane.b32.xlu0 %v977, 32
    %v1010 = vpop.permute.xlu0 %1009
    %v1011 = vsel %vm87, %v1010, 0
    %1013 = vmatpush.msra.mxu0 0.0
    %1014 = vmatpush.msra.mxu0 0.0
    %1015 = vmatpush.msra.mxu0 0.0
    %1016 = vmatpush.msra.mxu0 0.0
    %1017 = vmatpush.msra.mxu0 0.0
    %1018 = vmatpush.msra.mxu0 0.0
    %1019 = vmatpush.msra.mxu0 0.0
    %1020 = vmatpush.msra.mxu0 0.0
    %1021 = vmatpush.msra.mxu0 0.0
    %1022 = vmatpush.msra.mxu0 0.0
    %1023 = vmatpush.msra.mxu0 0.0
    %1024 = vmatpush.msra.mxu0 0.0
    %1025 = vmatpush.msra.mxu0 %v981
    %1026 = vmatpush.msra.mxu0 %v980
    %1027 = vmatpush.msra.mxu0 %v979
    %1028 = vmatpush.msra.mxu0 %v978
    %1029 = vmatmul.f32.gmra.mxu0 %v1011
    %v1030 = vpop.f32.mrf.mxu0
    %v1031 = vadd.f32 %v1006, %v1030
    %1032 = vdwg.mxu0
    %v1033 = vld [vmem:[#allocation10] sm:$0x1]
    %v1035 = vperm.slane %v1033, 0
    %v1037 = vadd.f32 %v1031, %v1035
    %v1038 = vxor.u32 %v1037, 2147483648
    %v1039 = vmul.f32 %v1038, 1.442695
    %v1040 = vpow.pop %v1039
    %v1041 = vadd.f32 %v1040, 1.0
    %v1042 = vrcp.pop %v1041
    %v1043 = vmul.f32 %v1041, %v1042
    %v1044 = vsub.f32 1.0, %v1043
    %v1045 = vmul.f32 %v1042, %v1044
    %v1046 = vadd.f32 %v1042, %v1045
    %vm1047 = vweird.f32 %v1041
    %vm1048 = vweird.f32 %v1042
    %vm1049 = vmor %vm1047, %vm1048
    %v1050 = vsel %vm1049, %v1042, %v1046
    %v1051 = vand.u32 2147483647, %v1041
    %vm1052 = vcmp.eq.f32.partialorder %v1051, 8.507059e+37
    %v1053 = vand.u32 %v1041, 2147483648
    %v1054 = vor.u32 1.1754944e-38, %v1053
    %v1055 = vsel %vm1052, %v1054, %v1050
    %v1056 = vmul.f32 1.0, %v1055
    %v1057 = vtanh.pop %v1037
    %v1058 = vmul.f32 %v1056, %v898
    %1060 = vrot.lane.b32.xlu0 %v1057, 64
    %v1061 = vpop.permute.xlu0 %1060
    %v1063 = vmul.f32 %v1056, %v1061
    %1065 = vrot.lane.b32.xlu0 %v1063, 32
    %v1066 = vpop.permute.xlu0 %1065
    %v1068 = vadd.f32 %v1058, %v1066
    %v1069 = vtanh.pop %v1068
    %1071 = vrot.lane.b32.xlu0 %v1069, 64
    %v1072 = vpop.permute.xlu0 %1071
    %v1074 = vmul.f32 %v1056, %v1072
    %1076 = vrot.lane.b32.xlu0 %v1074, 32
    %v1077 = vpop.permute.xlu0 %1076
    %1079 = vst.msk [vmem:[#allocation4 + $0x18] sm:$0xff] %vm87, %v1077
    %v1080 = vld [vmem:[#allocation3 + $0x20] sm:$0xff]
    %v1081 = vld [vmem:[%s4] sm:$0xff]
    %v1082 = vld [vmem:[%s4 + $0x8] sm:$0xff]
    %v1083 = vld [vmem:[%s4 + $0x10] sm:$0xff]
    %v1084 = vld [vmem:[%s4 + $0x18] sm:$0xff]
    %1085 = vmatpush.msra.mxu0 0.0
    %1086 = vmatpush.msra.mxu0 0.0
    %1087 = vmatpush.msra.mxu0 0.0
    %1088 = vmatpush.msra.mxu0 0.0
    %1089 = vmatpush.msra.mxu0 0.0
    %1090 = vmatpush.msra.mxu0 0.0
    %1091 = vmatpush.msra.mxu0 0.0
    %1092 = vmatpush.msra.mxu0 0.0
    %1093 = vmatpush.msra.mxu0 0.0
    %1094 = vmatpush.msra.mxu0 0.0
    %1095 = vmatpush.msra.mxu0 0.0
    %1096 = vmatpush.msra.mxu0 0.0
    %1097 = vmatpush.msra.mxu0 %v1084
    %1098 = vmatpush.msra.mxu0 %v1083
    %1099 = vmatpush.msra.mxu0 %v1082
    %1100 = vmatpush.msra.mxu0 %v1081
    %1101 = vmatmul.f32.gmra.mxu0 %v1011
    %v1102 = vpop.f32.mrf.mxu0
    %v1103 = vadd.f32 0.0, %v1102
    %1104 = vdwg.mxu0
    %v1105 = vadd.f32 %v1080, %v1103
    %v1106 = vld [vmem:[%s5] sm:$0x1]
    %v1108 = vperm.slane %v1106, 0
    %v1110 = vadd.f32 %v1105, %v1108
    %v1111 = vxor.u32 %v1110, 2147483648
    %v1112 = vmul.f32 %v1111, 1.442695
    %v1113 = vpow.pop %v1112
    %v1114 = vadd.f32 %v1113, 1.0
    %v1115 = vrcp.pop %v1114
    %v1116 = vmul.f32 %v1114, %v1115
    %v1117 = vsub.f32 1.0, %v1116
    %v1118 = vmul.f32 %v1115, %v1117
    %v1119 = vadd.f32 %v1115, %v1118
    %vm1120 = vweird.f32 %v1114
    %vm1121 = vweird.f32 %v1115
    %vm1122 = vmor %vm1120, %vm1121
    %v1123 = vsel %vm1122, %v1115, %v1119
    %v1124 = vand.u32 2147483647, %v1114
    %vm1125 = vcmp.eq.f32.partialorder %v1124, 8.507059e+37
    %v1126 = vand.u32 %v1114, 2147483648
    %v1127 = vor.u32 1.1754944e-38, %v1126
    %v1128 = vsel %vm1125, %v1127, %v1123
    %v1129 = vmul.f32 1.0, %v1128
    %v1130 = vtanh.pop %v1110
    %v1131 = vmul.f32 %v1129, %v971
    %1133 = vrot.lane.b32.xlu0 %v1130, 64
    %v1134 = vpop.permute.xlu0 %1133
    %v1136 = vmul.f32 %v1129, %v1134
    %1138 = vrot.lane.b32.xlu0 %v1136, 32
    %v1139 = vpop.permute.xlu0 %1138
    %v1141 = vadd.f32 %v1131, %v1139
    %v1142 = vtanh.pop %v1141
    %1144 = vrot.lane.b32.xlu0 %v1142, 64
    %v1145 = vpop.permute.xlu0 %1144
    %v1147 = vmul.f32 %v1129, %v1145
    %v1148 = vld [vmem:[%s6] sm:$0xff]
    %v1149 = vld [vmem:[%s6 + $0x8] sm:$0xff]
    %v1150 = vld [vmem:[%s6 + $0x10] sm:$0xff]
    %v1151 = vld [vmem:[%s6 + $0x18] sm:$0xff]
    %v1152 = vld [vmem:[%s7] sm:$0xff]
    %v1153 = vld [vmem:[%s7 + $0x8] sm:$0xff]
    %v1154 = vld [vmem:[%s7 + $0x10] sm:$0xff]
    %v1155 = vld [vmem:[%s7 + $0x18] sm:$0xff]
    %v1156 = vsel %vm87, %v1077, 0
    %1158 = vmatpush.msra.mxu0 0.0
    %1159 = vmatpush.msra.mxu0 0.0
    %1160 = vmatpush.msra.mxu0 0.0
    %1161 = vmatpush.msra.mxu0 0.0
    %1162 = vmatpush.msra.mxu0 0.0
    %1163 = vmatpush.msra.mxu0 0.0
    %1164 = vmatpush.msra.mxu0 0.0
    %1165 = vmatpush.msra.mxu0 0.0
    %1166 = vmatpush.msra.mxu0 0.0
    %1167 = vmatpush.msra.mxu0 0.0
    %1168 = vmatpush.msra.mxu0 0.0
    %1169 = vmatpush.msra.mxu0 0.0
    %1170 = vmatpush.msra.mxu0 %v1155
    %1171 = vmatpush.msra.mxu0 %v1154
    %1172 = vmatpush.msra.mxu0 %v1153
    %1173 = vmatpush.msra.mxu0 %v1152
    %1174 = vmatmul.f32.gmra.mxu0 %v1156
    %v1175 = vpop.f32.mrf.mxu0
    %v1176 = vadd.f32 0.0, %v1175
    %1177 = vdwg.mxu0
    %1179 = vrot.lane.b32.xlu0 %v1147, 32
    %v1180 = vpop.permute.xlu0 %1179
    %v1181 = vsel %vm87, %v1180, 0
    %1183 = vmatpush.msra.mxu0 0.0
    %1184 = vmatpush.msra.mxu0 0.0
    %1185 = vmatpush.msra.mxu0 0.0
    %1186 = vmatpush.msra.mxu0 0.0
    %1187 = vmatpush.msra.mxu0 0.0
    %1188 = vmatpush.msra.mxu0 0.0
    %1189 = vmatpush.msra.mxu0 0.0
    %1190 = vmatpush.msra.mxu0 0.0
    %1191 = vmatpush.msra.mxu0 0.0
    %1192 = vmatpush.msra.mxu0 0.0
    %1193 = vmatpush.msra.mxu0 0.0
    %1194 = vmatpush.msra.mxu0 0.0
    %1195 = vmatpush.msra.mxu0 %v1151
    %1196 = vmatpush.msra.mxu0 %v1150
    %1197 = vmatpush.msra.mxu0 %v1149
    %1198 = vmatpush.msra.mxu0 %v1148
    %1199 = vmatmul.f32.gmra.mxu0 %v1181
    %v1200 = vpop.f32.mrf.mxu0
    %v1201 = vadd.f32 %v1176, %v1200
    %1202 = vdwg.mxu0
    %v1203 = vld [vmem:[#allocation10] sm:$0x1]
    %v1205 = vperm.slane %v1203, 0
    %v1207 = vadd.f32 %v1201, %v1205
    %v1208 = vxor.u32 %v1207, 2147483648
    %v1209 = vmul.f32 %v1208, 1.442695
    %v1210 = vpow.pop %v1209
    %v1211 = vadd.f32 %v1210, 1.0
    %v1212 = vrcp.pop %v1211
    %v1213 = vmul.f32 %v1211, %v1212
    %v1214 = vsub.f32 1.0, %v1213
    %v1215 = vmul.f32 %v1212, %v1214
    %v1216 = vadd.f32 %v1212, %v1215
    %vm1217 = vweird.f32 %v1211
    %vm1218 = vweird.f32 %v1212
    %vm1219 = vmor %vm1217, %vm1218
    %v1220 = vsel %vm1219, %v1212, %v1216
    %v1221 = vand.u32 2147483647, %v1211
    %vm1222 = vcmp.eq.f32.partialorder %v1221, 8.507059e+37
    %v1223 = vand.u32 %v1211, 2147483648
    %v1224 = vor.u32 1.1754944e-38, %v1223
    %v1225 = vsel %vm1222, %v1224, %v1220
    %v1226 = vmul.f32 1.0, %v1225
    %v1227 = vtanh.pop %v1207
    %v1228 = vmul.f32 %v1226, %v1068
    %1230 = vrot.lane.b32.xlu0 %v1227, 64
    %v1231 = vpop.permute.xlu0 %1230
    %v1233 = vmul.f32 %v1226, %v1231
    %1235 = vrot.lane.b32.xlu0 %v1233, 32
    %v1236 = vpop.permute.xlu0 %1235
    %v1238 = vadd.f32 %v1228, %v1236
    %v1239 = vtanh.pop %v1238
    %1241 = vrot.lane.b32.xlu0 %v1239, 64
    %v1242 = vpop.permute.xlu0 %1241
    %v1244 = vmul.f32 %v1226, %v1242
    %1246 = vrot.lane.b32.xlu0 %v1244, 32
    %v1247 = vpop.permute.xlu0 %1246
    %1249 = vst.msk [vmem:[#allocation4 + $0x20] sm:$0xff] %vm87, %v1247
    %v1250 = vld [vmem:[#allocation3 + $0x28] sm:$0xff]
    %v1251 = vld [vmem:[%s4] sm:$0xff]
    %v1252 = vld [vmem:[%s4 + $0x8] sm:$0xff]
    %v1253 = vld [vmem:[%s4 + $0x10] sm:$0xff]
    %v1254 = vld [vmem:[%s4 + $0x18] sm:$0xff]
    %1255 = vmatpush.msra.mxu0 0.0
    %1256 = vmatpush.msra.mxu0 0.0
    %1257 = vmatpush.msra.mxu0 0.0
    %1258 = vmatpush.msra.mxu0 0.0
    %1259 = vmatpush.msra.mxu0 0.0
    %1260 = vmatpush.msra.mxu0 0.0
    %1261 = vmatpush.msra.mxu0 0.0
    %1262 = vmatpush.msra.mxu0 0.0
    %1263 = vmatpush.msra.mxu0 0.0
    %1264 = vmatpush.msra.mxu0 0.0
    %1265 = vmatpush.msra.mxu0 0.0
    %1266 = vmatpush.msra.mxu0 0.0
    %1267 = vmatpush.msra.mxu0 %v1254
    %1268 = vmatpush.msra.mxu0 %v1253
    %1269 = vmatpush.msra.mxu0 %v1252
    %1270 = vmatpush.msra.mxu0 %v1251
    %1271 = vmatmul.f32.gmra.mxu0 %v1181
    %v1272 = vpop.f32.mrf.mxu0
    %v1273 = vadd.f32 0.0, %v1272
    %1274 = vdwg.mxu0
    %v1275 = vadd.f32 %v1250, %v1273
    %v1276 = vld [vmem:[%s5] sm:$0x1]
    %v1278 = vperm.slane %v1276, 0
    %v1280 = vadd.f32 %v1275, %v1278
    %v1281 = vxor.u32 %v1280, 2147483648
    %v1282 = vmul.f32 %v1281, 1.442695
    %v1283 = vpow.pop %v1282
    %v1284 = vadd.f32 %v1283, 1.0
    %v1285 = vrcp.pop %v1284
    %v1286 = vmul.f32 %v1284, %v1285
    %v1287 = vsub.f32 1.0, %v1286
    %v1288 = vmul.f32 %v1285, %v1287
    %v1289 = vadd.f32 %v1285, %v1288
    %vm1290 = vweird.f32 %v1284
    %vm1291 = vweird.f32 %v1285
    %vm1292 = vmor %vm1290, %vm1291
    %v1293 = vsel %vm1292, %v1285, %v1289
    %v1294 = vand.u32 2147483647, %v1284
    %vm1295 = vcmp.eq.f32.partialorder %v1294, 8.507059e+37
    %v1296 = vand.u32 %v1284, 2147483648
    %v1297 = vor.u32 1.1754944e-38, %v1296
    %v1298 = vsel %vm1295, %v1297, %v1293
    %v1299 = vmul.f32 1.0, %v1298
    %v1300 = vtanh.pop %v1280
    %v1301 = vmul.f32 %v1299, %v1141
    %1303 = vrot.lane.b32.xlu0 %v1300, 64
    %v1304 = vpop.permute.xlu0 %1303
    %v1306 = vmul.f32 %v1299, %v1304
    %1308 = vrot.lane.b32.xlu0 %v1306, 32
    %v1309 = vpop.permute.xlu0 %1308
    %v1311 = vadd.f32 %v1301, %v1309
    %v1312 = vtanh.pop %v1311
    %1314 = vrot.lane.b32.xlu0 %v1312, 64
    %v1315 = vpop.permute.xlu0 %1314
    %v1317 = vmul.f32 %v1299, %v1315
    %v1318 = vld [vmem:[%s6] sm:$0xff]
    %v1319 = vld [vmem:[%s6 + $0x8] sm:$0xff]
    %v1320 = vld [vmem:[%s6 + $0x10] sm:$0xff]
    %v1321 = vld [vmem:[%s6 + $0x18] sm:$0xff]
    %v1322 = vld [vmem:[%s7] sm:$0xff]
    %v1323 = vld [vmem:[%s7 + $0x8] sm:$0xff]
    %v1324 = vld [vmem:[%s7 + $0x10] sm:$0xff]
    %v1325 = vld [vmem:[%s7 + $0x18] sm:$0xff]
    %v1326 = vsel %vm87, %v1247, 0
    %1328 = vmatpush.msra.mxu0 0.0
    %1329 = vmatpush.msra.mxu0 0.0
    %1330 = vmatpush.msra.mxu0 0.0
    %1331 = vmatpush.msra.mxu0 0.0
    %1332 = vmatpush.msra.mxu0 0.0
    %1333 = vmatpush.msra.mxu0 0.0
    %1334 = vmatpush.msra.mxu0 0.0
    %1335 = vmatpush.msra.mxu0 0.0
    %1336 = vmatpush.msra.mxu0 0.0
    %1337 = vmatpush.msra.mxu0 0.0
    %1338 = vmatpush.msra.mxu0 0.0
    %1339 = vmatpush.msra.mxu0 0.0
    %1340 = vmatpush.msra.mxu0 %v1325
    %1341 = vmatpush.msra.mxu0 %v1324
    %1342 = vmatpush.msra.mxu0 %v1323
    %1343 = vmatpush.msra.mxu0 %v1322
    %1344 = vmatmul.f32.gmra.mxu0 %v1326
    %v1345 = vpop.f32.mrf.mxu0
    %v1346 = vadd.f32 0.0, %v1345
    %1347 = vdwg.mxu0
    %1349 = vrot.lane.b32.xlu0 %v1317, 32
    %v1350 = vpop.permute.xlu0 %1349
    %v1351 = vsel %vm87, %v1350, 0
    %1353 = vmatpush.msra.mxu0 0.0
    %1354 = vmatpush.msra.mxu0 0.0
    %1355 = vmatpush.msra.mxu0 0.0
    %1356 = vmatpush.msra.mxu0 0.0
    %1357 = vmatpush.msra.mxu0 0.0
    %1358 = vmatpush.msra.mxu0 0.0
    %1359 = vmatpush.msra.mxu0 0.0
    %1360 = vmatpush.msra.mxu0 0.0
    %1361 = vmatpush.msra.mxu0 0.0
    %1362 = vmatpush.msra.mxu0 0.0
    %1363 = vmatpush.msra.mxu0 0.0
    %1364 = vmatpush.msra.mxu0 0.0
    %1365 = vmatpush.msra.mxu0 %v1321
    %1366 = vmatpush.msra.mxu0 %v1320
    %1367 = vmatpush.msra.mxu0 %v1319
    %1368 = vmatpush.msra.mxu0 %v1318
    %1369 = vmatmul.f32.gmra.mxu0 %v1351
    %v1370 = vpop.f32.mrf.mxu0
    %v1371 = vadd.f32 %v1346, %v1370
    %1372 = vdwg.mxu0
    %v1373 = vld [vmem:[#allocation10] sm:$0x1]
    %v1375 = vperm.slane %v1373, 0
    %v1377 = vadd.f32 %v1371, %v1375
    %v1378 = vxor.u32 %v1377, 2147483648
    %v1379 = vmul.f32 %v1378, 1.442695
    %v1380 = vpow.pop %v1379
    %v1381 = vadd.f32 %v1380, 1.0
    %v1382 = vrcp.pop %v1381
    %v1383 = vmul.f32 %v1381, %v1382
    %v1384 = vsub.f32 1.0, %v1383
    %v1385 = vmul.f32 %v1382, %v1384
    %v1386 = vadd.f32 %v1382, %v1385
    %vm1387 = vweird.f32 %v1381
    %vm1388 = vweird.f32 %v1382
    %vm1389 = vmor %vm1387, %vm1388
    %v1390 = vsel %vm1389, %v1382, %v1386
    %v1391 = vand.u32 2147483647, %v1381
    %vm1392 = vcmp.eq.f32.partialorder %v1391, 8.507059e+37
    %v1393 = vand.u32 %v1381, 2147483648
    %v1394 = vor.u32 1.1754944e-38, %v1393
    %v1395 = vsel %vm1392, %v1394, %v1390
    %v1396 = vmul.f32 1.0, %v1395
    %v1397 = vtanh.pop %v1377
    %v1398 = vmul.f32 %v1396, %v1238
    %1400 = vrot.lane.b32.xlu0 %v1397, 64
    %v1401 = vpop.permute.xlu0 %1400
    %v1403 = vmul.f32 %v1396, %v1401
    %1405 = vrot.lane.b32.xlu0 %v1403, 32
    %v1406 = vpop.permute.xlu0 %1405
    %v1408 = vadd.f32 %v1398, %v1406
    %v1409 = vtanh.pop %v1408
    %1411 = vrot.lane.b32.xlu0 %v1409, 64
    %v1412 = vpop.permute.xlu0 %1411
    %v1414 = vmul.f32 %v1396, %v1412
    %1416 = vrot.lane.b32.xlu0 %v1414, 32
    %v1417 = vpop.permute.xlu0 %1416
    %1419 = vst.msk [vmem:[#allocation4 + $0x28] sm:$0xff] %vm87, %v1417
    %v1420 = vld [vmem:[#allocation3 + $0x30] sm:$0xff]
    %v1421 = vld [vmem:[%s4] sm:$0xff]
    %v1422 = vld [vmem:[%s4 + $0x8] sm:$0xff]
    %v1423 = vld [vmem:[%s4 + $0x10] sm:$0xff]
    %v1424 = vld [vmem:[%s4 + $0x18] sm:$0xff]
    %1425 = vmatpush.msra.mxu0 0.0
    %1426 = vmatpush.msra.mxu0 0.0
    %1427 = vmatpush.msra.mxu0 0.0
    %1428 = vmatpush.msra.mxu0 0.0
    %1429 = vmatpush.msra.mxu0 0.0
    %1430 = vmatpush.msra.mxu0 0.0
    %1431 = vmatpush.msra.mxu0 0.0
    %1432 = vmatpush.msra.mxu0 0.0
    %1433 = vmatpush.msra.mxu0 0.0
    %1434 = vmatpush.msra.mxu0 0.0
    %1435 = vmatpush.msra.mxu0 0.0
    %1436 = vmatpush.msra.mxu0 0.0
    %1437 = vmatpush.msra.mxu0 %v1424
    %1438 = vmatpush.msra.mxu0 %v1423
    %1439 = vmatpush.msra.mxu0 %v1422
    %1440 = vmatpush.msra.mxu0 %v1421
    %1441 = vmatmul.f32.gmra.mxu0 %v1351
    %v1442 = vpop.f32.mrf.mxu0
    %v1443 = vadd.f32 0.0, %v1442
    %1444 = vdwg.mxu0
    %v1445 = vadd.f32 %v1420, %v1443
    %v1446 = vld [vmem:[%s5] sm:$0x1]
    %v1448 = vperm.slane %v1446, 0
    %v1450 = vadd.f32 %v1445, %v1448
    %v1451 = vxor.u32 %v1450, 2147483648
    %v1452 = vmul.f32 %v1451, 1.442695
    %v1453 = vpow.pop %v1452
    %v1454 = vadd.f32 %v1453, 1.0
    %v1455 = vrcp.pop %v1454
    %v1456 = vmul.f32 %v1454, %v1455
    %v1457 = vsub.f32 1.0, %v1456
    %v1458 = vmul.f32 %v1455, %v1457
    %v1459 = vadd.f32 %v1455, %v1458
    %vm1460 = vweird.f32 %v1454
    %vm1461 = vweird.f32 %v1455
    %vm1462 = vmor %vm1460, %vm1461
    %v1463 = vsel %vm1462, %v1455, %v1459
    %v1464 = vand.u32 2147483647, %v1454
    %vm1465 = vcmp.eq.f32.partialorder %v1464, 8.507059e+37
    %v1466 = vand.u32 %v1454, 2147483648
    %v1467 = vor.u32 1.1754944e-38, %v1466
    %v1468 = vsel %vm1465, %v1467, %v1463
    %v1469 = vmul.f32 1.0, %v1468
    %v1470 = vtanh.pop %v1450
    %v1471 = vmul.f32 %v1469, %v1311
    %1473 = vrot.lane.b32.xlu0 %v1470, 64
    %v1474 = vpop.permute.xlu0 %1473
    %v1476 = vmul.f32 %v1469, %v1474
    %1478 = vrot.lane.b32.xlu0 %v1476, 32
    %v1479 = vpop.permute.xlu0 %1478
    %v1481 = vadd.f32 %v1471, %v1479
    %v1482 = vtanh.pop %v1481
    %1484 = vrot.lane.b32.xlu0 %v1482, 64
    %v1485 = vpop.permute.xlu0 %1484
    %v1487 = vmul.f32 %v1469, %v1485
    %v1488 = vld [vmem:[%s6] sm:$0xff]
    %v1489 = vld [vmem:[%s6 + $0x8] sm:$0xff]
    %v1490 = vld [vmem:[%s6 + $0x10] sm:$0xff]
    %v1491 = vld [vmem:[%s6 + $0x18] sm:$0xff]
    %v1492 = vld [vmem:[%s7] sm:$0xff]
    %v1493 = vld [vmem:[%s7 + $0x8] sm:$0xff]
    %v1494 = vld [vmem:[%s7 + $0x10] sm:$0xff]
    %v1495 = vld [vmem:[%s7 + $0x18] sm:$0xff]
    %v1496 = vsel %vm87, %v1417, 0
    %1498 = vmatpush.msra.mxu0 0.0
    %1499 = vmatpush.msra.mxu0 0.0
    %1500 = vmatpush.msra.mxu0 0.0
    %1501 = vmatpush.msra.mxu0 0.0
    %1502 = vmatpush.msra.mxu0 0.0
    %1503 = vmatpush.msra.mxu0 0.0
    %1504 = vmatpush.msra.mxu0 0.0
    %1505 = vmatpush.msra.mxu0 0.0
    %1506 = vmatpush.msra.mxu0 0.0
    %1507 = vmatpush.msra.mxu0 0.0
    %1508 = vmatpush.msra.mxu0 0.0
    %1509 = vmatpush.msra.mxu0 0.0
    %1510 = vmatpush.msra.mxu0 %v1495
    %1511 = vmatpush.msra.mxu0 %v1494
    %1512 = vmatpush.msra.mxu0 %v1493
    %1513 = vmatpush.msra.mxu0 %v1492
    %1514 = vmatmul.f32.gmra.mxu0 %v1496
    %v1515 = vpop.f32.mrf.mxu0
    %v1516 = vadd.f32 0.0, %v1515
    %1517 = vdwg.mxu0
    %1519 = vrot.lane.b32.xlu0 %v1487, 32
    %v1520 = vpop.permute.xlu0 %1519
    %v1521 = vsel %vm87, %v1520, 0
    %1523 = vmatpush.msra.mxu0 0.0
    %1524 = vmatpush.msra.mxu0 0.0
    %1525 = vmatpush.msra.mxu0 0.0
    %1526 = vmatpush.msra.mxu0 0.0
    %1527 = vmatpush.msra.mxu0 0.0
    %1528 = vmatpush.msra.mxu0 0.0
    %1529 = vmatpush.msra.mxu0 0.0
    %1530 = vmatpush.msra.mxu0 0.0
    %1531 = vmatpush.msra.mxu0 0.0
    %1532 = vmatpush.msra.mxu0 0.0
    %1533 = vmatpush.msra.mxu0 0.0
    %1534 = vmatpush.msra.mxu0 0.0
    %1535 = vmatpush.msra.mxu0 %v1491
    %1536 = vmatpush.msra.mxu0 %v1490
    %1537 = vmatpush.msra.mxu0 %v1489
    %1538 = vmatpush.msra.mxu0 %v1488
    %1539 = vmatmul.f32.gmra.mxu0 %v1521
    %v1540 = vpop.f32.mrf.mxu0
    %v1541 = vadd.f32 %v1516, %v1540
    %1542 = vdwg.mxu0
    %v1543 = vld [vmem:[#allocation10] sm:$0x1]
    %v1545 = vperm.slane %v1543, 0
    %v1547 = vadd.f32 %v1541, %v1545
    %v1548 = vxor.u32 %v1547, 2147483648
    %v1549 = vmul.f32 %v1548, 1.442695
    %v1550 = vpow.pop %v1549
    %v1551 = vadd.f32 %v1550, 1.0
    %v1552 = vrcp.pop %v1551
    %v1553 = vmul.f32 %v1551, %v1552
    %v1554 = vsub.f32 1.0, %v1553
    %v1555 = vmul.f32 %v1552, %v1554
    %v1556 = vadd.f32 %v1552, %v1555
    %vm1557 = vweird.f32 %v1551
    %vm1558 = vweird.f32 %v1552
    %vm1559 = vmor %vm1557, %vm1558
    %v1560 = vsel %vm1559, %v1552, %v1556
    %v1561 = vand.u32 2147483647, %v1551
    %vm1562 = vcmp.eq.f32.partialorder %v1561, 8.507059e+37
    %v1563 = vand.u32 %v1551, 2147483648
    %v1564 = vor.u32 1.1754944e-38, %v1563
    %v1565 = vsel %vm1562, %v1564, %v1560
    %v1566 = vmul.f32 1.0, %v1565
    %v1567 = vtanh.pop %v1547
    %v1568 = vmul.f32 %v1566, %v1408
    %1570 = vrot.lane.b32.xlu0 %v1567, 64
    %v1571 = vpop.permute.xlu0 %1570
    %v1573 = vmul.f32 %v1566, %v1571
    %1575 = vrot.lane.b32.xlu0 %v1573, 32
    %v1576 = vpop.permute.xlu0 %1575
    %v1578 = vadd.f32 %v1568, %v1576
    %v1579 = vtanh.pop %v1578
    %1581 = vrot.lane.b32.xlu0 %v1579, 64
    %v1582 = vpop.permute.xlu0 %1581
    %v1584 = vmul.f32 %v1566, %v1582
    %1586 = vrot.lane.b32.xlu0 %v1584, 32
    %v1587 = vpop.permute.xlu0 %1586
    %1589 = vst.msk [vmem:[#allocation4 + $0x30] sm:$0xff] %vm87, %v1587
    %v1590 = vld [vmem:[#allocation3 + $0x38] sm:$0xff]
    %v1591 = vld [vmem:[%s4] sm:$0xff]
    %v1592 = vld [vmem:[%s4 + $0x8] sm:$0xff]
    %v1593 = vld [vmem:[%s4 + $0x10] sm:$0xff]
    %v1594 = vld [vmem:[%s4 + $0x18] sm:$0xff]
    %1595 = vmatpush.msra.mxu0 0.0
    %1596 = vmatpush.msra.mxu0 0.0
    %1597 = vmatpush.msra.mxu0 0.0
    %1598 = vmatpush.msra.mxu0 0.0
    %1599 = vmatpush.msra.mxu0 0.0
    %1600 = vmatpush.msra.mxu0 0.0
    %1601 = vmatpush.msra.mxu0 0.0
    %1602 = vmatpush.msra.mxu0 0.0
    %1603 = vmatpush.msra.mxu0 0.0
    %1604 = vmatpush.msra.mxu0 0.0
    %1605 = vmatpush.msra.mxu0 0.0
    %1606 = vmatpush.msra.mxu0 0.0
    %1607 = vmatpush.msra.mxu0 %v1594
    %1608 = vmatpush.msra.mxu0 %v1593
    %1609 = vmatpush.msra.mxu0 %v1592
    %1610 = vmatpush.msra.mxu0 %v1591
    %1611 = vmatmul.f32.gmra.mxu0 %v1521
    %v1612 = vpop.f32.mrf.mxu0
    %v1613 = vadd.f32 0.0, %v1612
    %1614 = vdwg.mxu0
    %v1615 = vadd.f32 %v1590, %v1613
    %v1616 = vld [vmem:[%s5] sm:$0x1]
    %v1618 = vperm.slane %v1616, 0
    %v1620 = vadd.f32 %v1615, %v1618
    %v1621 = vxor.u32 %v1620, 2147483648
    %v1622 = vmul.f32 %v1621, 1.442695
    %v1623 = vpow.pop %v1622
    %v1624 = vadd.f32 %v1623, 1.0
    %v1625 = vrcp.pop %v1624
    %v1626 = vmul.f32 %v1624, %v1625
    %v1627 = vsub.f32 1.0, %v1626
    %v1628 = vmul.f32 %v1625, %v1627
    %v1629 = vadd.f32 %v1625, %v1628
    %vm1630 = vweird.f32 %v1624
    %vm1631 = vweird.f32 %v1625
    %vm1632 = vmor %vm1630, %vm1631
    %v1633 = vsel %vm1632, %v1625, %v1629
    %v1634 = vand.u32 2147483647, %v1624
    %vm1635 = vcmp.eq.f32.partialorder %v1634, 8.507059e+37
    %v1636 = vand.u32 %v1624, 2147483648
    %v1637 = vor.u32 1.1754944e-38, %v1636
    %v1638 = vsel %vm1635, %v1637, %v1633
    %v1639 = vmul.f32 1.0, %v1638
    %v1640 = vtanh.pop %v1620
    %v1641 = vmul.f32 %v1639, %v1481
    %1643 = vrot.lane.b32.xlu0 %v1640, 64
    %v1644 = vpop.permute.xlu0 %1643
    %v1646 = vmul.f32 %v1639, %v1644
    %1648 = vrot.lane.b32.xlu0 %v1646, 32
    %v1649 = vpop.permute.xlu0 %1648
    %v1651 = vadd.f32 %v1641, %v1649
    %v1652 = vtanh.pop %v1651
    %1654 = vrot.lane.b32.xlu0 %v1652, 64
    %v1655 = vpop.permute.xlu0 %1654
    %v1657 = vmul.f32 %v1639, %v1655
    %v1658 = vld [vmem:[%s6] sm:$0xff]
    %v1659 = vld [vmem:[%s6 + $0x8] sm:$0xff]
    %v1660 = vld [vmem:[%s6 + $0x10] sm:$0xff]
    %v1661 = vld [vmem:[%s6 + $0x18] sm:$0xff]
    %v1662 = vld [vmem:[%s7] sm:$0xff]
    %v1663 = vld [vmem:[%s7 + $0x8] sm:$0xff]
    %v1664 = vld [vmem:[%s7 + $0x10] sm:$0xff]
    %v1665 = vld [vmem:[%s7 + $0x18] sm:$0xff]
    %v1666 = vsel %vm87, %v1587, 0
    %1668 = vmatpush.msra.mxu0 0.0
    %1669 = vmatpush.msra.mxu0 0.0
    %1670 = vmatpush.msra.mxu0 0.0
    %1671 = vmatpush.msra.mxu0 0.0
    %1672 = vmatpush.msra.mxu0 0.0
    %1673 = vmatpush.msra.mxu0 0.0
    %1674 = vmatpush.msra.mxu0 0.0
    %1675 = vmatpush.msra.mxu0 0.0
    %1676 = vmatpush.msra.mxu0 0.0
    %1677 = vmatpush.msra.mxu0 0.0
    %1678 = vmatpush.msra.mxu0 0.0
    %1679 = vmatpush.msra.mxu0 0.0
    %1680 = vmatpush.msra.mxu0 %v1665
    %1681 = vmatpush.msra.mxu0 %v1664
    %1682 = vmatpush.msra.mxu0 %v1663
    %1683 = vmatpush.msra.mxu0 %v1662
    %1684 = vmatmul.f32.gmra.mxu0 %v1666
    %v1685 = vpop.f32.mrf.mxu0
    %v1686 = vadd.f32 0.0, %v1685
    %1687 = vdwg.mxu0
    %1689 = vrot.lane.b32.xlu0 %v1657, 32
    %v1690 = vpop.permute.xlu0 %1689
    %v1691 = vsel %vm87, %v1690, 0
    %1693 = vmatpush.msra.mxu0 0.0
    %1694 = vmatpush.msra.mxu0 0.0
    %1695 = vmatpush.msra.mxu0 0.0
    %1696 = vmatpush.msra.mxu0 0.0
    %1697 = vmatpush.msra.mxu0 0.0
    %1698 = vmatpush.msra.mxu0 0.0
    %1699 = vmatpush.msra.mxu0 0.0
    %1700 = vmatpush.msra.mxu0 0.0
    %1701 = vmatpush.msra.mxu0 0.0
    %1702 = vmatpush.msra.mxu0 0.0
    %1703 = vmatpush.msra.mxu0 0.0
    %1704 = vmatpush.msra.mxu0 0.0
    %1705 = vmatpush.msra.mxu0 %v1661
    %1706 = vmatpush.msra.mxu0 %v1660
    %1707 = vmatpush.msra.mxu0 %v1659
    %1708 = vmatpush.msra.mxu0 %v1658
    %1709 = vmatmul.f32.gmra.mxu0 %v1691
    %v1710 = vpop.f32.mrf.mxu0
    %v1711 = vadd.f32 %v1686, %v1710
    %1712 = vdwg.mxu0
    %v1713 = vld [vmem:[#allocation10] sm:$0x1]
    %v1715 = vperm.slane %v1713, 0
    %v1717 = vadd.f32 %v1711, %v1715
    %v1718 = vxor.u32 %v1717, 2147483648
    %v1719 = vmul.f32 %v1718, 1.442695
    %v1720 = vpow.pop %v1719
    %v1721 = vadd.f32 %v1720, 1.0
    %v1722 = vrcp.pop %v1721
    %v1723 = vmul.f32 %v1721, %v1722
    %v1724 = vsub.f32 1.0, %v1723
    %v1725 = vmul.f32 %v1722, %v1724
    %v1726 = vadd.f32 %v1722, %v1725
    %vm1727 = vweird.f32 %v1721
    %vm1728 = vweird.f32 %v1722
    %vm1729 = vmor %vm1727, %vm1728
    %v1730 = vsel %vm1729, %v1722, %v1726
    %v1731 = vand.u32 2147483647, %v1721
    %vm1732 = vcmp.eq.f32.partialorder %v1731, 8.507059e+37
    %v1733 = vand.u32 %v1721, 2147483648
    %v1734 = vor.u32 1.1754944e-38, %v1733
    %v1735 = vsel %vm1732, %v1734, %v1730
    %v1736 = vmul.f32 1.0, %v1735
    %v1737 = vtanh.pop %v1717
    %v1738 = vmul.f32 %v1736, %v1578
    %1740 = vrot.lane.b32.xlu0 %v1737, 64
    %v1741 = vpop.permute.xlu0 %1740
    %v1743 = vmul.f32 %v1736, %v1741
    %1745 = vrot.lane.b32.xlu0 %v1743, 32
    %v1746 = vpop.permute.xlu0 %1745
    %v1748 = vadd.f32 %v1738, %v1746
    %v1749 = vtanh.pop %v1748
    %1751 = vrot.lane.b32.xlu0 %v1749, 64
    %v1752 = vpop.permute.xlu0 %1751
    %v1754 = vmul.f32 %v1736, %v1752
    %1756 = vrot.lane.b32.xlu0 %v1754, 32
    %v1757 = vpop.permute.xlu0 %1756
    %1759 = vst.msk [vmem:[#allocation4 + $0x38] sm:$0xff] %vm87, %v1757
    %v1760 = vld [vmem:[#allocation4] sm:$0xff]
    %v1761 = vld [vmem:[#allocation4 + $0x8] sm:$0xff]
    %v1762 = vld [vmem:[#allocation4 + $0x10] sm:$0xff]
    %v1763 = vld [vmem:[#allocation4 + $0x18] sm:$0xff]
    %v1764 = vld [vmem:[#allocation4 + $0x20] sm:$0xff]
    %v1765 = vld [vmem:[#allocation4 + $0x28] sm:$0xff]
    %v1766 = vld [vmem:[#allocation4 + $0x30] sm:$0xff]
    %v1767 = vld [vmem:[#allocation4 + $0x38] sm:$0xff]
    %v1768 = vld [vmem:[%s9] sm:$0xff]
    %v1769 = vld [vmem:[%s9 + $0x8] sm:$0xff]
    %v1770 = vld [vmem:[%s9 + $0x10] sm:$0xff]
    %v1771 = vld [vmem:[%s9 + $0x18] sm:$0xff]
    %v1772 = vld [vmem:[#allocation12] sm:$0x1]
    %v1774 = vperm.slane %v1772, 0
    %v1777 = vsel %vm87, %v1760, 0
    %v1780 = vsel %vm87, %v1761, 0
    %v1783 = vsel %vm87, %v1762, 0
    %v1786 = vsel %vm87, %v1763, 0
    %v1789 = vsel %vm87, %v1764, 0
    %v1792 = vsel %vm87, %v1765, 0
    %v1795 = vsel %vm87, %v1766, 0
    %v1798 = vsel %vm87, %v1767, 0
    %1800 = vmatpush.msra.mxu0 0.0
    %1801 = vmatpush.msra.mxu0 0.0
    %1802 = vmatpush.msra.mxu0 0.0
    %1803 = vmatpush.msra.mxu0 0.0
    %1804 = vmatpush.msra.mxu0 0.0
    %1805 = vmatpush.msra.mxu0 0.0
    %1806 = vmatpush.msra.mxu0 0.0
    %1807 = vmatpush.msra.mxu0 0.0
    %1808 = vmatpush.msra.mxu0 0.0
    %1809 = vmatpush.msra.mxu0 0.0
    %1810 = vmatpush.msra.mxu0 0.0
    %1811 = vmatpush.msra.mxu0 0.0
    %1812 = vmatpush.msra.mxu0 %v1771
    %1813 = vmatpush.msra.mxu0 %v1770
    %1814 = vmatpush.msra.mxu0 %v1769
    %1815 = vmatpush.msra.mxu0 %v1768
    %1816 = vmatmul.f32.gmra.mxu0 %v1777
    %v1817 = vpop.f32.mrf.mxu0
    %v1818 = vadd.f32 %v1774, %v1817
    %1819 = vmatmul.f32.gmra.mxu0 %v1780
    %v1820 = vpop.f32.mrf.mxu0
    %v1821 = vadd.f32 %v1774, %v1820
    %1822 = vmatmul.f32.gmra.mxu0 %v1783
    %v1823 = vpop.f32.mrf.mxu0
    %v1824 = vadd.f32 %v1774, %v1823
    %1825 = vmatmul.f32.gmra.mxu0 %v1786
    %v1826 = vpop.f32.mrf.mxu0
    %v1827 = vadd.f32 %v1774, %v1826
    %1828 = vmatmul.f32.gmra.mxu0 %v1789
    %v1829 = vpop.f32.mrf.mxu0
    %v1830 = vadd.f32 %v1774, %v1829
    %1831 = vmatmul.f32.gmra.mxu0 %v1792
    %v1832 = vpop.f32.mrf.mxu0
    %v1833 = vadd.f32 %v1774, %v1832
    %1834 = vmatmul.f32.gmra.mxu0 %v1795
    %v1835 = vpop.f32.mrf.mxu0
    %v1836 = vadd.f32 %v1774, %v1835
    %1837 = vmatmul.f32.gmra.mxu0 %v1798
    %v1838 = vpop.f32.mrf.mxu0
    %v1839 = vadd.f32 %v1774, %v1838
    %1840 = vdwg.mxu0
    %1841 = vst [vmem:[#allocation13] sm:$0xff] %v1818
    %1842 = vst [vmem:[#allocation13 + $0x8] sm:$0xff] %v1821
    %1843 = vst [vmem:[#allocation13 + $0x10] sm:$0xff] %v1824
    %1844 = vst [vmem:[#allocation13 + $0x18] sm:$0xff] %v1827
    %1845 = vst [vmem:[#allocation13 + $0x20] sm:$0xff] %v1830
    %1846 = vst [vmem:[#allocation13 + $0x28] sm:$0xff] %v1833
    %1847 = vst [vmem:[#allocation13 + $0x30] sm:$0xff] %v1836
    %1848 = vst [vmem:[#allocation13 + $0x38] sm:$0xff] %v1839
    // Predicated region
    $region54: #{decoder_forward.1} parent=1 // pred_check
      _
    $region55: #{decoder_forward.1} parent=1 // pred_check_branch
      %1850 = sbr.rel (0) target = $region57
    $region56: #{decoder_forward.1} parent=1 // pred_region
      %1852 = vsyncadd [#allocation9], 0
      %s1853 = sshll.u32 [#allocation13], 4
      %s1854 = int_to_ptr.vmem [resolvable:$true] %s1853
      %s1855 = sshll.u32 %s11, 4
      %s1856 = int_to_ptr.hbm [resolvable:$true] %s1855
      %1861 = dma.vmem_to_hbm [thread:$0]  %s1854, 1024, %s1856, [#allocation9], 128, 128, 8
    $region57: #{decoder_forward.1} parent=1 // pred_fallthru
      _
    // Predicated region
    $region58: #{decoder_forward.1} parent=1 // pred_check
      _
    $region59: #{decoder_forward.1} parent=1 // pred_check_branch
      %1863 = sbr.rel (0) target = $region61
    $region60: #{decoder_forward.1} parent=1 // pred_region
      %1865 = dma.done [#allocation9], 1024
    $region61: #{decoder_forward.1} parent=1 // pred_fallthru
      _
    %1866 = vsyncpa [#allocation8], 1
    %1867 = vsyncpa [#allocation11], 1
    %1868 = vsyncpa [#allocation9], 1

</llo_original>
